<compile_context>
chip_gen: v5e
topology: v5e:2x2
jax: 0.10.0
libtpu: 0.0.40
codegen_flags: <defaults>
</compile_context>

<pallas_src>
import jax
import jax.numpy as jnp
from jax.experimental import pallas as pl
from jax.experimental.pallas import tpu as pltpu

# ---------------- synthetic "config" (small, consistent with the module) ----
VOCAB = 100
HIDDEN = 32          # config.hidden_size -> nb_features
NUM_HEADS = 4
HEAD_DIM = HIDDEN // NUM_HEADS
FFN = 64
NUM_LAYERS = 2
MAX_POS = 64
NUM_CLASSES = 1
PAD_IDX = 1          # 'roberta' in name -> pad_idx = 1
EPS = 1e-5


# ----------------------------- fused Pallas kernel --------------------------
def _encoder_kernel(x0_ref, mask_ref, emb_g_ref, emb_b_ref,
                    wqkv_ref, bqkv_ref, wo_ref, bo_ref,
                    ln1_g_ref, ln1_b_ref, w1_ref, b1_ref,
                    w2_ref, b2_ref, ln2_g_ref, ln2_b_ref,
                    headw_ref, headb_ref,
                    logits_ref):
    """One sequence (one grid step) of the full encoder + head.

    Transposed activation layout: x is [features, tokens] = [HIDDEN, S].
    x0:   [H, S]   embedded tokens (word + pos + type), pre-LayerNorm
    mask: [1, S]   1.0 for real tokens, 0.0 for padding
    weights: PyTorch Linear layout [out_features, in_features], stacked over L
    logits_ref: [NUM_CLASSES, S]   (lane-dense token axis)
    """
    f32 = jnp.float32
    seq = x0_ref.shape[-1]

    def layernorm(v, g, b):
        # v: [F, S]; normalize over the feature (sublane) axis.
        mu = jnp.mean(v, axis=0, keepdims=True)
        var = jnp.mean((v - mu) * (v - mu), axis=0, keepdims=True)
        return (v - mu) * jax.lax.rsqrt(var + EPS) * g + b

    # Embedding LayerNorm.
    x = layernorm(x0_ref[...].astype(f32), emb_g_ref[...], emb_b_ref[...])

    # Additive key mask built in-kernel: [1, S].
    mask_add = (1.0 - mask_ref[...]) * -10000.0
    scale = 1.0 / (float(HEAD_DIM) ** 0.5)

    for l in range(NUM_LAYERS):
        # Fused QKV projection: one [3H, H] x [H, S] matmul.
        qkv = jnp.dot(wqkv_ref[l], x, preferred_element_type=f32) + bqkv_ref[l]

        # Head split via aligned sublane slices + cheap leading-dim reshapes.
        q_t = qkv[0:HIDDEN, :].reshape(NUM_HEADS, HEAD_DIM, seq)       # [NH,HD,S]
        k_t = qkv[HIDDEN:2 * HIDDEN, :].reshape(NUM_HEADS, HEAD_DIM, seq)
        v_t = qkv[2 * HIDDEN:3 * HIDDEN, :].reshape(NUM_HEADS, HEAD_DIM, seq)

        # Head-batched attention (single batched dot per stage).
        q_s = jnp.swapaxes(q_t, 1, 2)                                  # [NH,S,HD]
        s = jnp.einsum('hqd,hdk->hqk', q_s, k_t,
                       preferred_element_type=f32) * scale             # [NH,S,S]
        s = s + mask_add[None, :, :]                                   # mask keys
        s = s - jnp.max(s, axis=-1, keepdims=True)
        p = jnp.exp(s)
        p = p * pl.reciprocal(jnp.sum(p, axis=-1, keepdims=True), approx=True)
        ctx = jnp.einsum('hdk,hqk->hdq', v_t, p,
                         preferred_element_type=f32)                   # [NH,HD,S]
        ctx = ctx.reshape(HIDDEN, seq)                                 # merge heads

        # Output projection + residual + post-LN.
        attn = jnp.dot(wo_ref[l], ctx, preferred_element_type=f32) + bo_ref[l]
        x = layernorm(attn + x, ln1_g_ref[l], ln1_b_ref[l])

        # FFN with exact (erf) GELU + residual + post-LN.
        h1 = jnp.dot(w1_ref[l], x, preferred_element_type=f32) + b1_ref[l]
        h1 = 0.5 * h1 * (1.0 + jax.lax.erf(h1 * (2.0 ** -0.5)))
        h2 = jnp.dot(w2_ref[l], h1, preferred_element_type=f32) + b2_ref[l]
        x = layernorm(h2 + x, ln2_g_ref[l], ln2_b_ref[l])

    # Logits head, lane-dense tokens: [NC, H] x [H, S] -> [NC, S].
    logits = jnp.dot(headw_ref[...], x, preferred_element_type=f32) + headb_ref[...]
    logits_ref[...] = logits.astype(logits_ref.dtype)


def encoder_forward(x0_t, mask_f, params, *, batch, seq):
    """x0_t: [B, H, S] embedded input; mask_f: [B, 1, S]; -> [B, NC, S]."""

    def resident(a):
        nd = a.ndim
        return pl.BlockSpec(a.shape, lambda b, _nd=nd: (0,) * _nd)

    weight_arrays = [
        params["emb_ln_g"], params["emb_ln_b"],
        params["wqkv"], params["bqkv"], params["wo"], params["bo"],
        params["ln1_g"], params["ln1_b"], params["w1"], params["b1"],
        params["w2"], params["b2"], params["ln2_g"], params["ln2_b"],
        params["head_w"], params["head_b"],
    ]

    in_specs = (
        [pl.BlockSpec((None, HIDDEN, seq), lambda b: (b, 0, 0)),   # x0_t per batch
         pl.BlockSpec((None, 1, seq), lambda b: (b, 0, 0))]        # mask per batch
        + [resident(a) for a in weight_arrays]                     # weights resident
    )

    cost = pl.CostEstimate(
        flops=2 * batch * seq * NUM_LAYERS
              * (HIDDEN * (3 * HIDDEN + HIDDEN + 2 * FFN) + 2 * seq * HIDDEN)
              + 2 * batch * seq * HIDDEN * NUM_CLASSES,
        transcendentals=batch * NUM_LAYERS * (NUM_HEADS * seq * seq + seq * FFN),
        bytes_accessed=4 * (x0_t.size + mask_f.size
                            + batch * NUM_CLASSES * seq
                            + sum(int(a.size) for a in weight_arrays)),
    )

    # TODO(synk): at real RoBERTa sizes (H=768, 12+ layers) the per-layer weight
    # stacks should be streamed via a layer grid axis + BlockSpec index_map with
    # an explicit vmem_limit_bytes (v7x has only 64 MiB VMEM); at H=32 everything
    # comfortably fits resident, which is faster.
    return pl.pallas_call(
        _encoder_kernel,
        out_shape=jax.ShapeDtypeStruct((batch, NUM_CLASSES, seq), jnp.float32),
        grid=(batch,),
        in_specs=in_specs,
        out_specs=pl.BlockSpec((None, NUM_CLASSES, seq), lambda b: (b, 0, 0)),
        compiler_params=pltpu.CompilerParams(
            dimension_semantics=("parallel",)),   # v7x: one sequence per TC
        cost_estimate=cost,
    )(x0_t, mask_f, *weight_arrays)


# ----------------------------- parameter init -------------------------------
def init_params(key):
    def nrm(k, shape, scale=0.02):
        return scale * jax.random.normal(k, shape, dtype=jnp.float32)

    ks = jax.random.split(key, 8)
    L = NUM_LAYERS
    return {
        "word_emb": nrm(ks[0], (VOCAB, HIDDEN)),
        "pos_emb": nrm(ks[1], (MAX_POS, HIDDEN)),
        "type_emb": nrm(ks[2], (2, HIDDEN)),
        # LayerNorm params as [H, 1] columns (broadcast over the token-lane axis).
        "emb_ln_g": jnp.ones((HIDDEN, 1), jnp.float32),
        "emb_ln_b": jnp.zeros((HIDDEN, 1), jnp.float32),
        # Fused QKV weight, PyTorch Linear layout [out, in]; rows = q | k | v,
        # each head-major (head h's rows are h*HD:(h+1)*HD within its block).
        "wqkv": nrm(ks[3], (L, 3 * HIDDEN, HIDDEN)),
        "bqkv": jnp.zeros((L, 3 * HIDDEN, 1), jnp.float32),
        "wo": nrm(ks[4], (L, HIDDEN, HIDDEN)),
        "bo": jnp.zeros((L, HIDDEN, 1), jnp.float32),
        "ln1_g": jnp.ones((L, HIDDEN, 1), jnp.float32),
        "ln1_b": jnp.zeros((L, HIDDEN, 1), jnp.float32),
        "w1": nrm(ks[5], (L, FFN, HIDDEN)),
        "b1": jnp.zeros((L, FFN, 1), jnp.float32),
        "w2": nrm(ks[6], (L, HIDDEN, FFN)),
        "b2": jnp.zeros((L, HIDDEN, 1), jnp.float32),
        "ln2_g": jnp.ones((L, HIDDEN, 1), jnp.float32),
        "ln2_b": jnp.zeros((L, HIDDEN, 1), jnp.float32),
        # Logits head [NC, H] (lane-dense token output inside the kernel).
        "head_w": nrm(ks[7], (NUM_CLASSES, HIDDEN)),
        "head_b": jnp.zeros((NUM_CLASSES, 1), jnp.float32),
    }


# ----------------------------- forward pass ----------------------------------
def ner_transformer_forward(tokens, token_type_ids, params):
    """Equivalent of NERTransformer.forward: per-token logits [B, S, num_classes]."""
    B, S = tokens.shape

    # attention_mask = (tokens != pad_idx).long()
    attn_mask = (tokens != PAD_IDX).astype(jnp.int32)

    # RoBERTa-style position ids derived from padding.
    pos_ids = jnp.cumsum(attn_mask, axis=1) * attn_mask + PAD_IDX

    # Embedding gathers (glue); LayerNorm + everything else runs in the kernel.
    emb = (params["word_emb"][tokens]
           + params["pos_emb"][pos_ids]
           + params["type_emb"][token_type_ids])                 # [B, S, H]
    x0_t = jnp.swapaxes(emb, 1, 2).astype(jnp.float32)           # [B, H, S]
    mask_f = attn_mask[:, None, :].astype(jnp.float32)           # [B, 1, S]

    logits_t = encoder_forward(x0_t, mask_f, params, batch=B, seq=S)  # [B, NC, S]
    return jnp.swapaxes(logits_t, 1, 2)                          # [B, S, NC]


# ----------------------------------- main ------------------------------------
if __name__ == "__main__":
    key = jax.random.PRNGKey(0)
    k_tok, k_par = jax.random.split(key)

    B, S = 2, 8
    tokens = jax.random.randint(k_tok, (B, S), 2, VOCAB, dtype=jnp.int32)
    # introduce padding at the tail (pad_idx = 1 for roberta)
    tokens = tokens.at[:, -2:].set(PAD_IDX)
    token_type_ids = jnp.zeros((B, S), dtype=jnp.int32)

    # TODO(synk): loading pretrained HF RoBERTa weights has no Pallas equivalent;
    # a small randomly-initialized RoBERTa-style encoder with the same forward
    # structure is used instead.
    params = init_params(k_par)

    logits = jax.jit(ner_transformer_forward)(tokens, token_type_ids, params)
    logits = jax.block_until_ready(logits)

    assert logits.shape == (B, S, NUM_CLASSES)
    assert bool(jnp.all(jnp.isfinite(logits)))
    print("KERNEL_OK")
</pallas_src>

<mosaic_0001>
module attributes {stable_mosaic.version = 11 : i64} {
  func.func @_encoder_kernel(%arg0: i32, %arg1: memref<1x32x8xf32, #tpu.memory_space<vmem>>, %arg2: memref<1x1x8xf32, #tpu.memory_space<vmem>>, %arg3: memref<32x1xf32, #tpu.memory_space<vmem>>, %arg4: memref<32x1xf32, #tpu.memory_space<vmem>>, %arg5: memref<2x96x32xf32, #tpu.memory_space<vmem>>, %arg6: memref<2x96x1xf32, #tpu.memory_space<vmem>>, %arg7: memref<2x32x32xf32, #tpu.memory_space<vmem>>, %arg8: memref<2x32x1xf32, #tpu.memory_space<vmem>>, %arg9: memref<2x32x1xf32, #tpu.memory_space<vmem>>, %arg10: memref<2x32x1xf32, #tpu.memory_space<vmem>>, %arg11: memref<2x64x32xf32, #tpu.memory_space<vmem>>, %arg12: memref<2x64x1xf32, #tpu.memory_space<vmem>>, %arg13: memref<2x32x64xf32, #tpu.memory_space<vmem>>, %arg14: memref<2x32x1xf32, #tpu.memory_space<vmem>>, %arg15: memref<2x32x1xf32, #tpu.memory_space<vmem>>, %arg16: memref<2x32x1xf32, #tpu.memory_space<vmem>>, %arg17: memref<1x32xf32, #tpu.memory_space<vmem>>, %arg18: memref<1x1xf32, #tpu.memory_space<vmem>>, %arg19: memref<1x1x8xf32, #tpu.memory_space<vmem>>) attributes {dimension_semantics = [#tpu.dimension_semantics<parallel>], iteration_bounds = array<i64: 2>, scalar_prefetch = 0 : i64, scratch_operands = 0 : i64, tpu.core_type = #tpu.core_type<tc>, window_params = [{transform_indices = @transform_0, window_bounds = array<i64: 1, 32, 8>}, {transform_indices = @transform_1, window_bounds = array<i64: 1, 1, 8>}, {pipeline_mode = #tpu.pipeline_mode<synchronous>, transform_indices = @transform_2, window_bounds = array<i64: 32, 1>}, {pipeline_mode = #tpu.pipeline_mode<synchronous>, transform_indices = @transform_3, window_bounds = array<i64: 32, 1>}, {pipeline_mode = #tpu.pipeline_mode<synchronous>, transform_indices = @transform_4, window_bounds = array<i64: 2, 96, 32>}, {pipeline_mode = #tpu.pipeline_mode<synchronous>, transform_indices = @transform_5, window_bounds = array<i64: 2, 96, 1>}, {pipeline_mode = #tpu.pipeline_mode<synchronous>, transform_indices = @transform_6, window_bounds = array<i64: 2, 32, 32>}, {pipeline_mode = #tpu.pipeline_mode<synchronous>, transform_indices = @transform_7, window_bounds = array<i64: 2, 32, 1>}, {pipeline_mode = #tpu.pipeline_mode<synchronous>, transform_indices = @transform_8, window_bounds = array<i64: 2, 32, 1>}, {pipeline_mode = #tpu.pipeline_mode<synchronous>, transform_indices = @transform_9, window_bounds = array<i64: 2, 32, 1>}, {pipeline_mode = #tpu.pipeline_mode<synchronous>, transform_indices = @transform_10, window_bounds = array<i64: 2, 64, 32>}, {pipeline_mode = #tpu.pipeline_mode<synchronous>, transform_indices = @transform_11, window_bounds = array<i64: 2, 64, 1>}, {pipeline_mode = #tpu.pipeline_mode<synchronous>, transform_indices = @transform_12, window_bounds = array<i64: 2, 32, 64>}, {pipeline_mode = #tpu.pipeline_mode<synchronous>, transform_indices = @transform_13, window_bounds = array<i64: 2, 32, 1>}, {pipeline_mode = #tpu.pipeline_mode<synchronous>, transform_indices = @transform_14, window_bounds = array<i64: 2, 32, 1>}, {pipeline_mode = #tpu.pipeline_mode<synchronous>, transform_indices = @transform_15, window_bounds = array<i64: 2, 32, 1>}, {pipeline_mode = #tpu.pipeline_mode<synchronous>, transform_indices = @transform_16, window_bounds = array<i64: 1, 32>}, {pipeline_mode = #tpu.pipeline_mode<synchronous>, transform_indices = @transform_17, window_bounds = array<i64: 1, 1>}, {transform_indices = @transform_18, window_bounds = array<i64: 1, 1, 8>}]} {
    %c0 = arith.constant 0 : index
    %c0_0 = arith.constant 0 : index
    %c0_1 = arith.constant 0 : index
    %0 = vector.load %arg1[%c0, %c0_0, %c0_1] : memref<1x32x8xf32, #tpu.memory_space<vmem>>, vector<1x32x8xf32>
    %1 = vector.shape_cast %0 : vector<1x32x8xf32> to vector<32x8xf32>
    %c0_2 = arith.constant 0 : index
    %c0_3 = arith.constant 0 : index
    %2 = vector.load %arg3[%c0_2, %c0_3] : memref<32x1xf32, #tpu.memory_space<vmem>>, vector<32x1xf32>
    %c0_4 = arith.constant 0 : index
    %c0_5 = arith.constant 0 : index
    %3 = vector.load %arg4[%c0_4, %c0_5] : memref<32x1xf32, #tpu.memory_space<vmem>>, vector<32x1xf32>
    %cst = arith.constant dense<0.000000e+00> : vector<8xf32>
    %4 = vector.multi_reduction <add>, %1, %cst [0] : vector<32x8xf32> to vector<8xf32>
    %5 = vector.shape_cast %4 : vector<8xf32> to vector<1x8xf32>
    %cst_6 = arith.constant 3.200000e+01 : f32
    %6 = vector.broadcast %cst_6 : f32 to vector<1x8xf32>
    %7 = arith.divf %5, %6 : vector<1x8xf32>
    %8 = vector.broadcast %7 : vector<1x8xf32> to vector<32x8xf32>
    %9 = arith.subf %1, %8 : vector<32x8xf32>
    %10 = vector.broadcast %7 : vector<1x8xf32> to vector<32x8xf32>
    %11 = arith.subf %1, %10 : vector<32x8xf32>
    %12 = arith.mulf %9, %11 : vector<32x8xf32>
    %cst_7 = arith.constant dense<0.000000e+00> : vector<8xf32>
    %13 = vector.multi_reduction <add>, %12, %cst_7 [0] : vector<32x8xf32> to vector<8xf32>
    %14 = vector.shape_cast %13 : vector<8xf32> to vector<1x8xf32>
    %cst_8 = arith.constant 3.200000e+01 : f32
    %15 = vector.broadcast %cst_8 : f32 to vector<1x8xf32>
    %16 = arith.divf %14, %15 : vector<1x8xf32>
    %17 = vector.broadcast %7 : vector<1x8xf32> to vector<32x8xf32>
    %18 = arith.subf %1, %17 : vector<32x8xf32>
    %cst_9 = arith.constant 9.99999974E-6 : f32
    %19 = vector.broadcast %cst_9 : f32 to vector<1x8xf32>
    %20 = arith.addf %16, %19 : vector<1x8xf32>
    %21 = math.rsqrt %20 : vector<1x8xf32>
    %22 = vector.broadcast %21 : vector<1x8xf32> to vector<32x8xf32>
    %23 = arith.mulf %18, %22 : vector<32x8xf32>
    %24 = vector.broadcast %2 : vector<32x1xf32> to vector<32x8xf32>
    %25 = arith.mulf %23, %24 : vector<32x8xf32>
    %26 = vector.broadcast %3 : vector<32x1xf32> to vector<32x8xf32>
    %27 = arith.addf %25, %26 : vector<32x8xf32>
    %c0_10 = arith.constant 0 : index
    %c0_11 = arith.constant 0 : index
    %c0_12 = arith.constant 0 : index
    %28 = vector.load %arg2[%c0_10, %c0_11, %c0_12] : memref<1x1x8xf32, #tpu.memory_space<vmem>>, vector<1x1x8xf32>
    %29 = vector.shape_cast %28 : vector<1x1x8xf32> to vector<1x8xf32>
    %cst_13 = arith.constant 1.000000e+00 : f32
    %30 = vector.broadcast %cst_13 : f32 to vector<1x8xf32>
    %31 = arith.subf %30, %29 : vector<1x8xf32>
    %cst_14 = arith.constant -1.000000e+04 : f32
    %32 = vector.broadcast %cst_14 : f32 to vector<1x8xf32>
    %33 = arith.mulf %31, %32 : vector<1x8xf32>
    %c0_15 = arith.constant 0 : index
    %c0_16 = arith.constant 0 : index
    %c0_17 = arith.constant 0 : index
    %34 = vector.load %arg5[%c0_15, %c0_16, %c0_17] : memref<2x96x32xf32, #tpu.memory_space<vmem>>, vector<1x96x32xf32>
    %35 = vector.shape_cast %34 : vector<1x96x32xf32> to vector<96x32xf32>
    %cst_18 = arith.constant dense<0.000000e+00> : vector<96x8xf32>
    %36 = tpu.matmul %35, %27, %cst_18 {dimension_numbers = #tpu.dot_dimension_numbers<[1], [0], [0], [1], [0, 0, 1, 1], [], []>} : vector<96x32xf32>, vector<32x8xf32>, vector<96x8xf32> -> vector<96x8xf32>
    %c0_19 = arith.constant 0 : index
    %c0_20 = arith.constant 0 : index
    %c0_21 = arith.constant 0 : index
    %37 = vector.load %arg6[%c0_19, %c0_20, %c0_21] : memref<2x96x1xf32, #tpu.memory_space<vmem>>, vector<1x96x1xf32>
    %38 = vector.shape_cast %37 : vector<1x96x1xf32> to vector<96x1xf32>
    %39 = vector.broadcast %38 : vector<96x1xf32> to vector<96x8xf32>
    %40 = arith.addf %36, %39 : vector<96x8xf32>
    %41 = vector.extract_strided_slice %40 {offsets = [0, 0], sizes = [32, 8], strides = [1, 1]} : vector<96x8xf32> to vector<32x8xf32>
    %42 = vector.shape_cast %41 : vector<32x8xf32> to vector<4x8x8xf32>
    %43 = vector.extract_strided_slice %40 {offsets = [32, 0], sizes = [32, 8], strides = [1, 1]} : vector<96x8xf32> to vector<32x8xf32>
    %44 = vector.shape_cast %43 : vector<32x8xf32> to vector<4x8x8xf32>
    %45 = vector.extract_strided_slice %40 {offsets = [64, 0], sizes = [32, 8], strides = [1, 1]} : vector<96x8xf32> to vector<32x8xf32>
    %46 = vector.shape_cast %45 : vector<32x8xf32> to vector<4x8x8xf32>
    %47 = tpu.transpose %42, [0, 2, 1] : vector<4x8x8xf32> -> vector<4x8x8xf32>
    "tpu.trace_start"() <{level = 10 : i32, message = "hqd,hdk->hqk"}> : () -> ()
    %cst_22 = arith.constant dense<0.000000e+00> : vector<4x8x8xf32>
    %48 = tpu.matmul %47, %44, %cst_22 {dimension_numbers = #tpu.dot_dimension_numbers<[2], [1], [1], [2], [0, 0, 0, 1, 1, 2], [0], [0]>} : vector<4x8x8xf32>, vector<4x8x8xf32>, vector<4x8x8xf32> -> vector<4x8x8xf32>
    "tpu.trace_stop"() : () -> ()
    %cst_23 = arith.constant 0.353553385 : f32
    %49 = vector.broadcast %cst_23 : f32 to vector<4x8x8xf32>
    %50 = arith.mulf %48, %49 : vector<4x8x8xf32>
    %51 = vector.shape_cast %33 : vector<1x8xf32> to vector<1x1x8xf32>
    %52 = vector.broadcast %51 : vector<1x1x8xf32> to vector<4x8x8xf32>
    %53 = arith.addf %50, %52 : vector<4x8x8xf32>
    %cst_24 = arith.constant dense<0xFF800000> : vector<4x8xf32>
    %54 = vector.multi_reduction <maximumf>, %53, %cst_24 [2] : vector<4x8x8xf32> to vector<4x8xf32>
    %55 = vector.shape_cast %54 : vector<4x8xf32> to vector<4x8x1xf32>
    %56 = vector.broadcast %55 : vector<4x8x1xf32> to vector<4x8x8xf32>
    %57 = arith.subf %53, %56 : vector<4x8x8xf32>
    %58 = math.exp %57 : vector<4x8x8xf32>
    %cst_25 = arith.constant dense<0.000000e+00> : vector<4x8xf32>
    %59 = vector.multi_reduction <add>, %58, %cst_25 [2] : vector<4x8x8xf32> to vector<4x8xf32>
    %60 = vector.shape_cast %59 : vector<4x8xf32> to vector<4x8x1xf32>
    %61 = tpu.reciprocal %60 {approx = true} : vector<4x8x1xf32> -> vector<4x8x1xf32>
    %62 = vector.broadcast %61 : vector<4x8x1xf32> to vector<4x8x8xf32>
    %63 = arith.mulf %58, %62 : vector<4x8x8xf32>
    "tpu.trace_start"() <{level = 10 : i32, message = "hdk,hqk->hdq"}> : () -> ()
    %cst_26 = arith.constant dense<0.000000e+00> : vector<4x8x8xf32>
    %64 = tpu.matmul %46, %63, %cst_26 {dimension_numbers = #tpu.dot_dimension_numbers<[2], [2], [1], [1], [0, 0, 0, 1, 1, 1], [0], [0]>} : vector<4x8x8xf32>, vector<4x8x8xf32>, vector<4x8x8xf32> -> vector<4x8x8xf32>
    "tpu.trace_stop"() : () -> ()
    %65 = vector.shape_cast %64 : vector<4x8x8xf32> to vector<32x8xf32>
    %c0_27 = arith.constant 0 : index
    %c0_28 = arith.constant 0 : index
    %c0_29 = arith.constant 0 : index
    %66 = vector.load %arg7[%c0_27, %c0_28, %c0_29] : memref<2x32x32xf32, #tpu.memory_space<vmem>>, vector<1x32x32xf32>
    %67 = vector.shape_cast %66 : vector<1x32x32xf32> to vector<32x32xf32>
    %cst_30 = arith.constant dense<0.000000e+00> : vector<32x8xf32>
    %68 = tpu.matmul %67, %65, %cst_30 {dimension_numbers = #tpu.dot_dimension_numbers<[1], [0], [0], [1], [0, 0, 1, 1], [], []>} : vector<32x32xf32>, vector<32x8xf32>, vector<32x8xf32> -> vector<32x8xf32>
    %c0_31 = arith.constant 0 : index
    %c0_32 = arith.constant 0 : index
    %c0_33 = arith.constant 0 : index
    %69 = vector.load %arg8[%c0_31, %c0_32, %c0_33] : memref<2x32x1xf32, #tpu.memory_space<vmem>>, vector<1x32x1xf32>
    %70 = vector.shape_cast %69 : vector<1x32x1xf32> to vector<32x1xf32>
    %71 = vector.broadcast %70 : vector<32x1xf32> to vector<32x8xf32>
    %72 = arith.addf %68, %71 : vector<32x8xf32>
    %73 = arith.addf %72, %27 : vector<32x8xf32>
    %c0_34 = arith.constant 0 : index
    %c0_35 = arith.constant 0 : index
    %c0_36 = arith.constant 0 : index
    %74 = vector.load %arg9[%c0_34, %c0_35, %c0_36] : memref<2x32x1xf32, #tpu.memory_space<vmem>>, vector<1x32x1xf32>
    %75 = vector.shape_cast %74 : vector<1x32x1xf32> to vector<32x1xf32>
    %c0_37 = arith.constant 0 : index
    %c0_38 = arith.constant 0 : index
    %c0_39 = arith.constant 0 : index
    %76 = vector.load %arg10[%c0_37, %c0_38, %c0_39] : memref<2x32x1xf32, #tpu.memory_space<vmem>>, vector<1x32x1xf32>
    %77 = vector.shape_cast %76 : vector<1x32x1xf32> to vector<32x1xf32>
    %cst_40 = arith.constant dense<0.000000e+00> : vector<8xf32>
    %78 = vector.multi_reduction <add>, %73, %cst_40 [0] : vector<32x8xf32> to vector<8xf32>
    %79 = vector.shape_cast %78 : vector<8xf32> to vector<1x8xf32>
    %cst_41 = arith.constant 3.200000e+01 : f32
    %80 = vector.broadcast %cst_41 : f32 to vector<1x8xf32>
    %81 = arith.divf %79, %80 : vector<1x8xf32>
    %82 = vector.broadcast %81 : vector<1x8xf32> to vector<32x8xf32>
    %83 = arith.subf %73, %82 : vector<32x8xf32>
    %84 = vector.broadcast %81 : vector<1x8xf32> to vector<32x8xf32>
    %85 = arith.subf %73, %84 : vector<32x8xf32>
    %86 = arith.mulf %83, %85 : vector<32x8xf32>
    %cst_42 = arith.constant dense<0.000000e+00> : vector<8xf32>
    %87 = vector.multi_reduction <add>, %86, %cst_42 [0] : vector<32x8xf32> to vector<8xf32>
    %88 = vector.shape_cast %87 : vector<8xf32> to vector<1x8xf32>
    %cst_43 = arith.constant 3.200000e+01 : f32
    %89 = vector.broadcast %cst_43 : f32 to vector<1x8xf32>
    %90 = arith.divf %88, %89 : vector<1x8xf32>
    %91 = vector.broadcast %81 : vector<1x8xf32> to vector<32x8xf32>
    %92 = arith.subf %73, %91 : vector<32x8xf32>
    %cst_44 = arith.constant 9.99999974E-6 : f32
    %93 = vector.broadcast %cst_44 : f32 to vector<1x8xf32>
    %94 = arith.addf %90, %93 : vector<1x8xf32>
    %95 = math.rsqrt %94 : vector<1x8xf32>
    %96 = vector.broadcast %95 : vector<1x8xf32> to vector<32x8xf32>
    %97 = arith.mulf %92, %96 : vector<32x8xf32>
    %98 = vector.broadcast %75 : vector<32x1xf32> to vector<32x8xf32>
    %99 = arith.mulf %97, %98 : vector<32x8xf32>
    %100 = vector.broadcast %77 : vector<32x1xf32> to vector<32x8xf32>
    %101 = arith.addf %99, %100 : vector<32x8xf32>
    %c0_45 = arith.constant 0 : index
    %c0_46 = arith.constant 0 : index
    %c0_47 = arith.constant 0 : index
    %102 = vector.load %arg11[%c0_45, %c0_46, %c0_47] : memref<2x64x32xf32, #tpu.memory_space<vmem>>, vector<1x64x32xf32>
    %103 = vector.shape_cast %102 : vector<1x64x32xf32> to vector<64x32xf32>
    %cst_48 = arith.constant dense<0.000000e+00> : vector<64x8xf32>
    %104 = tpu.matmul %103, %101, %cst_48 {dimension_numbers = #tpu.dot_dimension_numbers<[1], [0], [0], [1], [0, 0, 1, 1], [], []>} : vector<64x32xf32>, vector<32x8xf32>, vector<64x8xf32> -> vector<64x8xf32>
    %c0_49 = arith.constant 0 : index
    %c0_50 = arith.constant 0 : index
    %c0_51 = arith.constant 0 : index
    %105 = vector.load %arg12[%c0_49, %c0_50, %c0_51] : memref<2x64x1xf32, #tpu.memory_space<vmem>>, vector<1x64x1xf32>
    %106 = vector.shape_cast %105 : vector<1x64x1xf32> to vector<64x1xf32>
    %107 = vector.broadcast %106 : vector<64x1xf32> to vector<64x8xf32>
    %108 = arith.addf %104, %107 : vector<64x8xf32>
    %cst_52 = arith.constant 5.000000e-01 : f32
    %109 = vector.broadcast %cst_52 : f32 to vector<64x8xf32>
    %110 = arith.mulf %109, %108 : vector<64x8xf32>
    %cst_53 = arith.constant 0.707106769 : f32
    %111 = vector.broadcast %cst_53 : f32 to vector<64x8xf32>
    %112 = arith.mulf %108, %111 : vector<64x8xf32>
    %113 = math.erf %112 : vector<64x8xf32>
    %cst_54 = arith.constant 1.000000e+00 : f32
    %114 = vector.broadcast %cst_54 : f32 to vector<64x8xf32>
    %115 = arith.addf %114, %113 : vector<64x8xf32>
    %116 = arith.mulf %110, %115 : vector<64x8xf32>
    %c0_55 = arith.constant 0 : index
    %c0_56 = arith.constant 0 : index
    %c0_57 = arith.constant 0 : index
    %117 = vector.load %arg13[%c0_55, %c0_56, %c0_57] : memref<2x32x64xf32, #tpu.memory_space<vmem>>, vector<1x32x64xf32>
    %118 = vector.shape_cast %117 : vector<1x32x64xf32> to vector<32x64xf32>
    %cst_58 = arith.constant dense<0.000000e+00> : vector<32x8xf32>
    %119 = tpu.matmul %118, %116, %cst_58 {dimension_numbers = #tpu.dot_dimension_numbers<[1], [0], [0], [1], [0, 0, 1, 1], [], []>} : vector<32x64xf32>, vector<64x8xf32>, vector<32x8xf32> -> vector<32x8xf32>
    %c0_59 = arith.constant 0 : index
    %c0_60 = arith.constant 0 : index
    %c0_61 = arith.constant 0 : index
    %120 = vector.load %arg14[%c0_59, %c0_60, %c0_61] : memref<2x32x1xf32, #tpu.memory_space<vmem>>, vector<1x32x1xf32>
    %121 = vector.shape_cast %120 : vector<1x32x1xf32> to vector<32x1xf32>
    %122 = vector.broadcast %121 : vector<32x1xf32> to vector<32x8xf32>
    %123 = arith.addf %119, %122 : vector<32x8xf32>
    %124 = arith.addf %123, %101 : vector<32x8xf32>
    %c0_62 = arith.constant 0 : index
    %c0_63 = arith.constant 0 : index
    %c0_64 = arith.constant 0 : index
    %125 = vector.load %arg15[%c0_62, %c0_63, %c0_64] : memref<2x32x1xf32, #tpu.memory_space<vmem>>, vector<1x32x1xf32>
    %126 = vector.shape_cast %125 : vector<1x32x1xf32> to vector<32x1xf32>
    %c0_65 = arith.constant 0 : index
    %c0_66 = arith.constant 0 : index
    %c0_67 = arith.constant 0 : index
    %127 = vector.load %arg16[%c0_65, %c0_66, %c0_67] : memref<2x32x1xf32, #tpu.memory_space<vmem>>, vector<1x32x1xf32>
    %128 = vector.shape_cast %127 : vector<1x32x1xf32> to vector<32x1xf32>
    %cst_68 = arith.constant dense<0.000000e+00> : vector<8xf32>
    %129 = vector.multi_reduction <add>, %124, %cst_68 [0] : vector<32x8xf32> to vector<8xf32>
    %130 = vector.shape_cast %129 : vector<8xf32> to vector<1x8xf32>
    %cst_69 = arith.constant 3.200000e+01 : f32
    %131 = vector.broadcast %cst_69 : f32 to vector<1x8xf32>
    %132 = arith.divf %130, %131 : vector<1x8xf32>
    %133 = vector.broadcast %132 : vector<1x8xf32> to vector<32x8xf32>
    %134 = arith.subf %124, %133 : vector<32x8xf32>
    %135 = vector.broadcast %132 : vector<1x8xf32> to vector<32x8xf32>
    %136 = arith.subf %124, %135 : vector<32x8xf32>
    %137 = arith.mulf %134, %136 : vector<32x8xf32>
    %cst_70 = arith.constant dense<0.000000e+00> : vector<8xf32>
    %138 = vector.multi_reduction <add>, %137, %cst_70 [0] : vector<32x8xf32> to vector<8xf32>
    %139 = vector.shape_cast %138 : vector<8xf32> to vector<1x8xf32>
    %cst_71 = arith.constant 3.200000e+01 : f32
    %140 = vector.broadcast %cst_71 : f32 to vector<1x8xf32>
    %141 = arith.divf %139, %140 : vector<1x8xf32>
    %142 = vector.broadcast %132 : vector<1x8xf32> to vector<32x8xf32>
    %143 = arith.subf %124, %142 : vector<32x8xf32>
    %cst_72 = arith.constant 9.99999974E-6 : f32
    %144 = vector.broadcast %cst_72 : f32 to vector<1x8xf32>
    %145 = arith.addf %141, %144 : vector<1x8xf32>
    %146 = math.rsqrt %145 : vector<1x8xf32>
    %147 = vector.broadcast %146 : vector<1x8xf32> to vector<32x8xf32>
    %148 = arith.mulf %143, %147 : vector<32x8xf32>
    %149 = vector.broadcast %126 : vector<32x1xf32> to vector<32x8xf32>
    %150 = arith.mulf %148, %149 : vector<32x8xf32>
    %151 = vector.broadcast %128 : vector<32x1xf32> to vector<32x8xf32>
    %152 = arith.addf %150, %151 : vector<32x8xf32>
    %c1 = arith.constant 1 : index
    %c0_73 = arith.constant 0 : index
    %c0_74 = arith.constant 0 : index
    %153 = vector.load %arg5[%c1, %c0_73, %c0_74] : memref<2x96x32xf32, #tpu.memory_space<vmem>>, vector<1x96x32xf32>
    %154 = vector.shape_cast %153 : vector<1x96x32xf32> to vector<96x32xf32>
    %cst_75 = arith.constant dense<0.000000e+00> : vector<96x8xf32>
    %155 = tpu.matmul %154, %152, %cst_75 {dimension_numbers = #tpu.dot_dimension_numbers<[1], [0], [0], [1], [0, 0, 1, 1], [], []>} : vector<96x32xf32>, vector<32x8xf32>, vector<96x8xf32> -> vector<96x8xf32>
    %c1_76 = arith.constant 1 : index
    %c0_77 = arith.constant 0 : index
    %c0_78 = arith.constant 0 : index
    %156 = vector.load %arg6[%c1_76, %c0_77, %c0_78] : memref<2x96x1xf32, #tpu.memory_space<vmem>>, vector<1x96x1xf32>
    %157 = vector.shape_cast %156 : vector<1x96x1xf32> to vector<96x1xf32>
    %158 = vector.broadcast %157 : vector<96x1xf32> to vector<96x8xf32>
    %159 = arith.addf %155, %158 : vector<96x8xf32>
    %160 = vector.extract_strided_slice %159 {offsets = [0, 0], sizes = [32, 8], strides = [1, 1]} : vector<96x8xf32> to vector<32x8xf32>
    %161 = vector.shape_cast %160 : vector<32x8xf32> to vector<4x8x8xf32>
    %162 = vector.extract_strided_slice %159 {offsets = [32, 0], sizes = [32, 8], strides = [1, 1]} : vector<96x8xf32> to vector<32x8xf32>
    %163 = vector.shape_cast %162 : vector<32x8xf32> to vector<4x8x8xf32>
    %164 = vector.extract_strided_slice %159 {offsets = [64, 0], sizes = [32, 8], strides = [1, 1]} : vector<96x8xf32> to vector<32x8xf32>
    %165 = vector.shape_cast %164 : vector<32x8xf32> to vector<4x8x8xf32>
    %166 = tpu.transpose %161, [0, 2, 1] : vector<4x8x8xf32> -> vector<4x8x8xf32>
    "tpu.trace_start"() <{level = 10 : i32, message = "hqd,hdk->hqk"}> : () -> ()
    %cst_79 = arith.constant dense<0.000000e+00> : vector<4x8x8xf32>
    %167 = tpu.matmul %166, %163, %cst_79 {dimension_numbers = #tpu.dot_dimension_numbers<[2], [1], [1], [2], [0, 0, 0, 1, 1, 2], [0], [0]>} : vector<4x8x8xf32>, vector<4x8x8xf32>, vector<4x8x8xf32> -> vector<4x8x8xf32>
    "tpu.trace_stop"() : () -> ()
    %cst_80 = arith.constant 0.353553385 : f32
    %168 = vector.broadcast %cst_80 : f32 to vector<4x8x8xf32>
    %169 = arith.mulf %167, %168 : vector<4x8x8xf32>
    %170 = vector.shape_cast %33 : vector<1x8xf32> to vector<1x1x8xf32>
    %171 = vector.broadcast %170 : vector<1x1x8xf32> to vector<4x8x8xf32>
    %172 = arith.addf %169, %171 : vector<4x8x8xf32>
    %cst_81 = arith.constant dense<0xFF800000> : vector<4x8xf32>
    %173 = vector.multi_reduction <maximumf>, %172, %cst_81 [2] : vector<4x8x8xf32> to vector<4x8xf32>
    %174 = vector.shape_cast %173 : vector<4x8xf32> to vector<4x8x1xf32>
    %175 = vector.broadcast %174 : vector<4x8x1xf32> to vector<4x8x8xf32>
    %176 = arith.subf %172, %175 : vector<4x8x8xf32>
    %177 = math.exp %176 : vector<4x8x8xf32>
    %cst_82 = arith.constant dense<0.000000e+00> : vector<4x8xf32>
    %178 = vector.multi_reduction <add>, %177, %cst_82 [2] : vector<4x8x8xf32> to vector<4x8xf32>
    %179 = vector.shape_cast %178 : vector<4x8xf32> to vector<4x8x1xf32>
    %180 = tpu.reciprocal %179 {approx = true} : vector<4x8x1xf32> -> vector<4x8x1xf32>
    %181 = vector.broadcast %180 : vector<4x8x1xf32> to vector<4x8x8xf32>
    %182 = arith.mulf %177, %181 : vector<4x8x8xf32>
    "tpu.trace_start"() <{level = 10 : i32, message = "hdk,hqk->hdq"}> : () -> ()
    %cst_83 = arith.constant dense<0.000000e+00> : vector<4x8x8xf32>
    %183 = tpu.matmul %165, %182, %cst_83 {dimension_numbers = #tpu.dot_dimension_numbers<[2], [2], [1], [1], [0, 0, 0, 1, 1, 1], [0], [0]>} : vector<4x8x8xf32>, vector<4x8x8xf32>, vector<4x8x8xf32> -> vector<4x8x8xf32>
    "tpu.trace_stop"() : () -> ()
    %184 = vector.shape_cast %183 : vector<4x8x8xf32> to vector<32x8xf32>
    %c1_84 = arith.constant 1 : index
    %c0_85 = arith.constant 0 : index
    %c0_86 = arith.constant 0 : index
    %185 = vector.load %arg7[%c1_84, %c0_85, %c0_86] : memref<2x32x32xf32, #tpu.memory_space<vmem>>, vector<1x32x32xf32>
    %186 = vector.shape_cast %185 : vector<1x32x32xf32> to vector<32x32xf32>
    %cst_87 = arith.constant dense<0.000000e+00> : vector<32x8xf32>
    %187 = tpu.matmul %186, %184, %cst_87 {dimension_numbers = #tpu.dot_dimension_numbers<[1], [0], [0], [1], [0, 0, 1, 1], [], []>} : vector<32x32xf32>, vector<32x8xf32>, vector<32x8xf32> -> vector<32x8xf32>
    %c1_88 = arith.constant 1 : index
    %c0_89 = arith.constant 0 : index
    %c0_90 = arith.constant 0 : index
    %188 = vector.load %arg8[%c1_88, %c0_89, %c0_90] : memref<2x32x1xf32, #tpu.memory_space<vmem>>, vector<1x32x1xf32>
    %189 = vector.shape_cast %188 : vector<1x32x1xf32> to vector<32x1xf32>
    %190 = vector.broadcast %189 : vector<32x1xf32> to vector<32x8xf32>
    %191 = arith.addf %187, %190 : vector<32x8xf32>
    %192 = arith.addf %191, %152 : vector<32x8xf32>
    %c1_91 = arith.constant 1 : index
    %c0_92 = arith.constant 0 : index
    %c0_93 = arith.constant 0 : index
    %193 = vector.load %arg9[%c1_91, %c0_92, %c0_93] : memref<2x32x1xf32, #tpu.memory_space<vmem>>, vector<1x32x1xf32>
    %194 = vector.shape_cast %193 : vector<1x32x1xf32> to vector<32x1xf32>
    %c1_94 = arith.constant 1 : index
    %c0_95 = arith.constant 0 : index
    %c0_96 = arith.constant 0 : index
    %195 = vector.load %arg10[%c1_94, %c0_95, %c0_96] : memref<2x32x1xf32, #tpu.memory_space<vmem>>, vector<1x32x1xf32>
    %196 = vector.shape_cast %195 : vector<1x32x1xf32> to vector<32x1xf32>
    %cst_97 = arith.constant dense<0.000000e+00> : vector<8xf32>
    %197 = vector.multi_reduction <add>, %192, %cst_97 [0] : vector<32x8xf32> to vector<8xf32>
    %198 = vector.shape_cast %197 : vector<8xf32> to vector<1x8xf32>
    %cst_98 = arith.constant 3.200000e+01 : f32
    %199 = vector.broadcast %cst_98 : f32 to vector<1x8xf32>
    %200 = arith.divf %198, %199 : vector<1x8xf32>
    %201 = vector.broadcast %200 : vector<1x8xf32> to vector<32x8xf32>
    %202 = arith.subf %192, %201 : vector<32x8xf32>
    %203 = vector.broadcast %200 : vector<1x8xf32> to vector<32x8xf32>
    %204 = arith.subf %192, %203 : vector<32x8xf32>
    %205 = arith.mulf %202, %204 : vector<32x8xf32>
    %cst_99 = arith.constant dense<0.000000e+00> : vector<8xf32>
    %206 = vector.multi_reduction <add>, %205, %cst_99 [0] : vector<32x8xf32> to vector<8xf32>
    %207 = vector.shape_cast %206 : vector<8xf32> to vector<1x8xf32>
    %cst_100 = arith.constant 3.200000e+01 : f32
    %208 = vector.broadcast %cst_100 : f32 to vector<1x8xf32>
    %209 = arith.divf %207, %208 : vector<1x8xf32>
    %210 = vector.broadcast %200 : vector<1x8xf32> to vector<32x8xf32>
    %211 = arith.subf %192, %210 : vector<32x8xf32>
    %cst_101 = arith.constant 9.99999974E-6 : f32
    %212 = vector.broadcast %cst_101 : f32 to vector<1x8xf32>
    %213 = arith.addf %209, %212 : vector<1x8xf32>
    %214 = math.rsqrt %213 : vector<1x8xf32>
    %215 = vector.broadcast %214 : vector<1x8xf32> to vector<32x8xf32>
    %216 = arith.mulf %211, %215 : vector<32x8xf32>
    %217 = vector.broadcast %194 : vector<32x1xf32> to vector<32x8xf32>
    %218 = arith.mulf %216, %217 : vector<32x8xf32>
    %219 = vector.broadcast %196 : vector<32x1xf32> to vector<32x8xf32>
    %220 = arith.addf %218, %219 : vector<32x8xf32>
    %c1_102 = arith.constant 1 : index
    %c0_103 = arith.constant 0 : index
    %c0_104 = arith.constant 0 : index
    %221 = vector.load %arg11[%c1_102, %c0_103, %c0_104] : memref<2x64x32xf32, #tpu.memory_space<vmem>>, vector<1x64x32xf32>
    %222 = vector.shape_cast %221 : vector<1x64x32xf32> to vector<64x32xf32>
    %cst_105 = arith.constant dense<0.000000e+00> : vector<64x8xf32>
    %223 = tpu.matmul %222, %220, %cst_105 {dimension_numbers = #tpu.dot_dimension_numbers<[1], [0], [0], [1], [0, 0, 1, 1], [], []>} : vector<64x32xf32>, vector<32x8xf32>, vector<64x8xf32> -> vector<64x8xf32>
    %c1_106 = arith.constant 1 : index
    %c0_107 = arith.constant 0 : index
    %c0_108 = arith.constant 0 : index
    %224 = vector.load %arg12[%c1_106, %c0_107, %c0_108] : memref<2x64x1xf32, #tpu.memory_space<vmem>>, vector<1x64x1xf32>
    %225 = vector.shape_cast %224 : vector<1x64x1xf32> to vector<64x1xf32>
    %226 = vector.broadcast %225 : vector<64x1xf32> to vector<64x8xf32>
    %227 = arith.addf %223, %226 : vector<64x8xf32>
    %cst_109 = arith.constant 5.000000e-01 : f32
    %228 = vector.broadcast %cst_109 : f32 to vector<64x8xf32>
    %229 = arith.mulf %228, %227 : vector<64x8xf32>
    %cst_110 = arith.constant 0.707106769 : f32
    %230 = vector.broadcast %cst_110 : f32 to vector<64x8xf32>
    %231 = arith.mulf %227, %230 : vector<64x8xf32>
    %232 = math.erf %231 : vector<64x8xf32>
    %cst_111 = arith.constant 1.000000e+00 : f32
    %233 = vector.broadcast %cst_111 : f32 to vector<64x8xf32>
    %234 = arith.addf %233, %232 : vector<64x8xf32>
    %235 = arith.mulf %229, %234 : vector<64x8xf32>
    %c1_112 = arith.constant 1 : index
    %c0_113 = arith.constant 0 : index
    %c0_114 = arith.constant 0 : index
    %236 = vector.load %arg13[%c1_112, %c0_113, %c0_114] : memref<2x32x64xf32, #tpu.memory_space<vmem>>, vector<1x32x64xf32>
    %237 = vector.shape_cast %236 : vector<1x32x64xf32> to vector<32x64xf32>
    %cst_115 = arith.constant dense<0.000000e+00> : vector<32x8xf32>
    %238 = tpu.matmul %237, %235, %cst_115 {dimension_numbers = #tpu.dot_dimension_numbers<[1], [0], [0], [1], [0, 0, 1, 1], [], []>} : vector<32x64xf32>, vector<64x8xf32>, vector<32x8xf32> -> vector<32x8xf32>
    %c1_116 = arith.constant 1 : index
    %c0_117 = arith.constant 0 : index
    %c0_118 = arith.constant 0 : index
    %239 = vector.load %arg14[%c1_116, %c0_117, %c0_118] : memref<2x32x1xf32, #tpu.memory_space<vmem>>, vector<1x32x1xf32>
    %240 = vector.shape_cast %239 : vector<1x32x1xf32> to vector<32x1xf32>
    %241 = vector.broadcast %240 : vector<32x1xf32> to vector<32x8xf32>
    %242 = arith.addf %238, %241 : vector<32x8xf32>
    %243 = arith.addf %242, %220 : vector<32x8xf32>
    %c1_119 = arith.constant 1 : index
    %c0_120 = arith.constant 0 : index
    %c0_121 = arith.constant 0 : index
    %244 = vector.load %arg15[%c1_119, %c0_120, %c0_121] : memref<2x32x1xf32, #tpu.memory_space<vmem>>, vector<1x32x1xf32>
    %245 = vector.shape_cast %244 : vector<1x32x1xf32> to vector<32x1xf32>
    %c1_122 = arith.constant 1 : index
    %c0_123 = arith.constant 0 : index
    %c0_124 = arith.constant 0 : index
    %246 = vector.load %arg16[%c1_122, %c0_123, %c0_124] : memref<2x32x1xf32, #tpu.memory_space<vmem>>, vector<1x32x1xf32>
    %247 = vector.shape_cast %246 : vector<1x32x1xf32> to vector<32x1xf32>
    %cst_125 = arith.constant dense<0.000000e+00> : vector<8xf32>
    %248 = vector.multi_reduction <add>, %243, %cst_125 [0] : vector<32x8xf32> to vector<8xf32>
    %249 = vector.shape_cast %248 : vector<8xf32> to vector<1x8xf32>
    %cst_126 = arith.constant 3.200000e+01 : f32
    %250 = vector.broadcast %cst_126 : f32 to vector<1x8xf32>
    %251 = arith.divf %249, %250 : vector<1x8xf32>
    %252 = vector.broadcast %251 : vector<1x8xf32> to vector<32x8xf32>
    %253 = arith.subf %243, %252 : vector<32x8xf32>
    %254 = vector.broadcast %251 : vector<1x8xf32> to vector<32x8xf32>
    %255 = arith.subf %243, %254 : vector<32x8xf32>
    %256 = arith.mulf %253, %255 : vector<32x8xf32>
    %cst_127 = arith.constant dense<0.000000e+00> : vector<8xf32>
    %257 = vector.multi_reduction <add>, %256, %cst_127 [0] : vector<32x8xf32> to vector<8xf32>
    %258 = vector.shape_cast %257 : vector<8xf32> to vector<1x8xf32>
    %cst_128 = arith.constant 3.200000e+01 : f32
    %259 = vector.broadcast %cst_128 : f32 to vector<1x8xf32>
    %260 = arith.divf %258, %259 : vector<1x8xf32>
    %261 = vector.broadcast %251 : vector<1x8xf32> to vector<32x8xf32>
    %262 = arith.subf %243, %261 : vector<32x8xf32>
    %cst_129 = arith.constant 9.99999974E-6 : f32
    %263 = vector.broadcast %cst_129 : f32 to vector<1x8xf32>
    %264 = arith.addf %260, %263 : vector<1x8xf32>
    %265 = math.rsqrt %264 : vector<1x8xf32>
    %266 = vector.broadcast %265 : vector<1x8xf32> to vector<32x8xf32>
    %267 = arith.mulf %262, %266 : vector<32x8xf32>
    %268 = vector.broadcast %245 : vector<32x1xf32> to vector<32x8xf32>
    %269 = arith.mulf %267, %268 : vector<32x8xf32>
    %270 = vector.broadcast %247 : vector<32x1xf32> to vector<32x8xf32>
    %271 = arith.addf %269, %270 : vector<32x8xf32>
    %c0_130 = arith.constant 0 : index
    %c0_131 = arith.constant 0 : index
    %272 = vector.load %arg17[%c0_130, %c0_131] : memref<1x32xf32, #tpu.memory_space<vmem>>, vector<1x32xf32>
    %cst_132 = arith.constant dense<0.000000e+00> : vector<1x8xf32>
    %273 = tpu.matmul %272, %271, %cst_132 {dimension_numbers = #tpu.dot_dimension_numbers<[1], [0], [0], [1], [0, 0, 1, 1], [], []>} : vector<1x32xf32>, vector<32x8xf32>, vector<1x8xf32> -> vector<1x8xf32>
    %c0_133 = arith.constant 0 : index
    %c0_134 = arith.constant 0 : index
    %274 = vector.load %arg18[%c0_133, %c0_134] : memref<1x1xf32, #tpu.memory_space<vmem>>, vector<1x1xf32>
    %275 = vector.broadcast %274 : vector<1x1xf32> to vector<1x8xf32>
    %276 = arith.addf %273, %275 : vector<1x8xf32>
    %c0_135 = arith.constant 0 : index
    %c0_136 = arith.constant 0 : index
    %c0_137 = arith.constant 0 : index
    %277 = vector.load %arg19[%c0_135, %c0_136, %c0_137] : memref<1x1x8xf32, #tpu.memory_space<vmem>>, vector<1x1x8xf32>
    %278 = vector.shape_cast %277 : vector<1x1x8xf32> to vector<1x8xf32>
    %279 = vector.shape_cast %276 : vector<1x8xf32> to vector<1x1x8xf32>
    tpu.vector_store %arg19[%c0_135, %c0_136, %c0_137], %279 {strides = array<i32>} : memref<1x1x8xf32, #tpu.memory_space<vmem>>, vector<1x1x8xf32>,
    return
  }
  func.func @transform_0(%arg0: i32) -> (i32, i32, i32) {
    %c0_i32 = arith.constant 0 : i32
    %c0_i32_0 = arith.constant 0 : i32
    %c0_i32_1 = arith.constant 0 : i32
    return %arg0, %c0_i32, %c0_i32_0 : i32, i32, i32
  }
  func.func @transform_1(%arg0: i32) -> (i32, i32, i32) {
    %c0_i32 = arith.constant 0 : i32
    %c0_i32_0 = arith.constant 0 : i32
    %c0_i32_1 = arith.constant 0 : i32
    return %arg0, %c0_i32, %c0_i32_0 : i32, i32, i32
  }
  func.func @transform_2(%arg0: i32) -> (i32, i32) {
    %c0_i32 = arith.constant 0 : i32
    %c0_i32_0 = arith.constant 0 : i32
    %c0_i32_1 = arith.constant 0 : i32
    return %c0_i32, %c0_i32_0 : i32, i32
  }
  func.func @transform_3(%arg0: i32) -> (i32, i32) {
    %c0_i32 = arith.constant 0 : i32
    %c0_i32_0 = arith.constant 0 : i32
    %c0_i32_1 = arith.constant 0 : i32
    return %c0_i32, %c0_i32_0 : i32, i32
  }
  func.func @transform_4(%arg0: i32) -> (i32, i32, i32) {
    %c0_i32 = arith.constant 0 : i32
    %c0_i32_0 = arith.constant 0 : i32
    %c0_i32_1 = arith.constant 0 : i32
    %c0_i32_2 = arith.constant 0 : i32
    return %c0_i32, %c0_i32_0, %c0_i32_1 : i32, i32, i32
  }
  func.func @transform_5(%arg0: i32) -> (i32, i32, i32) {
    %c0_i32 = arith.constant 0 : i32
    %c0_i32_0 = arith.constant 0 : i32
    %c0_i32_1 = arith.constant 0 : i32
    %c0_i32_2 = arith.constant 0 : i32
    return %c0_i32, %c0_i32_0, %c0_i32_1 : i32, i32, i32
  }
  func.func @transform_6(%arg0: i32) -> (i32, i32, i32) {
    %c0_i32 = arith.constant 0 : i32
    %c0_i32_0 = arith.constant 0 : i32
    %c0_i32_1 = arith.constant 0 : i32
    %c0_i32_2 = arith.constant 0 : i32
    return %c0_i32, %c0_i32_0, %c0_i32_1 : i32, i32, i32
  }
  func.func @transform_7(%arg0: i32) -> (i32, i32, i32) {
    %c0_i32 = arith.constant 0 : i32
    %c0_i32_0 = arith.constant 0 : i32
    %c0_i32_1 = arith.constant 0 : i32
    %c0_i32_2 = arith.constant 0 : i32
    return %c0_i32, %c0_i32_0, %c0_i32_1 : i32, i32, i32
  }
  func.func @transform_8(%arg0: i32) -> (i32, i32, i32) {
    %c0_i32 = arith.constant 0 : i32
    %c0_i32_0 = arith.constant 0 : i32
    %c0_i32_1 = arith.constant 0 : i32
    %c0_i32_2 = arith.constant 0 : i32
    return %c0_i32, %c0_i32_0, %c0_i32_1 : i32, i32, i32
  }
  func.func @transform_9(%arg0: i32) -> (i32, i32, i32) {
    %c0_i32 = arith.constant 0 : i32
    %c0_i32_0 = arith.constant 0 : i32
    %c0_i32_1 = arith.constant 0 : i32
    %c0_i32_2 = arith.constant 0 : i32
    return %c0_i32, %c0_i32_0, %c0_i32_1 : i32, i32, i32
  }
  func.func @transform_10(%arg0: i32) -> (i32, i32, i32) {
    %c0_i32 = arith.constant 0 : i32
    %c0_i32_0 = arith.constant 0 : i32
    %c0_i32_1 = arith.constant 0 : i32
    %c0_i32_2 = arith.constant 0 : i32
    return %c0_i32, %c0_i32_0, %c0_i32_1 : i32, i32, i32
  }
  func.func @transform_11(%arg0: i32) -> (i32, i32, i32) {
    %c0_i32 = arith.constant 0 : i32
    %c0_i32_0 = arith.constant 0 : i32
    %c0_i32_1 = arith.constant 0 : i32
    %c0_i32_2 = arith.constant 0 : i32
    return %c0_i32, %c0_i32_0, %c0_i32_1 : i32, i32, i32
  }
  func.func @transform_12(%arg0: i32) -> (i32, i32, i32) {
    %c0_i32 = arith.constant 0 : i32
    %c0_i32_0 = arith.constant 0 : i32
    %c0_i32_1 = arith.constant 0 : i32
    %c0_i32_2 = arith.constant 0 : i32
    return %c0_i32, %c0_i32_0, %c0_i32_1 : i32, i32, i32
  }
  func.func @transform_13(%arg0: i32) -> (i32, i32, i32) {
    %c0_i32 = arith.constant 0 : i32
    %c0_i32_0 = arith.constant 0 : i32
    %c0_i32_1 = arith.constant 0 : i32
    %c0_i32_2 = arith.constant 0 : i32
    return %c0_i32, %c0_i32_0, %c0_i32_1 : i32, i32, i32
  }
  func.func @transform_14(%arg0: i32) -> (i32, i32, i32) {
    %c0_i32 = arith.constant 0 : i32
    %c0_i32_0 = arith.constant 0 : i32
    %c0_i32_1 = arith.constant 0 : i32
    %c0_i32_2 = arith.constant 0 : i32
    return %c0_i32, %c0_i32_0, %c0_i32_1 : i32, i32, i32
  }
  func.func @transform_15(%arg0: i32) -> (i32, i32, i32) {
    %c0_i32 = arith.constant 0 : i32
    %c0_i32_0 = arith.constant 0 : i32
    %c0_i32_1 = arith.constant 0 : i32
    %c0_i32_2 = arith.constant 0 : i32
    return %c0_i32, %c0_i32_0, %c0_i32_1 : i32, i32, i32
  }
  func.func @transform_16(%arg0: i32) -> (i32, i32) {
    %c0_i32 = arith.constant 0 : i32
    %c0_i32_0 = arith.constant 0 : i32
    %c0_i32_1 = arith.constant 0 : i32
    return %c0_i32, %c0_i32_0 : i32, i32
  }
  func.func @transform_17(%arg0: i32) -> (i32, i32) {
    %c0_i32 = arith.constant 0 : i32
    %c0_i32_0 = arith.constant 0 : i32
    %c0_i32_1 = arith.constant 0 : i32
    return %c0_i32, %c0_i32_0 : i32, i32
  }
  func.func @transform_18(%arg0: i32) -> (i32, i32, i32) {
    %c0_i32 = arith.constant 0 : i32
    %c0_i32_0 = arith.constant 0 : i32
    %c0_i32_1 = arith.constant 0 : i32
    return %arg0, %c0_i32, %c0_i32_0 : i32, i32, i32
  }
}

</mosaic_0001>

<llo_original>
// kernel: ner_transformer_forward.1
$region0: #{ner_transformer_forward.1}
  #allocation0 [shape = 'u32[]', space=smem, size = 0x4, offset = 0x4, fixed_abs, tag = 'smem constant byte address 0x4 - core index']
  #allocation1 [shape = 'u32[72,128]{1,0:T(1,128)}', space=vmem, size = 0x9000, scoped, tag = 'internal scratch']
  #allocation2 [shape = 'f32[1,1]{1,0:T(1,128)S(1)}', space=vmem, size = 0x200, scoped, tag = 'scoped memory for ner_transformer_forward.1']
  %s0 = inlined_call_operand.vmem [shape: f32[2,32,8], index: 0, kind: input, shape index: {}]
  %s1 = inlined_call_operand.vmem [shape: f32[2,1,8], index: 1, kind: input, shape index: {}]
  %s2 = inlined_call_operand.vmem [shape: f32[32,1], index: 2, kind: input, shape index: {}]
  %s3 = inlined_call_operand.vmem [shape: f32[32,1], index: 3, kind: input, shape index: {}]
  %s4 = inlined_call_operand.vmem [shape: f32[2,96,32], index: 4, kind: input, shape index: {}]
  %s5 = inlined_call_operand.vmem [shape: f32[2,96,1], index: 5, kind: input, shape index: {}]
  %s6 = inlined_call_operand.vmem [shape: f32[2,32,32], index: 6, kind: input, shape index: {}]
  %s7 = inlined_call_operand.vmem [shape: f32[2,32,1], index: 7, kind: input, shape index: {}]
  %s8 = inlined_call_operand.vmem [shape: f32[2,32,1], index: 8, kind: input, shape index: {}]
  %s9 = inlined_call_operand.vmem [shape: f32[2,32,1], index: 9, kind: input, shape index: {}]
  %s10 = inlined_call_operand.vmem [shape: f32[2,64,32], index: 10, kind: input, shape index: {}]
  %s11 = inlined_call_operand.vmem [shape: f32[2,64,1], index: 11, kind: input, shape index: {}]
  %s12 = inlined_call_operand.vmem [shape: f32[2,32,64], index: 12, kind: input, shape index: {}]
  %s13 = inlined_call_operand.vmem [shape: f32[2,32,1], index: 13, kind: input, shape index: {}]
  %s14 = inlined_call_operand.vmem [shape: f32[2,32,1], index: 14, kind: input, shape index: {}]
  %s15 = inlined_call_operand.vmem [shape: f32[2,32,1], index: 15, kind: input, shape index: {}]
  %s16 = inlined_call_operand.vmem [shape: f32[1,32], index: 16, kind: input, shape index: {}]
  %s17 = inlined_call_operand.<no memory space> [shape: f32[1,1], index: 17, kind: input, shape index: {}]
  %s18 = inlined_call_operand.hbm [shape: f32[2,1,8], index: 18, kind: output, shape index: {}]
  %s19 = sld [smem:[#allocation0]]
  $region105: #{ner_transformer_forward.1} parent=0
    _
  %s21 = ssub.s32 1, %s19
  %s22 = scalar_select 0, %s21, %s19
  %v23 = vstv %s17
  %24 = vst [vmem:[#allocation2] sm:$0x1] %v23
  $region1: #{ner_transformer_forward.1} parent=0
    #allocation3 [shape = 'u8[1024]{0}', space=vmem, size = 0x400, scoped, tag = 'output window, operand 0']
    #allocation4 [shape = 's32[2]{0}', space=sflag, size = 0x8, scoped, tag = 'scoped memory for ner_transformer_forward.1']
    %25 = vsyncpa [#allocation4], 0
    %s26 = scalar_lea.sflag [#allocation4], 1
    %27 = vsyncpa %s26, 0
    loop: start=0, step=1, limit=4
    $region2: #{ner_transformer_forward.1} parent=1 // loop_pre_header
      _
    $region3: #{ner_transformer_forward.1} parent=1 // loop_header
      %s29 = sphi 0, %s33
      %p30 = scmp.ge.s32.totalorder %s29, 4
      %s39 = sphi 0, %s41
      %s42 = sphi 0, %s39
      %s43 = sphi 0, %s42
      %s59 = sphi 0, %s43
      %s65 = sphi 0, %s67
      %s68 = sphi 0, %s65
      %s69 = sphi 0, %s68
      %s85 = sphi 0, %s69
      %s89 = sphi 0, %s89
      %s91 = sphi 0, %s89
      %s92 = sphi 0, %s91
      %s106 = sphi 0, %s92
      %s110 = sphi 0, %s110
      %s112 = sphi 0, %s110
      %s113 = sphi 0, %s112
      %s127 = sphi 0, %s113
      %s131 = sphi 0, %s131
      %s133 = sphi 0, %s131
      %s134 = sphi 0, %s133
      %s148 = sphi 0, %s134
      %s152 = sphi 0, %s152
      %s154 = sphi 0, %s152
      %s155 = sphi 0, %s154
      %s169 = sphi 0, %s155
      %s173 = sphi 0, %s173
      %s175 = sphi 0, %s173
      %s176 = sphi 0, %s175
      %s190 = sphi 0, %s176
      %s194 = sphi 0, %s194
      %s196 = sphi 0, %s194
      %s197 = sphi 0, %s196
      %s211 = sphi 0, %s197
      %s215 = sphi 0, %s215
      %s217 = sphi 0, %s215
      %s218 = sphi 0, %s217
      %s232 = sphi 0, %s218
      %s236 = sphi 0, %s236
      %s238 = sphi 0, %s236
      %s239 = sphi 0, %s238
      %s253 = sphi 0, %s239
      %s257 = sphi 0, %s257
      %s259 = sphi 0, %s257
      %s260 = sphi 0, %s259
      %s274 = sphi 0, %s260
      %s278 = sphi 0, %s278
      %s280 = sphi 0, %s278
      %s281 = sphi 0, %s280
      %s295 = sphi 0, %s281
      %s299 = sphi 0, %s299
      %s301 = sphi 0, %s299
      %s302 = sphi 0, %s301
      %s316 = sphi 0, %s302
      %s320 = sphi 0, %s320
      %s322 = sphi 0, %s320
      %s323 = sphi 0, %s322
      %s337 = sphi 0, %s323
      %s341 = sphi 0, %s341
      %s343 = sphi 0, %s341
      %s344 = sphi 0, %s343
      %s358 = sphi 0, %s344
      %s362 = sphi 0, %s362
      %s364 = sphi 0, %s362
      %s365 = sphi 0, %s364
      %s379 = sphi 0, %s365
      %s383 = sphi 0, %s383
      %s385 = sphi 0, %s383
      %s386 = sphi 0, %s385
      %s400 = sphi 0, %s386
      %s404 = sphi 0, %s404
      %s406 = sphi 0, %s404
      %s407 = sphi 0, %s406
      %s421 = sphi 0, %s407
      %s427 = sphi 0, %s429
      %s430 = sphi 0, %s427
      %s431 = sphi 0, %s430
      %s447 = sphi 0, %s431
    $region4: #{ner_transformer_forward.1} parent=1 // loop_header_branch
      %32 = sbr.rel (%p30) target = $region8
    $region5: #{ner_transformer_forward.1} parent=1 // loop_body
      %s34 = ssub.s32 %s29, 1
      %s35 = ssub.s32 %s29, 2
      %s36 = sadd.s32 %s29, 1
      %s37 = ssub.s32 %s29, %s36
      %p38 = scmp.eq.s32.totalorder %s37, 0
      %s40 = sadd.s32 %s39, 1
      %s41 = scalar_select %p38, %s39, %s40
      %p44 = pneg %p38
      %p45 = scmp.eq.s32.totalorder %s29, 1
      %p46 = por %p44, %p45
      %p47 = scmp.ne.s32.totalorder %s39, %s42
      %p48 = scmp.eq.s32.totalorder %s29, 0
      %p49 = por %p47, %p48
      %p50 = scmp.ne.s32.totalorder %s39, %s42
      %p51 = scmp.eq.s32.totalorder %s34, 1
      %p52 = por %p50, %p51
      %p53 = scmp.ne.s32.totalorder %s42, %s43
      %p54 = scmp.eq.s32.totalorder %s34, 0
      %p55 = por %p53, %p54
      %p56 = scmp.ne.s32.totalorder %s42, %s43
      %p57 = scmp.eq.s32.totalorder %s35, 1
      %p58 = por %p56, %p57
      %p60 = scmp.ne.s32.totalorder %s43, %s59
      %p61 = scmp.eq.s32.totalorder %s35, 0
      %p62 = por %p60, %p61
      %s63 = ssub.s32 %s29, %s36
      %p64 = scmp.eq.s32.totalorder %s63, 0
      %s66 = sadd.s32 %s65, 1
      %s67 = scalar_select %p64, %s65, %s66
      %p70 = pneg %p64
      %p71 = scmp.eq.s32.totalorder %s29, 1
      %p72 = por %p70, %p71
      %p73 = scmp.ne.s32.totalorder %s65, %s68
      %p74 = scmp.eq.s32.totalorder %s29, 0
      %p75 = por %p73, %p74
      %p76 = scmp.ne.s32.totalorder %s65, %s68
      %p77 = scmp.eq.s32.totalorder %s34, 1
      %p78 = por %p76, %p77
      %p79 = scmp.ne.s32.totalorder %s68, %s69
      %p80 = scmp.eq.s32.totalorder %s34, 0
      %p81 = por %p79, %p80
      %p82 = scmp.ne.s32.totalorder %s68, %s69
      %p83 = scmp.eq.s32.totalorder %s35, 1
      %p84 = por %p82, %p83
      %p86 = scmp.ne.s32.totalorder %s69, %s85
      %p87 = scmp.eq.s32.totalorder %s35, 0
      %p88 = por %p86, %p87
      %s90 = sadd.s32 %s89, 1
      %p93 = scmp.eq.s32.totalorder %s29, 1
      %p94 = scmp.ne.s32.totalorder %s89, %s91
      %p95 = scmp.eq.s32.totalorder %s29, 0
      %p96 = por %p94, %p95
      %p97 = scmp.ne.s32.totalorder %s89, %s91
      %p98 = scmp.eq.s32.totalorder %s34, 1
      %p99 = por %p97, %p98
      %p100 = scmp.ne.s32.totalorder %s91, %s92
      %p101 = scmp.eq.s32.totalorder %s34, 0
      %p102 = por %p100, %p101
      %p103 = scmp.ne.s32.totalorder %s91, %s92
      %p104 = scmp.eq.s32.totalorder %s35, 1
      %p105 = por %p103, %p104
      %p107 = scmp.ne.s32.totalorder %s92, %s106
      %p108 = scmp.eq.s32.totalorder %s35, 0
      %p109 = por %p107, %p108
      %s111 = sadd.s32 %s110, 1
      %p114 = scmp.eq.s32.totalorder %s29, 1
      %p115 = scmp.ne.s32.totalorder %s110, %s112
      %p116 = scmp.eq.s32.totalorder %s29, 0
      %p117 = por %p115, %p116
      %p118 = scmp.ne.s32.totalorder %s110, %s112
      %p119 = scmp.eq.s32.totalorder %s34, 1
      %p120 = por %p118, %p119
      %p121 = scmp.ne.s32.totalorder %s112, %s113
      %p122 = scmp.eq.s32.totalorder %s34, 0
      %p123 = por %p121, %p122
      %p124 = scmp.ne.s32.totalorder %s112, %s113
      %p125 = scmp.eq.s32.totalorder %s35, 1
      %p126 = por %p124, %p125
      %p128 = scmp.ne.s32.totalorder %s113, %s127
      %p129 = scmp.eq.s32.totalorder %s35, 0
      %p130 = por %p128, %p129
      %s132 = sadd.s32 %s131, 1
      %p135 = scmp.eq.s32.totalorder %s29, 1
      %p136 = scmp.ne.s32.totalorder %s131, %s133
      %p137 = scmp.eq.s32.totalorder %s29, 0
      %p138 = por %p136, %p137
      %p139 = scmp.ne.s32.totalorder %s131, %s133
      %p140 = scmp.eq.s32.totalorder %s34, 1
      %p141 = por %p139, %p140
      %p142 = scmp.ne.s32.totalorder %s133, %s134
      %p143 = scmp.eq.s32.totalorder %s34, 0
      %p144 = por %p142, %p143
      %p145 = scmp.ne.s32.totalorder %s133, %s134
      %p146 = scmp.eq.s32.totalorder %s35, 1
      %p147 = por %p145, %p146
      %p149 = scmp.ne.s32.totalorder %s134, %s148
      %p150 = scmp.eq.s32.totalorder %s35, 0
      %p151 = por %p149, %p150
      %s153 = sadd.s32 %s152, 1
      %p156 = scmp.eq.s32.totalorder %s29, 1
      %p157 = scmp.ne.s32.totalorder %s152, %s154
      %p158 = scmp.eq.s32.totalorder %s29, 0
      %p159 = por %p157, %p158
      %p160 = scmp.ne.s32.totalorder %s152, %s154
      %p161 = scmp.eq.s32.totalorder %s34, 1
      %p162 = por %p160, %p161
      %p163 = scmp.ne.s32.totalorder %s154, %s155
      %p164 = scmp.eq.s32.totalorder %s34, 0
      %p165 = por %p163, %p164
      %p166 = scmp.ne.s32.totalorder %s154, %s155
      %p167 = scmp.eq.s32.totalorder %s35, 1
      %p168 = por %p166, %p167
      %p170 = scmp.ne.s32.totalorder %s155, %s169
      %p171 = scmp.eq.s32.totalorder %s35, 0
      %p172 = por %p170, %p171
      %s174 = sadd.s32 %s173, 1
      %p177 = scmp.eq.s32.totalorder %s29, 1
      %p178 = scmp.ne.s32.totalorder %s173, %s175
      %p179 = scmp.eq.s32.totalorder %s29, 0
      %p180 = por %p178, %p179
      %p181 = scmp.ne.s32.totalorder %s173, %s175
      %p182 = scmp.eq.s32.totalorder %s34, 1
      %p183 = por %p181, %p182
      %p184 = scmp.ne.s32.totalorder %s175, %s176
      %p185 = scmp.eq.s32.totalorder %s34, 0
      %p186 = por %p184, %p185
      %p187 = scmp.ne.s32.totalorder %s175, %s176
      %p188 = scmp.eq.s32.totalorder %s35, 1
      %p189 = por %p187, %p188
      %p191 = scmp.ne.s32.totalorder %s176, %s190
      %p192 = scmp.eq.s32.totalorder %s35, 0
      %p193 = por %p191, %p192
      %s195 = sadd.s32 %s194, 1
      %p198 = scmp.eq.s32.totalorder %s29, 1
      %p199 = scmp.ne.s32.totalorder %s194, %s196
      %p200 = scmp.eq.s32.totalorder %s29, 0
      %p201 = por %p199, %p200
      %p202 = scmp.ne.s32.totalorder %s194, %s196
      %p203 = scmp.eq.s32.totalorder %s34, 1
      %p204 = por %p202, %p203
      %p205 = scmp.ne.s32.totalorder %s196, %s197
      %p206 = scmp.eq.s32.totalorder %s34, 0
      %p207 = por %p205, %p206
      %p208 = scmp.ne.s32.totalorder %s196, %s197
      %p209 = scmp.eq.s32.totalorder %s35, 1
      %p210 = por %p208, %p209
      %p212 = scmp.ne.s32.totalorder %s197, %s211
      %p213 = scmp.eq.s32.totalorder %s35, 0
      %p214 = por %p212, %p213
      %s216 = sadd.s32 %s215, 1
      %p219 = scmp.eq.s32.totalorder %s29, 1
      %p220 = scmp.ne.s32.totalorder %s215, %s217
      %p221 = scmp.eq.s32.totalorder %s29, 0
      %p222 = por %p220, %p221
      %p223 = scmp.ne.s32.totalorder %s215, %s217
      %p224 = scmp.eq.s32.totalorder %s34, 1
      %p225 = por %p223, %p224
      %p226 = scmp.ne.s32.totalorder %s217, %s218
      %p227 = scmp.eq.s32.totalorder %s34, 0
      %p228 = por %p226, %p227
      %p229 = scmp.ne.s32.totalorder %s217, %s218
      %p230 = scmp.eq.s32.totalorder %s35, 1
      %p231 = por %p229, %p230
      %p233 = scmp.ne.s32.totalorder %s218, %s232
      %p234 = scmp.eq.s32.totalorder %s35, 0
      %p235 = por %p233, %p234
      %s237 = sadd.s32 %s236, 1
      %p240 = scmp.eq.s32.totalorder %s29, 1
      %p241 = scmp.ne.s32.totalorder %s236, %s238
      %p242 = scmp.eq.s32.totalorder %s29, 0
      %p243 = por %p241, %p242
      %p244 = scmp.ne.s32.totalorder %s236, %s238
      %p245 = scmp.eq.s32.totalorder %s34, 1
      %p246 = por %p244, %p245
      %p247 = scmp.ne.s32.totalorder %s238, %s239
      %p248 = scmp.eq.s32.totalorder %s34, 0
      %p249 = por %p247, %p248
      %p250 = scmp.ne.s32.totalorder %s238, %s239
      %p251 = scmp.eq.s32.totalorder %s35, 1
      %p252 = por %p250, %p251
      %p254 = scmp.ne.s32.totalorder %s239, %s253
      %p255 = scmp.eq.s32.totalorder %s35, 0
      %p256 = por %p254, %p255
      %s258 = sadd.s32 %s257, 1
      %p261 = scmp.eq.s32.totalorder %s29, 1
      %p262 = scmp.ne.s32.totalorder %s257, %s259
      %p263 = scmp.eq.s32.totalorder %s29, 0
      %p264 = por %p262, %p263
      %p265 = scmp.ne.s32.totalorder %s257, %s259
      %p266 = scmp.eq.s32.totalorder %s34, 1
      %p267 = por %p265, %p266
      %p268 = scmp.ne.s32.totalorder %s259, %s260
      %p269 = scmp.eq.s32.totalorder %s34, 0
      %p270 = por %p268, %p269
      %p271 = scmp.ne.s32.totalorder %s259, %s260
      %p272 = scmp.eq.s32.totalorder %s35, 1
      %p273 = por %p271, %p272
      %p275 = scmp.ne.s32.totalorder %s260, %s274
      %p276 = scmp.eq.s32.totalorder %s35, 0
      %p277 = por %p275, %p276
      %s279 = sadd.s32 %s278, 1
      %p282 = scmp.eq.s32.totalorder %s29, 1
      %p283 = scmp.ne.s32.totalorder %s278, %s280
      %p284 = scmp.eq.s32.totalorder %s29, 0
      %p285 = por %p283, %p284
      %p286 = scmp.ne.s32.totalorder %s278, %s280
      %p287 = scmp.eq.s32.totalorder %s34, 1
      %p288 = por %p286, %p287
      %p289 = scmp.ne.s32.totalorder %s280, %s281
      %p290 = scmp.eq.s32.totalorder %s34, 0
      %p291 = por %p289, %p290
      %p292 = scmp.ne.s32.totalorder %s280, %s281
      %p293 = scmp.eq.s32.totalorder %s35, 1
      %p294 = por %p292, %p293
      %p296 = scmp.ne.s32.totalorder %s281, %s295
      %p297 = scmp.eq.s32.totalorder %s35, 0
      %p298 = por %p296, %p297
      %s300 = sadd.s32 %s299, 1
      %p303 = scmp.eq.s32.totalorder %s29, 1
      %p304 = scmp.ne.s32.totalorder %s299, %s301
      %p305 = scmp.eq.s32.totalorder %s29, 0
      %p306 = por %p304, %p305
      %p307 = scmp.ne.s32.totalorder %s299, %s301
      %p308 = scmp.eq.s32.totalorder %s34, 1
      %p309 = por %p307, %p308
      %p310 = scmp.ne.s32.totalorder %s301, %s302
      %p311 = scmp.eq.s32.totalorder %s34, 0
      %p312 = por %p310, %p311
      %p313 = scmp.ne.s32.totalorder %s301, %s302
      %p314 = scmp.eq.s32.totalorder %s35, 1
      %p315 = por %p313, %p314
      %p317 = scmp.ne.s32.totalorder %s302, %s316
      %p318 = scmp.eq.s32.totalorder %s35, 0
      %p319 = por %p317, %p318
      %s321 = sadd.s32 %s320, 1
      %p324 = scmp.eq.s32.totalorder %s29, 1
      %p325 = scmp.ne.s32.totalorder %s320, %s322
      %p326 = scmp.eq.s32.totalorder %s29, 0
      %p327 = por %p325, %p326
      %p328 = scmp.ne.s32.totalorder %s320, %s322
      %p329 = scmp.eq.s32.totalorder %s34, 1
      %p330 = por %p328, %p329
      %p331 = scmp.ne.s32.totalorder %s322, %s323
      %p332 = scmp.eq.s32.totalorder %s34, 0
      %p333 = por %p331, %p332
      %p334 = scmp.ne.s32.totalorder %s322, %s323
      %p335 = scmp.eq.s32.totalorder %s35, 1
      %p336 = por %p334, %p335
      %p338 = scmp.ne.s32.totalorder %s323, %s337
      %p339 = scmp.eq.s32.totalorder %s35, 0
      %p340 = por %p338, %p339
      %s342 = sadd.s32 %s341, 1
      %p345 = scmp.eq.s32.totalorder %s29, 1
      %p346 = scmp.ne.s32.totalorder %s341, %s343
      %p347 = scmp.eq.s32.totalorder %s29, 0
      %p348 = por %p346, %p347
      %p349 = scmp.ne.s32.totalorder %s341, %s343
      %p350 = scmp.eq.s32.totalorder %s34, 1
      %p351 = por %p349, %p350
      %p352 = scmp.ne.s32.totalorder %s343, %s344
      %p353 = scmp.eq.s32.totalorder %s34, 0
      %p354 = por %p352, %p353
      %p355 = scmp.ne.s32.totalorder %s343, %s344
      %p356 = scmp.eq.s32.totalorder %s35, 1
      %p357 = por %p355, %p356
      %p359 = scmp.ne.s32.totalorder %s344, %s358
      %p360 = scmp.eq.s32.totalorder %s35, 0
      %p361 = por %p359, %p360
      %s363 = sadd.s32 %s362, 1
      %p366 = scmp.eq.s32.totalorder %s29, 1
      %p367 = scmp.ne.s32.totalorder %s362, %s364
      %p368 = scmp.eq.s32.totalorder %s29, 0
      %p369 = por %p367, %p368
      %p370 = scmp.ne.s32.totalorder %s362, %s364
      %p371 = scmp.eq.s32.totalorder %s34, 1
      %p372 = por %p370, %p371
      %p373 = scmp.ne.s32.totalorder %s364, %s365
      %p374 = scmp.eq.s32.totalorder %s34, 0
      %p375 = por %p373, %p374
      %p376 = scmp.ne.s32.totalorder %s364, %s365
      %p377 = scmp.eq.s32.totalorder %s35, 1
      %p378 = por %p376, %p377
      %p380 = scmp.ne.s32.totalorder %s365, %s379
      %p381 = scmp.eq.s32.totalorder %s35, 0
      %p382 = por %p380, %p381
      %s384 = sadd.s32 %s383, 1
      %p387 = scmp.eq.s32.totalorder %s29, 1
      %p388 = scmp.ne.s32.totalorder %s383, %s385
      %p389 = scmp.eq.s32.totalorder %s29, 0
      %p390 = por %p388, %p389
      %p391 = scmp.ne.s32.totalorder %s383, %s385
      %p392 = scmp.eq.s32.totalorder %s34, 1
      %p393 = por %p391, %p392
      %p394 = scmp.ne.s32.totalorder %s385, %s386
      %p395 = scmp.eq.s32.totalorder %s34, 0
      %p396 = por %p394, %p395
      %p397 = scmp.ne.s32.totalorder %s385, %s386
      %p398 = scmp.eq.s32.totalorder %s35, 1
      %p399 = por %p397, %p398
      %p401 = scmp.ne.s32.totalorder %s386, %s400
      %p402 = scmp.eq.s32.totalorder %s35, 0
      %p403 = por %p401, %p402
      %s405 = sadd.s32 %s404, 1
      %p408 = scmp.eq.s32.totalorder %s29, 1
      %p409 = scmp.ne.s32.totalorder %s404, %s406
      %p410 = scmp.eq.s32.totalorder %s29, 0
      %p411 = por %p409, %p410
      %p412 = scmp.ne.s32.totalorder %s404, %s406
      %p413 = scmp.eq.s32.totalorder %s34, 1
      %p414 = por %p412, %p413
      %p415 = scmp.ne.s32.totalorder %s406, %s407
      %p416 = scmp.eq.s32.totalorder %s34, 0
      %p417 = por %p415, %p416
      %p418 = scmp.ne.s32.totalorder %s406, %s407
      %p419 = scmp.eq.s32.totalorder %s35, 1
      %p420 = por %p418, %p419
      %p422 = scmp.ne.s32.totalorder %s407, %s421
      %p423 = scmp.eq.s32.totalorder %s35, 0
      %p424 = por %p422, %p423
      %s425 = ssub.s32 %s29, %s36
      %p426 = scmp.eq.s32.totalorder %s425, 0
      %s428 = sadd.s32 %s427, 1
      %s429 = scalar_select %p426, %s427, %s428
      %p432 = pneg %p426
      %p433 = scmp.eq.s32.totalorder %s29, 1
      %p434 = por %p432, %p433
      %p435 = scmp.ne.s32.totalorder %s427, %s430
      %p436 = scmp.eq.s32.totalorder %s29, 0
      %p437 = por %p435, %p436
      %p438 = scmp.ne.s32.totalorder %s427, %s430
      %p439 = scmp.eq.s32.totalorder %s34, 1
      %p440 = por %p438, %p439
      %p441 = scmp.ne.s32.totalorder %s430, %s431
      %p442 = scmp.eq.s32.totalorder %s34, 0
      %p443 = por %p441, %p442
      %p444 = scmp.ne.s32.totalorder %s430, %s431
      %p445 = scmp.eq.s32.totalorder %s35, 1
      %p446 = por %p444, %p445
      %p448 = scmp.ne.s32.totalorder %s431, %s447
      %p449 = scmp.eq.s32.totalorder %s35, 0
      %p450 = por %p448, %p449
      %p451 = scmp.le.s32.totalorder 1, %s29
      %p452 = scmp.lt.s32.totalorder %s29, 3
      %p453 = pnand %p451, %p452
      %p454 = pneg %p453
      // Predicated region
      $region9: #{ner_transformer_forward.1} parent=5 // pred_check
        _
      $region10: #{ner_transformer_forward.1} parent=5 // pred_check_branch
        %456 = sbr.rel (%p453) target = $region12
      $region11: #{ner_transformer_forward.1} parent=5 // pred_region
        %s457 = ssub.s32 %s29, 1
        // Predicated region
        $region13: #{ner_transformer_forward.1} parent=11 // pred_check
          %p458 = pneg %p102
        $region14: #{ner_transformer_forward.1} parent=11 // pred_check_branch
          %460 = sbr.rel (%p458) target = $region16
        $region15: #{ner_transformer_forward.1} parent=11 // pred_region
          _
        $region16: #{ner_transformer_forward.1} parent=11 // pred_fallthru
          _
        // Predicated region
        $region17: #{ner_transformer_forward.1} parent=11 // pred_check
          %p461 = pneg %p123
        $region18: #{ner_transformer_forward.1} parent=11 // pred_check_branch
          %463 = sbr.rel (%p461) target = $region20
        $region19: #{ner_transformer_forward.1} parent=11 // pred_region
          _
        $region20: #{ner_transformer_forward.1} parent=11 // pred_fallthru
          _
        // Predicated region
        $region21: #{ner_transformer_forward.1} parent=11 // pred_check
          %p464 = pneg %p144
        $region22: #{ner_transformer_forward.1} parent=11 // pred_check_branch
          %466 = sbr.rel (%p464) target = $region24
        $region23: #{ner_transformer_forward.1} parent=11 // pred_region
          _
        $region24: #{ner_transformer_forward.1} parent=11 // pred_fallthru
          _
        // Predicated region
        $region25: #{ner_transformer_forward.1} parent=11 // pred_check
          %p467 = pneg %p165
        $region26: #{ner_transformer_forward.1} parent=11 // pred_check_branch
          %469 = sbr.rel (%p467) target = $region28
        $region27: #{ner_transformer_forward.1} parent=11 // pred_region
          _
        $region28: #{ner_transformer_forward.1} parent=11 // pred_fallthru
          _
        // Predicated region
        $region29: #{ner_transformer_forward.1} parent=11 // pred_check
          %p470 = pneg %p186
        $region30: #{ner_transformer_forward.1} parent=11 // pred_check_branch
          %472 = sbr.rel (%p470) target = $region32
        $region31: #{ner_transformer_forward.1} parent=11 // pred_region
          _
        $region32: #{ner_transformer_forward.1} parent=11 // pred_fallthru
          _
        // Predicated region
        $region33: #{ner_transformer_forward.1} parent=11 // pred_check
          %p473 = pneg %p207
        $region34: #{ner_transformer_forward.1} parent=11 // pred_check_branch
          %475 = sbr.rel (%p473) target = $region36
        $region35: #{ner_transformer_forward.1} parent=11 // pred_region
          _
        $region36: #{ner_transformer_forward.1} parent=11 // pred_fallthru
          _
        // Predicated region
        $region37: #{ner_transformer_forward.1} parent=11 // pred_check
          %p476 = pneg %p228
        $region38: #{ner_transformer_forward.1} parent=11 // pred_check_branch
          %478 = sbr.rel (%p476) target = $region40
        $region39: #{ner_transformer_forward.1} parent=11 // pred_region
          _
        $region40: #{ner_transformer_forward.1} parent=11 // pred_fallthru
          _
        // Predicated region
        $region41: #{ner_transformer_forward.1} parent=11 // pred_check
          %p479 = pneg %p249
        $region42: #{ner_transformer_forward.1} parent=11 // pred_check_branch
          %481 = sbr.rel (%p479) target = $region44
        $region43: #{ner_transformer_forward.1} parent=11 // pred_region
          _
        $region44: #{ner_transformer_forward.1} parent=11 // pred_fallthru
          _
        // Predicated region
        $region45: #{ner_transformer_forward.1} parent=11 // pred_check
          %p482 = pneg %p270
        $region46: #{ner_transformer_forward.1} parent=11 // pred_check_branch
          %484 = sbr.rel (%p482) target = $region48
        $region47: #{ner_transformer_forward.1} parent=11 // pred_region
          _
        $region48: #{ner_transformer_forward.1} parent=11 // pred_fallthru
          _
        // Predicated region
        $region49: #{ner_transformer_forward.1} parent=11 // pred_check
          %p485 = pneg %p291
        $region50: #{ner_transformer_forward.1} parent=11 // pred_check_branch
          %487 = sbr.rel (%p485) target = $region52
        $region51: #{ner_transformer_forward.1} parent=11 // pred_region
          _
        $region52: #{ner_transformer_forward.1} parent=11 // pred_fallthru
          _
        // Predicated region
        $region53: #{ner_transformer_forward.1} parent=11 // pred_check
          %p488 = pneg %p312
        $region54: #{ner_transformer_forward.1} parent=11 // pred_check_branch
          %490 = sbr.rel (%p488) target = $region56
        $region55: #{ner_transformer_forward.1} parent=11 // pred_region
          _
        $region56: #{ner_transformer_forward.1} parent=11 // pred_fallthru
          _
        // Predicated region
        $region57: #{ner_transformer_forward.1} parent=11 // pred_check
          %p491 = pneg %p333
        $region58: #{ner_transformer_forward.1} parent=11 // pred_check_branch
          %493 = sbr.rel (%p491) target = $region60
        $region59: #{ner_transformer_forward.1} parent=11 // pred_region
          _
        $region60: #{ner_transformer_forward.1} parent=11 // pred_fallthru
          _
        // Predicated region
        $region61: #{ner_transformer_forward.1} parent=11 // pred_check
          %p494 = pneg %p354
        $region62: #{ner_transformer_forward.1} parent=11 // pred_check_branch
          %496 = sbr.rel (%p494) target = $region64
        $region63: #{ner_transformer_forward.1} parent=11 // pred_region
          _
        $region64: #{ner_transformer_forward.1} parent=11 // pred_fallthru
          _
        // Predicated region
        $region65: #{ner_transformer_forward.1} parent=11 // pred_check
          %p497 = pneg %p375
        $region66: #{ner_transformer_forward.1} parent=11 // pred_check_branch
          %499 = sbr.rel (%p497) target = $region68
        $region67: #{ner_transformer_forward.1} parent=11 // pred_region
          _
        $region68: #{ner_transformer_forward.1} parent=11 // pred_fallthru
          _
        // Predicated region
        $region69: #{ner_transformer_forward.1} parent=11 // pred_check
          %p500 = pneg %p396
        $region70: #{ner_transformer_forward.1} parent=11 // pred_check_branch
          %502 = sbr.rel (%p500) target = $region72
        $region71: #{ner_transformer_forward.1} parent=11 // pred_region
          _
        $region72: #{ner_transformer_forward.1} parent=11 // pred_fallthru
          _
        // Predicated region
        $region73: #{ner_transformer_forward.1} parent=11 // pred_check
          %p503 = pneg %p417
        $region74: #{ner_transformer_forward.1} parent=11 // pred_check_branch
          %505 = sbr.rel (%p503) target = $region76
        $region75: #{ner_transformer_forward.1} parent=11 // pred_region
          _
        $region76: #{ner_transformer_forward.1} parent=11 // pred_fallthru
          _
      $region12: #{ner_transformer_forward.1} parent=5 // pred_fallthru
        _
      %p506 = scmp.lt.s32.totalorder %s29, 2
      // Predicated region
      $region77: #{ner_transformer_forward.1} parent=5 // pred_check
        %p507 = pneg %p506
      $region78: #{ner_transformer_forward.1} parent=5 // pred_check_branch
        %509 = sbr.rel (%p507) target = $region80
      $region79: #{ner_transformer_forward.1} parent=5 // pred_region
        // Predicated region
        $region81: #{ner_transformer_forward.1} parent=79 // pred_check
          %p510 = pneg %p49
        $region82: #{ner_transformer_forward.1} parent=79 // pred_check_branch
          %512 = sbr.rel (%p510) target = $region84
        $region83: #{ner_transformer_forward.1} parent=79 // pred_region
          %p513 = scmp.lt.s32.totalorder %s29, 1
          %s514 = scalar_select %p513, %s29, 1
          %s515 = smul.addr %s514, 4
          %s516 = smul.addr %s515, 8
          %s517 = scalar_lea.vmem %s0, %s516
        $region84: #{ner_transformer_forward.1} parent=79 // pred_fallthru
          _
        // Predicated region
        $region85: #{ner_transformer_forward.1} parent=79 // pred_check
          %p518 = pneg %p75
        $region86: #{ner_transformer_forward.1} parent=79 // pred_check_branch
          %520 = sbr.rel (%p518) target = $region88
        $region87: #{ner_transformer_forward.1} parent=79 // pred_region
          %p521 = scmp.lt.s32.totalorder %s29, 1
          %s522 = scalar_select %p521, %s29, 1
          %s523 = scalar_lea.vmem %s1, %s522
        $region88: #{ner_transformer_forward.1} parent=79 // pred_fallthru
          _
      $region80: #{ner_transformer_forward.1} parent=5 // pred_fallthru
        _
      %p524 = scmp.le.s32.totalorder 1, %s29
      %p525 = scmp.lt.s32.totalorder %s29, 3
      %p526 = pnand %p524, %p525
      %p527 = pneg %p526
      // Predicated region
      $region89: #{ner_transformer_forward.1} parent=5 // pred_check
        _
      $region90: #{ner_transformer_forward.1} parent=5 // pred_check_branch
        %529 = sbr.rel (%p526) target = $region92
      $region91: #{ner_transformer_forward.1} parent=5 // pred_region
        %s530 = ssub.s32 %s29, 1
        %p531 = scmp.lt.s32.totalorder %s34, 1
        %s532 = scalar_select %p531, %s34, 1
        %s533 = smul.addr %s532, 4
        %s534 = smul.addr %s533, 8
        %s535 = scalar_lea.vmem %s0, %s534
        %p536 = pneg %p55
        %p537 = pneg %p52
        %p538 = scmp.lt.s32.totalorder %s34, 1
        %s539 = scalar_select %p538, %s34, 1
        %s540 = scalar_lea.vmem %s1, %s539
        %p541 = pneg %p81
        %p542 = pneg %p78
        %p543 = pneg %p102
        %p544 = pneg %p99
        %p545 = pneg %p123
        %p546 = pneg %p120
        %p547 = pneg %p144
        %p548 = pneg %p141
        %p549 = pneg %p165
        %p550 = pneg %p162
        %p551 = pneg %p186
        %p552 = pneg %p183
        %p553 = pneg %p207
        %p554 = pneg %p204
        %p555 = pneg %p228
        %p556 = pneg %p225
        %p557 = pneg %p249
        %p558 = pneg %p246
        %p559 = pneg %p270
        %p560 = pneg %p267
        %p561 = pneg %p291
        %p562 = pneg %p288
        %p563 = pneg %p312
        %p564 = pneg %p309
        %p565 = pneg %p333
        %p566 = pneg %p330
        %p567 = pneg %p354
        %p568 = pneg %p351
        %p569 = pneg %p375
        %p570 = pneg %p372
        %p571 = pneg %p396
        %p572 = pneg %p393
        %p573 = pneg %p417
        %p574 = pneg %p414
        %p575 = pneg %p443
        %p576 = pneg %p440
        %s577 = sand.u32 %s430, 1
        %s578 = scalar_lea.sflag [#allocation4], %s577
        %s579 = sand.u32 %s430, 1
        %s580 = scalar_lea.vmem [#allocation3], %s579
        %p581 = scmp.lt.s32.totalorder %s34, 1
        %s582 = scalar_select %p581, %s34, 1
        %s583 = smul.addr %s582, 4
        %s584 = smul.addr %s583, 8
        %s585 = scalar_lea.vmem %s0, %s584
        %p586 = scmp.lt.s32.totalorder %s34, 1
        %s587 = scalar_select %p586, %s34, 1
        %s588 = scalar_lea.vmem %s1, %s587
        %v589 = vld [vmem:[%s585] sm:$0xff]
        %v590 = vld [vmem:[%s585 + $0x8] sm:$0xff]
        %v591 = vld [vmem:[%s585 + $0x10] sm:$0xff]
        %v592 = vld [vmem:[%s585 + $0x18] sm:$0xff]
        %v593 = vld [vmem:[%s2] sm:$0xff]
        %v594 = vld [vmem:[%s2 + $0x8] sm:$0xff]
        %v595 = vld [vmem:[%s2 + $0x10] sm:$0xff]
        %v596 = vld [vmem:[%s2 + $0x18] sm:$0xff]
        %v597 = vld [vmem:[%s3] sm:$0xff]
        %v598 = vld [vmem:[%s3 + $0x8] sm:$0xff]
        %v599 = vld [vmem:[%s3 + $0x10] sm:$0xff]
        %v600 = vld [vmem:[%s3 + $0x18] sm:$0xff]
        %vm601 = vcmask 64512
        %v602 = vsel %vm601, %v589, 0.0
        %v603 = vsel %vm601, %v590, 0.0
        %v604 = vadd.f32 %v602, %v603
        %v605 = vsel %vm601, %v591, 0.0
        %v606 = vadd.f32 %v604, %v605
        %v607 = vsel %vm601, %v592, 0.0
        %v608 = vadd.f32 %v606, %v607
        %v609 = vrot.slane %v608, 4
        %v610 = vadd.f32 %v608, %v609
        %v611 = vrot.slane %v610, 2
        %v612 = vadd.f32 %v610, %v611
        %v613 = vrot.slane %v612, 1
        %v614 = vadd.f32 %v612, %v613
        %v615 = vrcp.pop 32.0
        %v616 = vmul.f32 32.0, %v615
        %v617 = vsub.f32 1.0, %v616
        %v618 = vmul.f32 %v615, %v617
        %v619 = vadd.f32 %v615, %v618
        %vm620 = vweird.f32 %v615
        %v621 = vsel %vm620, %v615, %v619
        %v622 = vmul.f32 %v614, %v621
        %v623 = vsub.f32 %v589, %v622
        %v624 = vsub.f32 %v590, %v622
        %v625 = vsub.f32 %v591, %v622
        %v626 = vsub.f32 %v592, %v622
        %v627 = vmul.f32 %v623, %v623
        %v628 = vmul.f32 %v624, %v624
        %v629 = vmul.f32 %v625, %v625
        %v630 = vmul.f32 %v626, %v626
        %v631 = vsel %vm601, %v627, 0.0
        %v632 = vsel %vm601, %v628, 0.0
        %v633 = vadd.f32 %v631, %v632
        %v634 = vsel %vm601, %v629, 0.0
        %v635 = vadd.f32 %v633, %v634
        %v636 = vsel %vm601, %v630, 0.0
        %v637 = vadd.f32 %v635, %v636
        %v638 = vrot.slane %v637, 4
        %v639 = vadd.f32 %v637, %v638
        %v640 = vrot.slane %v639, 2
        %v641 = vadd.f32 %v639, %v640
        %v642 = vrot.slane %v641, 1
        %v643 = vadd.f32 %v641, %v642
        %v644 = vmul.f32 %v643, %v621
        %v645 = vadd.f32 %v644, 1e-05
        %v646 = vrsqrt.pop %v645
        %v647 = vmul.f32 %v646, %v645
        %v648 = vmul.f32 %v647, %v646
        %v649 = vmul.f32 0.5, %v648
        %v650 = vsub.f32 1.5, %v649
        %v651 = vmul.f32 %v646, %v650
        %vm652 = vweird.f32 %v645
        %vm653 = vweird.f32 %v646
        %vm654 = vmor %vm652, %vm653
        %v655 = vsel %vm654, %v646, %v651
        %v656 = vmul.f32 %v623, %v655
        %v657 = vmul.f32 %v624, %v655
        %v658 = vmul.f32 %v625, %v655
        %v659 = vmul.f32 %v626, %v655
        %661 = vset.pattern.permute.xlu0 0
        %662 = vperm.xlu0 %661, %v593
        %v663 = vpop.permute.xlu0 %662
        %666 = vset.pattern.permute.xlu0 0
        %667 = vperm.xlu0 %666, %v594
        %v668 = vpop.permute.xlu0 %667
        %671 = vset.pattern.permute.xlu0 0
        %672 = vperm.xlu0 %671, %v595
        %v673 = vpop.permute.xlu0 %672
        %676 = vset.pattern.permute.xlu0 0
        %677 = vperm.xlu0 %676, %v596
        %v678 = vpop.permute.xlu0 %677
        %v680 = vmul.f32 %v656, %v663
        %v681 = vmul.f32 %v657, %v668
        %v682 = vmul.f32 %v658, %v673
        %v683 = vmul.f32 %v659, %v678
        %685 = vset.pattern.permute.xlu0 0
        %686 = vperm.xlu0 %685, %v597
        %v687 = vpop.permute.xlu0 %686
        %690 = vset.pattern.permute.xlu0 0
        %691 = vperm.xlu0 %690, %v598
        %v692 = vpop.permute.xlu0 %691
        %695 = vset.pattern.permute.xlu0 0
        %696 = vperm.xlu0 %695, %v599
        %v697 = vpop.permute.xlu0 %696
        %700 = vset.pattern.permute.xlu0 0
        %701 = vperm.xlu0 %700, %v600
        %v702 = vpop.permute.xlu0 %701
        %v704 = vadd.f32 %v680, %v687
        %v705 = vadd.f32 %v681, %v692
        %v706 = vadd.f32 %v682, %v697
        %v707 = vadd.f32 %v683, %v702
        %v708 = vld [vmem:[%s588] sm:$0x1]
        %v709 = vsub.f32 1.0, %v708
        %v710 = vmul.f32 %v709, -10000.0
        %v711 = vld [vmem:[%s4] sm:$0xff]
        %v712 = vld [vmem:[%s4 + $0x8] sm:$0xff]
        %v713 = vld [vmem:[%s4 + $0x10] sm:$0xff]
        %v714 = vld [vmem:[%s4 + $0x18] sm:$0xff]
        %v715 = vld [vmem:[%s4 + $0x20] sm:$0xff]
        %v716 = vld [vmem:[%s4 + $0x28] sm:$0xff]
        %v717 = vld [vmem:[%s4 + $0x30] sm:$0xff]
        %v718 = vld [vmem:[%s4 + $0x38] sm:$0xff]
        %v719 = vld [vmem:[%s4 + $0x40] sm:$0xff]
        %v720 = vld [vmem:[%s4 + $0x48] sm:$0xff]
        %v721 = vld [vmem:[%s4 + $0x50] sm:$0xff]
        %v722 = vld [vmem:[%s4 + $0x58] sm:$0xff]
        %v723 = vld [vmem:[%s5] sm:$0xff]
        %v724 = vld [vmem:[%s5 + $0x8] sm:$0xff]
        %v725 = vld [vmem:[%s5 + $0x10] sm:$0xff]
        %v726 = vld [vmem:[%s5 + $0x18] sm:$0xff]
        %v727 = vld [vmem:[%s5 + $0x20] sm:$0xff]
        %v728 = vld [vmem:[%s5 + $0x28] sm:$0xff]
        %v729 = vld [vmem:[%s5 + $0x30] sm:$0xff]
        %v730 = vld [vmem:[%s5 + $0x38] sm:$0xff]
        %v731 = vld [vmem:[%s5 + $0x40] sm:$0xff]
        %v732 = vld [vmem:[%s5 + $0x48] sm:$0xff]
        %v733 = vld [vmem:[%s5 + $0x50] sm:$0xff]
        %v734 = vld [vmem:[%s5 + $0x58] sm:$0xff]
        %736 = vset.pattern.permute.xlu0 0
        %737 = vperm.xlu0 %736, %v723
        %v738 = vpop.permute.xlu0 %737
        %741 = vset.pattern.permute.xlu0 0
        %742 = vperm.xlu0 %741, %v724
        %v743 = vpop.permute.xlu0 %742
        %746 = vset.pattern.permute.xlu0 0
        %747 = vperm.xlu0 %746, %v725
        %v748 = vpop.permute.xlu0 %747
        %751 = vset.pattern.permute.xlu0 0
        %752 = vperm.xlu0 %751, %v726
        %v753 = vpop.permute.xlu0 %752
        %756 = vset.pattern.permute.xlu0 0
        %757 = vperm.xlu0 %756, %v727
        %v758 = vpop.permute.xlu0 %757
        %761 = vset.pattern.permute.xlu0 0
        %762 = vperm.xlu0 %761, %v728
        %v763 = vpop.permute.xlu0 %762
        %766 = vset.pattern.permute.xlu0 0
        %767 = vperm.xlu0 %766, %v729
        %v768 = vpop.permute.xlu0 %767
        %771 = vset.pattern.permute.xlu0 0
        %772 = vperm.xlu0 %771, %v730
        %v773 = vpop.permute.xlu0 %772
        %776 = vset.pattern.permute.xlu0 0
        %777 = vperm.xlu0 %776, %v731
        %v778 = vpop.permute.xlu0 %777
        %781 = vset.pattern.permute.xlu0 0
        %782 = vperm.xlu0 %781, %v732
        %v783 = vpop.permute.xlu0 %782
        %786 = vset.pattern.permute.xlu0 0
        %787 = vperm.xlu0 %786, %v733
        %v788 = vpop.permute.xlu0 %787
        %791 = vset.pattern.permute.xlu0 0
        %792 = vperm.xlu0 %791, %v734
        %v793 = vpop.permute.xlu0 %792
        %vm795 = vcmask 261120
        %v797 = vsel %vm795, %v711, 0
        %v800 = vsel %vm795, %v712, 0
        %v803 = vsel %vm795, %v713, 0
        %v806 = vsel %vm795, %v714, 0
        %v809 = vsel %vm795, %v715, 0
        %v812 = vsel %vm795, %v716, 0
        %v815 = vsel %vm795, %v717, 0
        %v818 = vsel %vm795, %v718, 0
        %v821 = vsel %vm795, %v719, 0
        %v824 = vsel %vm795, %v720, 0
        %v827 = vsel %vm795, %v721, 0
        %v830 = vsel %vm795, %v722, 0
        %832 = vmatpush.msra.mxu0 0.0
        %833 = vmatpush.msra.mxu0 0.0
        %834 = vmatpush.msra.mxu0 0.0
        %835 = vmatpush.msra.mxu0 0.0
        %836 = vmatpush.msra.mxu0 0.0
        %837 = vmatpush.msra.mxu0 0.0
        %838 = vmatpush.msra.mxu0 0.0
        %839 = vmatpush.msra.mxu0 0.0
        %840 = vmatpush.msra.mxu0 0.0
        %841 = vmatpush.msra.mxu0 0.0
        %842 = vmatpush.msra.mxu0 0.0
        %843 = vmatpush.msra.mxu0 0.0
        %844 = vmatpush.msra.mxu0 %v707
        %845 = vmatpush.msra.mxu0 %v706
        %846 = vmatpush.msra.mxu0 %v705
        %847 = vmatpush.msra.mxu0 %v704
        %848 = vmatmul.f32.gmra.mxu0 %v797
        %v849 = vpop.f32.mrf.mxu0
        %v850 = vadd.f32 %v738, %v849
        %851 = vmatmul.f32.gmra.mxu0 %v800
        %v852 = vpop.f32.mrf.mxu0
        %v853 = vadd.f32 %v743, %v852
        %854 = vmatmul.f32.gmra.mxu0 %v803
        %v855 = vpop.f32.mrf.mxu0
        %v856 = vadd.f32 %v748, %v855
        %857 = vmatmul.f32.gmra.mxu0 %v806
        %v858 = vpop.f32.mrf.mxu0
        %v859 = vadd.f32 %v753, %v858
        %860 = vmatmul.f32.gmra.mxu0 %v809
        %v861 = vpop.f32.mrf.mxu0
        %v862 = vadd.f32 %v758, %v861
        %863 = vmatmul.f32.gmra.mxu0 %v812
        %v864 = vpop.f32.mrf.mxu0
        %v865 = vadd.f32 %v763, %v864
        %866 = vmatmul.f32.gmra.mxu0 %v815
        %v867 = vpop.f32.mrf.mxu0
        %v868 = vadd.f32 %v768, %v867
        %869 = vmatmul.f32.gmra.mxu0 %v818
        %v870 = vpop.f32.mrf.mxu0
        %v871 = vadd.f32 %v773, %v870
        %872 = vmatmul.f32.gmra.mxu0 %v821
        %v873 = vpop.f32.mrf.mxu0
        %v874 = vadd.f32 %v778, %v873
        %875 = vmatmul.f32.gmra.mxu0 %v824
        %v876 = vpop.f32.mrf.mxu0
        %v877 = vadd.f32 %v783, %v876
        %878 = vmatmul.f32.gmra.mxu0 %v827
        %v879 = vpop.f32.mrf.mxu0
        %v880 = vadd.f32 %v788, %v879
        %881 = vmatmul.f32.gmra.mxu0 %v830
        %v882 = vpop.f32.mrf.mxu0
        %v883 = vadd.f32 %v793, %v882
        %884 = vdwg.mxu0
        %885 = vxpose.xlu0.b32.start [1/16] %v850, 128
        %886 = vxpose.xlu0.b32.cont [2/16] 0.0, 128
        %887 = vxpose.xlu0.b32.cont [3/16] 0.0, 128
        %888 = vxpose.xlu0.b32.cont [4/16] 0.0, 128
        %889 = vxpose.xlu0.b32.cont [5/16] 0.0, 128
        %890 = vxpose.xlu0.b32.cont [6/16] 0.0, 128
        %891 = vxpose.xlu0.b32.cont [7/16] 0.0, 128
        %892 = vxpose.xlu0.b32.cont [8/16] 0.0, 128
        %893 = vxpose.xlu0.b32.cont [9/16] 0.0, 128
        %894 = vxpose.xlu0.b32.cont [10/16] 0.0, 128
        %895 = vxpose.xlu0.b32.cont [11/16] 0.0, 128
        %896 = vxpose.xlu0.b32.cont [12/16] 0.0, 128
        %897 = vxpose.xlu0.b32.cont [13/16] 0.0, 128
        %898 = vxpose.xlu0.b32.cont [14/16] 0.0, 128
        %899 = vxpose.xlu0.b32.cont [15/16] 0.0, 128
        %900 = vxpose.xlu0.b32.end [16/16] 0.0, 128
        %v901 = vpop.trf.xlu0
        %v902 = vpop.trf.xlu0
        %v903 = vpop.trf.xlu0
        %v904 = vpop.trf.xlu0
        %v905 = vpop.trf.xlu0
        %v906 = vpop.trf.xlu0
        %v907 = vpop.trf.xlu0
        %v908 = vpop.trf.xlu0
        %v909 = vpop.trf.xlu0
        %v910 = vpop.trf.xlu0
        %v911 = vpop.trf.xlu0
        %v912 = vpop.trf.xlu0
        %v913 = vpop.trf.xlu0
        %v914 = vpop.trf.xlu0
        %v915 = vpop.trf.xlu0
        %v916 = vpop.trf.xlu0
        %917 = vxpose.xlu0.b32.start [1/16] %v853, 128
        %918 = vxpose.xlu0.b32.cont [2/16] 0.0, 128
        %919 = vxpose.xlu0.b32.cont [3/16] 0.0, 128
        %920 = vxpose.xlu0.b32.cont [4/16] 0.0, 128
        %921 = vxpose.xlu0.b32.cont [5/16] 0.0, 128
        %922 = vxpose.xlu0.b32.cont [6/16] 0.0, 128
        %923 = vxpose.xlu0.b32.cont [7/16] 0.0, 128
        %924 = vxpose.xlu0.b32.cont [8/16] 0.0, 128
        %925 = vxpose.xlu0.b32.cont [9/16] 0.0, 128
        %926 = vxpose.xlu0.b32.cont [10/16] 0.0, 128
        %927 = vxpose.xlu0.b32.cont [11/16] 0.0, 128
        %928 = vxpose.xlu0.b32.cont [12/16] 0.0, 128
        %929 = vxpose.xlu0.b32.cont [13/16] 0.0, 128
        %930 = vxpose.xlu0.b32.cont [14/16] 0.0, 128
        %931 = vxpose.xlu0.b32.cont [15/16] 0.0, 128
        %932 = vxpose.xlu0.b32.end [16/16] 0.0, 128
        %v933 = vpop.trf.xlu0
        %v934 = vpop.trf.xlu0
        %v935 = vpop.trf.xlu0
        %v936 = vpop.trf.xlu0
        %v937 = vpop.trf.xlu0
        %v938 = vpop.trf.xlu0
        %v939 = vpop.trf.xlu0
        %v940 = vpop.trf.xlu0
        %v941 = vpop.trf.xlu0
        %v942 = vpop.trf.xlu0
        %v943 = vpop.trf.xlu0
        %v944 = vpop.trf.xlu0
        %v945 = vpop.trf.xlu0
        %v946 = vpop.trf.xlu0
        %v947 = vpop.trf.xlu0
        %v948 = vpop.trf.xlu0
        %949 = vxpose.xlu0.b32.start [1/16] %v856, 128
        %950 = vxpose.xlu0.b32.cont [2/16] 0.0, 128
        %951 = vxpose.xlu0.b32.cont [3/16] 0.0, 128
        %952 = vxpose.xlu0.b32.cont [4/16] 0.0, 128
        %953 = vxpose.xlu0.b32.cont [5/16] 0.0, 128
        %954 = vxpose.xlu0.b32.cont [6/16] 0.0, 128
        %955 = vxpose.xlu0.b32.cont [7/16] 0.0, 128
        %956 = vxpose.xlu0.b32.cont [8/16] 0.0, 128
        %957 = vxpose.xlu0.b32.cont [9/16] 0.0, 128
        %958 = vxpose.xlu0.b32.cont [10/16] 0.0, 128
        %959 = vxpose.xlu0.b32.cont [11/16] 0.0, 128
        %960 = vxpose.xlu0.b32.cont [12/16] 0.0, 128
        %961 = vxpose.xlu0.b32.cont [13/16] 0.0, 128
        %962 = vxpose.xlu0.b32.cont [14/16] 0.0, 128
        %963 = vxpose.xlu0.b32.cont [15/16] 0.0, 128
        %964 = vxpose.xlu0.b32.end [16/16] 0.0, 128
        %v965 = vpop.trf.xlu0
        %v966 = vpop.trf.xlu0
        %v967 = vpop.trf.xlu0
        %v968 = vpop.trf.xlu0
        %v969 = vpop.trf.xlu0
        %v970 = vpop.trf.xlu0
        %v971 = vpop.trf.xlu0
        %v972 = vpop.trf.xlu0
        %v973 = vpop.trf.xlu0
        %v974 = vpop.trf.xlu0
        %v975 = vpop.trf.xlu0
        %v976 = vpop.trf.xlu0
        %v977 = vpop.trf.xlu0
        %v978 = vpop.trf.xlu0
        %v979 = vpop.trf.xlu0
        %v980 = vpop.trf.xlu0
        %981 = vxpose.xlu0.b32.start [1/16] %v859, 128
        %982 = vxpose.xlu0.b32.cont [2/16] 0.0, 128
        %983 = vxpose.xlu0.b32.cont [3/16] 0.0, 128
        %984 = vxpose.xlu0.b32.cont [4/16] 0.0, 128
        %985 = vxpose.xlu0.b32.cont [5/16] 0.0, 128
        %986 = vxpose.xlu0.b32.cont [6/16] 0.0, 128
        %987 = vxpose.xlu0.b32.cont [7/16] 0.0, 128
        %988 = vxpose.xlu0.b32.cont [8/16] 0.0, 128
        %989 = vxpose.xlu0.b32.cont [9/16] 0.0, 128
        %990 = vxpose.xlu0.b32.cont [10/16] 0.0, 128
        %991 = vxpose.xlu0.b32.cont [11/16] 0.0, 128
        %992 = vxpose.xlu0.b32.cont [12/16] 0.0, 128
        %993 = vxpose.xlu0.b32.cont [13/16] 0.0, 128
        %994 = vxpose.xlu0.b32.cont [14/16] 0.0, 128
        %995 = vxpose.xlu0.b32.cont [15/16] 0.0, 128
        %996 = vxpose.xlu0.b32.end [16/16] 0.0, 128
        %v997 = vpop.trf.xlu0
        %v998 = vpop.trf.xlu0
        %v999 = vpop.trf.xlu0
        %v1000 = vpop.trf.xlu0
        %v1001 = vpop.trf.xlu0
        %v1002 = vpop.trf.xlu0
        %v1003 = vpop.trf.xlu0
        %v1004 = vpop.trf.xlu0
        %v1005 = vpop.trf.xlu0
        %v1006 = vpop.trf.xlu0
        %v1007 = vpop.trf.xlu0
        %v1008 = vpop.trf.xlu0
        %v1009 = vpop.trf.xlu0
        %v1010 = vpop.trf.xlu0
        %v1011 = vpop.trf.xlu0
        %v1012 = vpop.trf.xlu0
        %v1014 = vsel %vm601, %v901, 0
        %1016 = vmatpush.msra.mxu0 0.0
        %1017 = vmatpush.msra.mxu0 0.0
        %1018 = vmatpush.msra.mxu0 0.0
        %1019 = vmatpush.msra.mxu0 0.0
        %1020 = vmatpush.msra.mxu0 0.0
        %1021 = vmatpush.msra.mxu0 0.0
        %1022 = vmatpush.msra.mxu0 0.0
        %1023 = vmatpush.msra.mxu0 0.0
        %1024 = vmatpush.msra.mxu0 0.0
        %1025 = vmatpush.msra.mxu0 0.0
        %1026 = vmatpush.msra.mxu0 0.0
        %1027 = vmatpush.msra.mxu0 0.0
        %1028 = vmatpush.msra.mxu0 0.0
        %1029 = vmatpush.msra.mxu0 0.0
        %1030 = vmatpush.msra.mxu0 0.0
        %1031 = vmatpush.msra.mxu0 %v862
        %1032 = vmatmul.f32.gmra.mxu0 %v1014
        %v1033 = vpop.f32.mrf.mxu0
        %v1034 = vadd.f32 0.0, %v1033
        %1035 = vdwg.mxu0
        %v1037 = vsel %vm601, %v933, 0
        %1039 = vmatpush.msra.mxu0 0.0
        %1040 = vmatpush.msra.mxu0 0.0
        %1041 = vmatpush.msra.mxu0 0.0
        %1042 = vmatpush.msra.mxu0 0.0
        %1043 = vmatpush.msra.mxu0 0.0
        %1044 = vmatpush.msra.mxu0 0.0
        %1045 = vmatpush.msra.mxu0 0.0
        %1046 = vmatpush.msra.mxu0 0.0
        %1047 = vmatpush.msra.mxu0 0.0
        %1048 = vmatpush.msra.mxu0 0.0
        %1049 = vmatpush.msra.mxu0 0.0
        %1050 = vmatpush.msra.mxu0 0.0
        %1051 = vmatpush.msra.mxu0 0.0
        %1052 = vmatpush.msra.mxu0 0.0
        %1053 = vmatpush.msra.mxu0 0.0
        %1054 = vmatpush.msra.mxu0 %v865
        %1055 = vmatmul.f32.gmra.mxu0 %v1037
        %v1056 = vpop.f32.mrf.mxu0
        %v1057 = vadd.f32 0.0, %v1056
        %1058 = vdwg.mxu0
        %v1060 = vsel %vm601, %v965, 0
        %1062 = vmatpush.msra.mxu0 0.0
        %1063 = vmatpush.msra.mxu0 0.0
        %1064 = vmatpush.msra.mxu0 0.0
        %1065 = vmatpush.msra.mxu0 0.0
        %1066 = vmatpush.msra.mxu0 0.0
        %1067 = vmatpush.msra.mxu0 0.0
        %1068 = vmatpush.msra.mxu0 0.0
        %1069 = vmatpush.msra.mxu0 0.0
        %1070 = vmatpush.msra.mxu0 0.0
        %1071 = vmatpush.msra.mxu0 0.0
        %1072 = vmatpush.msra.mxu0 0.0
        %1073 = vmatpush.msra.mxu0 0.0
        %1074 = vmatpush.msra.mxu0 0.0
        %1075 = vmatpush.msra.mxu0 0.0
        %1076 = vmatpush.msra.mxu0 0.0
        %1077 = vmatpush.msra.mxu0 %v868
        %1078 = vmatmul.f32.gmra.mxu0 %v1060
        %v1079 = vpop.f32.mrf.mxu0
        %v1080 = vadd.f32 0.0, %v1079
        %1081 = vdwg.mxu0
        %v1083 = vsel %vm601, %v997, 0
        %1085 = vmatpush.msra.mxu0 0.0
        %1086 = vmatpush.msra.mxu0 0.0
        %1087 = vmatpush.msra.mxu0 0.0
        %1088 = vmatpush.msra.mxu0 0.0
        %1089 = vmatpush.msra.mxu0 0.0
        %1090 = vmatpush.msra.mxu0 0.0
        %1091 = vmatpush.msra.mxu0 0.0
        %1092 = vmatpush.msra.mxu0 0.0
        %1093 = vmatpush.msra.mxu0 0.0
        %1094 = vmatpush.msra.mxu0 0.0
        %1095 = vmatpush.msra.mxu0 0.0
        %1096 = vmatpush.msra.mxu0 0.0
        %1097 = vmatpush.msra.mxu0 0.0
        %1098 = vmatpush.msra.mxu0 0.0
        %1099 = vmatpush.msra.mxu0 0.0
        %1100 = vmatpush.msra.mxu0 %v871
        %1101 = vmatmul.f32.gmra.mxu0 %v1083
        %v1102 = vpop.f32.mrf.mxu0
        %v1103 = vadd.f32 0.0, %v1102
        %1104 = vdwg.mxu0
        %v1105 = vmul.f32 %v1034, 0.35355338
        %v1106 = vmul.f32 %v1057, 0.35355338
        %v1107 = vmul.f32 %v1080, 0.35355338
        %v1108 = vmul.f32 %v1103, 0.35355338
        %v1110 = vperm.slane %v710, 0
        %v1112 = vadd.f32 %v1105, %v1110
        %v1113 = vadd.f32 %v1106, %v1110
        %v1114 = vadd.f32 %v1107, %v1110
        %v1115 = vadd.f32 %v1108, %v1110
        %v1116 = vsel %vm601, %v1112, -inf
        %1117 = vmax.xlane.f32.xlu0 %v1116
        %v1118 = vpop.xlane.xlu0 %1117
        %v1119 = vsel %vm601, %v1113, -inf
        %1120 = vmax.xlane.f32.xlu0 %v1119
        %v1121 = vpop.xlane.xlu0 %1120
        %v1122 = vsel %vm601, %v1114, -inf
        %1123 = vmax.xlane.f32.xlu0 %v1122
        %v1124 = vpop.xlane.xlu0 %1123
        %v1125 = vsel %vm601, %v1115, -inf
        %1126 = vmax.xlane.f32.xlu0 %v1125
        %v1127 = vpop.xlane.xlu0 %1126
        %v1128 = vsub.f32 %v1112, %v1118
        %v1129 = vsub.f32 %v1113, %v1121
        %v1130 = vsub.f32 %v1114, %v1124
        %v1131 = vsub.f32 %v1115, %v1127
        %v1132 = vmul.f32 %v1128, 1.442695
        %v1133 = vpow.pop %v1132
        %v1134 = vmul.f32 %v1129, 1.442695
        %v1135 = vpow.pop %v1134
        %v1136 = vmul.f32 %v1130, 1.442695
        %v1137 = vpow.pop %v1136
        %v1138 = vmul.f32 %v1131, 1.442695
        %v1139 = vpow.pop %v1138
        %v1140 = vsel %vm601, %v1133, 0.0
        %1141 = vadd.xlane.f32.xlu0 %v1140
        %v1142 = vpop.xlane.xlu0 %1141
        %v1143 = vsel %vm601, %v1135, 0.0
        %1144 = vadd.xlane.f32.xlu0 %v1143
        %v1145 = vpop.xlane.xlu0 %1144
        %v1146 = vsel %vm601, %v1137, 0.0
        %1147 = vadd.xlane.f32.xlu0 %v1146
        %v1148 = vpop.xlane.xlu0 %1147
        %v1149 = vsel %vm601, %v1139, 0.0
        %1150 = vadd.xlane.f32.xlu0 %v1149
        %v1151 = vpop.xlane.xlu0 %1150
        %v1152 = vrcp.pop %v1142
        %v1153 = vrcp.pop %v1145
        %v1154 = vrcp.pop %v1148
        %v1155 = vrcp.pop %v1151
        %v1156 = vmul.f32 %v1133, %v1152
        %v1157 = vmul.f32 %v1135, %v1153
        %v1158 = vmul.f32 %v1137, %v1154
        %v1159 = vmul.f32 %v1139, %v1155
        %v1161 = vsel %vm601, %v874, 0
        %v1164 = vsel %vm601, %v1156, 0
        %1166 = vmatpush.xpose.msra.mxu0 0.0
        %1167 = vmatpush.xpose.msra.mxu0 0.0
        %1168 = vmatpush.xpose.msra.mxu0 0.0
        %1169 = vmatpush.xpose.msra.mxu0 0.0
        %1170 = vmatpush.xpose.msra.mxu0 0.0
        %1171 = vmatpush.xpose.msra.mxu0 0.0
        %1172 = vmatpush.xpose.msra.mxu0 0.0
        %1173 = vmatpush.xpose.msra.mxu0 0.0
        %1174 = vmatpush.xpose.msra.mxu0 0.0
        %1175 = vmatpush.xpose.msra.mxu0 0.0
        %1176 = vmatpush.xpose.msra.mxu0 0.0
        %1177 = vmatpush.xpose.msra.mxu0 0.0
        %1178 = vmatpush.xpose.msra.mxu0 0.0
        %1179 = vmatpush.xpose.msra.mxu0 0.0
        %1180 = vmatpush.xpose.msra.mxu0 0.0
        %1181 = vmatpush.xpose.msra.mxu0 %v1164
        %1182 = vmatmul.f32.gmra.mxu0 %v1161
        %v1183 = vpop.f32.mrf.mxu0
        %v1184 = vadd.f32 0.0, %v1183
        %1185 = vdwg.mxu0
        %v1187 = vsel %vm601, %v877, 0
        %v1190 = vsel %vm601, %v1157, 0
        %1192 = vmatpush.xpose.msra.mxu0 0.0
        %1193 = vmatpush.xpose.msra.mxu0 0.0
        %1194 = vmatpush.xpose.msra.mxu0 0.0
        %1195 = vmatpush.xpose.msra.mxu0 0.0
        %1196 = vmatpush.xpose.msra.mxu0 0.0
        %1197 = vmatpush.xpose.msra.mxu0 0.0
        %1198 = vmatpush.xpose.msra.mxu0 0.0
        %1199 = vmatpush.xpose.msra.mxu0 0.0
        %1200 = vmatpush.xpose.msra.mxu0 0.0
        %1201 = vmatpush.xpose.msra.mxu0 0.0
        %1202 = vmatpush.xpose.msra.mxu0 0.0
        %1203 = vmatpush.xpose.msra.mxu0 0.0
        %1204 = vmatpush.xpose.msra.mxu0 0.0
        %1205 = vmatpush.xpose.msra.mxu0 0.0
        %1206 = vmatpush.xpose.msra.mxu0 0.0
        %1207 = vmatpush.xpose.msra.mxu0 %v1190
        %1208 = vmatmul.f32.gmra.mxu0 %v1187
        %v1209 = vpop.f32.mrf.mxu0
        %v1210 = vadd.f32 0.0, %v1209
        %1211 = vdwg.mxu0
        %v1213 = vsel %vm601, %v880, 0
        %v1216 = vsel %vm601, %v1158, 0
        %1218 = vmatpush.xpose.msra.mxu0 0.0
        %1219 = vmatpush.xpose.msra.mxu0 0.0
        %1220 = vmatpush.xpose.msra.mxu0 0.0
        %1221 = vmatpush.xpose.msra.mxu0 0.0
        %1222 = vmatpush.xpose.msra.mxu0 0.0
        %1223 = vmatpush.xpose.msra.mxu0 0.0
        %1224 = vmatpush.xpose.msra.mxu0 0.0
        %1225 = vmatpush.xpose.msra.mxu0 0.0
        %1226 = vmatpush.xpose.msra.mxu0 0.0
        %1227 = vmatpush.xpose.msra.mxu0 0.0
        %1228 = vmatpush.xpose.msra.mxu0 0.0
        %1229 = vmatpush.xpose.msra.mxu0 0.0
        %1230 = vmatpush.xpose.msra.mxu0 0.0
        %1231 = vmatpush.xpose.msra.mxu0 0.0
        %1232 = vmatpush.xpose.msra.mxu0 0.0
        %1233 = vmatpush.xpose.msra.mxu0 %v1216
        %1234 = vmatmul.f32.gmra.mxu0 %v1213
        %v1235 = vpop.f32.mrf.mxu0
        %v1236 = vadd.f32 0.0, %v1235
        %1237 = vdwg.mxu0
        %v1239 = vsel %vm601, %v883, 0
        %v1242 = vsel %vm601, %v1159, 0
        %1244 = vmatpush.xpose.msra.mxu0 0.0
        %1245 = vmatpush.xpose.msra.mxu0 0.0
        %1246 = vmatpush.xpose.msra.mxu0 0.0
        %1247 = vmatpush.xpose.msra.mxu0 0.0
        %1248 = vmatpush.xpose.msra.mxu0 0.0
        %1249 = vmatpush.xpose.msra.mxu0 0.0
        %1250 = vmatpush.xpose.msra.mxu0 0.0
        %1251 = vmatpush.xpose.msra.mxu0 0.0
        %1252 = vmatpush.xpose.msra.mxu0 0.0
        %1253 = vmatpush.xpose.msra.mxu0 0.0
        %1254 = vmatpush.xpose.msra.mxu0 0.0
        %1255 = vmatpush.xpose.msra.mxu0 0.0
        %1256 = vmatpush.xpose.msra.mxu0 0.0
        %1257 = vmatpush.xpose.msra.mxu0 0.0
        %1258 = vmatpush.xpose.msra.mxu0 0.0
        %1259 = vmatpush.xpose.msra.mxu0 %v1242
        %1260 = vmatmul.f32.gmra.mxu0 %v1239
        %v1261 = vpop.f32.mrf.mxu0
        %v1262 = vadd.f32 0.0, %v1261
        %1263 = vdwg.mxu0
        %v1264 = vld [vmem:[%s6] sm:$0xff]
        %v1265 = vld [vmem:[%s6 + $0x8] sm:$0xff]
        %v1266 = vld [vmem:[%s6 + $0x10] sm:$0xff]
        %v1267 = vld [vmem:[%s6 + $0x18] sm:$0xff]
        %v1268 = vld [vmem:[%s7] sm:$0xff]
        %v1269 = vld [vmem:[%s7 + $0x8] sm:$0xff]
        %v1270 = vld [vmem:[%s7 + $0x10] sm:$0xff]
        %v1271 = vld [vmem:[%s7 + $0x18] sm:$0xff]
        %1273 = vset.pattern.permute.xlu0 0
        %1274 = vperm.xlu0 %1273, %v1268
        %v1275 = vpop.permute.xlu0 %1274
        %1278 = vset.pattern.permute.xlu0 0
        %1279 = vperm.xlu0 %1278, %v1269
        %v1280 = vpop.permute.xlu0 %1279
        %1283 = vset.pattern.permute.xlu0 0
        %1284 = vperm.xlu0 %1283, %v1270
        %v1285 = vpop.permute.xlu0 %1284
        %1288 = vset.pattern.permute.xlu0 0
        %1289 = vperm.xlu0 %1288, %v1271
        %v1290 = vpop.permute.xlu0 %1289
        %v1293 = vsel %vm795, %v1264, 0
        %v1296 = vsel %vm795, %v1265, 0
        %v1299 = vsel %vm795, %v1266, 0
        %v1302 = vsel %vm795, %v1267, 0
        %1304 = vmatpush.msra.mxu0 0.0
        %1305 = vmatpush.msra.mxu0 0.0
        %1306 = vmatpush.msra.mxu0 0.0
        %1307 = vmatpush.msra.mxu0 0.0
        %1308 = vmatpush.msra.mxu0 0.0
        %1309 = vmatpush.msra.mxu0 0.0
        %1310 = vmatpush.msra.mxu0 0.0
        %1311 = vmatpush.msra.mxu0 0.0
        %1312 = vmatpush.msra.mxu0 0.0
        %1313 = vmatpush.msra.mxu0 0.0
        %1314 = vmatpush.msra.mxu0 0.0
        %1315 = vmatpush.msra.mxu0 0.0
        %1316 = vmatpush.msra.mxu0 %v1262
        %1317 = vmatpush.msra.mxu0 %v1236
        %1318 = vmatpush.msra.mxu0 %v1210
        %1319 = vmatpush.msra.mxu0 %v1184
        %1320 = vmatmul.f32.gmra.mxu0 %v1293
        %v1321 = vpop.f32.mrf.mxu0
        %v1322 = vadd.f32 %v1275, %v1321
        %1323 = vmatmul.f32.gmra.mxu0 %v1296
        %v1324 = vpop.f32.mrf.mxu0
        %v1325 = vadd.f32 %v1280, %v1324
        %1326 = vmatmul.f32.gmra.mxu0 %v1299
        %v1327 = vpop.f32.mrf.mxu0
        %v1328 = vadd.f32 %v1285, %v1327
        %1329 = vmatmul.f32.gmra.mxu0 %v1302
        %v1330 = vpop.f32.mrf.mxu0
        %v1331 = vadd.f32 %v1290, %v1330
        %1332 = vdwg.mxu0
        %v1333 = vadd.f32 %v1322, %v704
        %v1334 = vadd.f32 %v1325, %v705
        %v1335 = vadd.f32 %v1328, %v706
        %v1336 = vadd.f32 %v1331, %v707
        %v1337 = vld [vmem:[%s8] sm:$0xff]
        %v1338 = vld [vmem:[%s8 + $0x8] sm:$0xff]
        %v1339 = vld [vmem:[%s8 + $0x10] sm:$0xff]
        %v1340 = vld [vmem:[%s8 + $0x18] sm:$0xff]
        %v1341 = vld [vmem:[%s9] sm:$0xff]
        %v1342 = vld [vmem:[%s9 + $0x8] sm:$0xff]
        %v1343 = vld [vmem:[%s9 + $0x10] sm:$0xff]
        %v1344 = vld [vmem:[%s9 + $0x18] sm:$0xff]
        %v1345 = vsel %vm601, %v1333, 0.0
        %v1346 = vsel %vm601, %v1334, 0.0
        %v1347 = vadd.f32 %v1345, %v1346
        %v1348 = vsel %vm601, %v1335, 0.0
        %v1349 = vadd.f32 %v1347, %v1348
        %v1350 = vsel %vm601, %v1336, 0.0
        %v1351 = vadd.f32 %v1349, %v1350
        %v1352 = vrot.slane %v1351, 4
        %v1353 = vadd.f32 %v1351, %v1352
        %v1354 = vrot.slane %v1353, 2
        %v1355 = vadd.f32 %v1353, %v1354
        %v1356 = vrot.slane %v1355, 1
        %v1357 = vadd.f32 %v1355, %v1356
        %v1358 = vmul.f32 %v1357, %v621
        %v1359 = vsub.f32 %v1333, %v1358
        %v1360 = vsub.f32 %v1334, %v1358
        %v1361 = vsub.f32 %v1335, %v1358
        %v1362 = vsub.f32 %v1336, %v1358
        %v1363 = vmul.f32 %v1359, %v1359
        %v1364 = vmul.f32 %v1360, %v1360
        %v1365 = vmul.f32 %v1361, %v1361
        %v1366 = vmul.f32 %v1362, %v1362
        %v1367 = vsel %vm601, %v1363, 0.0
        %v1368 = vsel %vm601, %v1364, 0.0
        %v1369 = vadd.f32 %v1367, %v1368
        %v1370 = vsel %vm601, %v1365, 0.0
        %v1371 = vadd.f32 %v1369, %v1370
        %v1372 = vsel %vm601, %v1366, 0.0
        %v1373 = vadd.f32 %v1371, %v1372
        %v1374 = vrot.slane %v1373, 4
        %v1375 = vadd.f32 %v1373, %v1374
        %v1376 = vrot.slane %v1375, 2
        %v1377 = vadd.f32 %v1375, %v1376
        %v1378 = vrot.slane %v1377, 1
        %v1379 = vadd.f32 %v1377, %v1378
        %v1380 = vmul.f32 %v1379, %v621
        %v1381 = vadd.f32 %v1380, 1e-05
        %v1382 = vrsqrt.pop %v1381
        %v1383 = vmul.f32 %v1382, %v1381
        %v1384 = vmul.f32 %v1383, %v1382
        %v1385 = vmul.f32 0.5, %v1384
        %v1386 = vsub.f32 1.5, %v1385
        %v1387 = vmul.f32 %v1382, %v1386
        %vm1388 = vweird.f32 %v1381
        %vm1389 = vweird.f32 %v1382
        %vm1390 = vmor %vm1388, %vm1389
        %v1391 = vsel %vm1390, %v1382, %v1387
        %v1392 = vmul.f32 %v1359, %v1391
        %v1393 = vmul.f32 %v1360, %v1391
        %v1394 = vmul.f32 %v1361, %v1391
        %v1395 = vmul.f32 %v1362, %v1391
        %1397 = vset.pattern.permute.xlu0 0
        %1398 = vperm.xlu0 %1397, %v1337
        %v1399 = vpop.permute.xlu0 %1398
        %1402 = vset.pattern.permute.xlu0 0
        %1403 = vperm.xlu0 %1402, %v1338
        %v1404 = vpop.permute.xlu0 %1403
        %1407 = vset.pattern.permute.xlu0 0
        %1408 = vperm.xlu0 %1407, %v1339
        %v1409 = vpop.permute.xlu0 %1408
        %1412 = vset.pattern.permute.xlu0 0
        %1413 = vperm.xlu0 %1412, %v1340
        %v1414 = vpop.permute.xlu0 %1413
        %v1416 = vmul.f32 %v1392, %v1399
        %v1417 = vmul.f32 %v1393, %v1404
        %v1418 = vmul.f32 %v1394, %v1409
        %v1419 = vmul.f32 %v1395, %v1414
        %1421 = vset.pattern.permute.xlu0 0
        %1422 = vperm.xlu0 %1421, %v1341
        %v1423 = vpop.permute.xlu0 %1422
        %1426 = vset.pattern.permute.xlu0 0
        %1427 = vperm.xlu0 %1426, %v1342
        %v1428 = vpop.permute.xlu0 %1427
        %1431 = vset.pattern.permute.xlu0 0
        %1432 = vperm.xlu0 %1431, %v1343
        %v1433 = vpop.permute.xlu0 %1432
        %1436 = vset.pattern.permute.xlu0 0
        %1437 = vperm.xlu0 %1436, %v1344
        %v1438 = vpop.permute.xlu0 %1437
        %v1440 = vadd.f32 %v1416, %v1423
        %v1441 = vadd.f32 %v1417, %v1428
        %v1442 = vadd.f32 %v1418, %v1433
        %v1443 = vadd.f32 %v1419, %v1438
        %v1444 = vld [vmem:[%s10] sm:$0xff]
        %v1445 = vld [vmem:[%s10 + $0x8] sm:$0xff]
        %v1446 = vld [vmem:[%s10 + $0x10] sm:$0xff]
        %v1447 = vld [vmem:[%s10 + $0x18] sm:$0xff]
        %v1448 = vld [vmem:[%s10 + $0x20] sm:$0xff]
        %v1449 = vld [vmem:[%s10 + $0x28] sm:$0xff]
        %v1450 = vld [vmem:[%s10 + $0x30] sm:$0xff]
        %v1451 = vld [vmem:[%s10 + $0x38] sm:$0xff]
        %v1452 = vld [vmem:[%s11] sm:$0xff]
        %v1453 = vld [vmem:[%s11 + $0x8] sm:$0xff]
        %v1454 = vld [vmem:[%s11 + $0x10] sm:$0xff]
        %v1455 = vld [vmem:[%s11 + $0x18] sm:$0xff]
        %v1456 = vld [vmem:[%s11 + $0x20] sm:$0xff]
        %v1457 = vld [vmem:[%s11 + $0x28] sm:$0xff]
        %v1458 = vld [vmem:[%s11 + $0x30] sm:$0xff]
        %v1459 = vld [vmem:[%s11 + $0x38] sm:$0xff]
        %1461 = vset.pattern.permute.xlu0 0
        %1462 = vperm.xlu0 %1461, %v1452
        %v1463 = vpop.permute.xlu0 %1462
        %1466 = vset.pattern.permute.xlu0 0
        %1467 = vperm.xlu0 %1466, %v1453
        %v1468 = vpop.permute.xlu0 %1467
        %1471 = vset.pattern.permute.xlu0 0
        %1472 = vperm.xlu0 %1471, %v1454
        %v1473 = vpop.permute.xlu0 %1472
        %1476 = vset.pattern.permute.xlu0 0
        %1477 = vperm.xlu0 %1476, %v1455
        %v1478 = vpop.permute.xlu0 %1477
        %1481 = vset.pattern.permute.xlu0 0
        %1482 = vperm.xlu0 %1481, %v1456
        %v1483 = vpop.permute.xlu0 %1482
        %1486 = vset.pattern.permute.xlu0 0
        %1487 = vperm.xlu0 %1486, %v1457
        %v1488 = vpop.permute.xlu0 %1487
        %1491 = vset.pattern.permute.xlu0 0
        %1492 = vperm.xlu0 %1491, %v1458
        %v1493 = vpop.permute.xlu0 %1492
        %1496 = vset.pattern.permute.xlu0 0
        %1497 = vperm.xlu0 %1496, %v1459
        %v1498 = vpop.permute.xlu0 %1497
        %v1501 = vsel %vm795, %v1444, 0
        %v1504 = vsel %vm795, %v1445, 0
        %v1507 = vsel %vm795, %v1446, 0
        %v1510 = vsel %vm795, %v1447, 0
        %v1513 = vsel %vm795, %v1448, 0
        %v1516 = vsel %vm795, %v1449, 0
        %v1519 = vsel %vm795, %v1450, 0
        %v1522 = vsel %vm795, %v1451, 0
        %1524 = vmatpush.msra.mxu0 0.0
        %1525 = vmatpush.msra.mxu0 0.0
        %1526 = vmatpush.msra.mxu0 0.0
        %1527 = vmatpush.msra.mxu0 0.0
        %1528 = vmatpush.msra.mxu0 0.0
        %1529 = vmatpush.msra.mxu0 0.0
        %1530 = vmatpush.msra.mxu0 0.0
        %1531 = vmatpush.msra.mxu0 0.0
        %1532 = vmatpush.msra.mxu0 0.0
        %1533 = vmatpush.msra.mxu0 0.0
        %1534 = vmatpush.msra.mxu0 0.0
        %1535 = vmatpush.msra.mxu0 0.0
        %1536 = vmatpush.msra.mxu0 %v1443
        %1537 = vmatpush.msra.mxu0 %v1442
        %1538 = vmatpush.msra.mxu0 %v1441
        %1539 = vmatpush.msra.mxu0 %v1440
        %1540 = vmatmul.f32.gmra.mxu0 %v1501
        %v1541 = vpop.f32.mrf.mxu0
        %v1542 = vadd.f32 %v1463, %v1541
        %1543 = vmatmul.f32.gmra.mxu0 %v1504
        %v1544 = vpop.f32.mrf.mxu0
        %v1545 = vadd.f32 %v1468, %v1544
        %1546 = vmatmul.f32.gmra.mxu0 %v1507
        %v1547 = vpop.f32.mrf.mxu0
        %v1548 = vadd.f32 %v1473, %v1547
        %1549 = vmatmul.f32.gmra.mxu0 %v1510
        %v1550 = vpop.f32.mrf.mxu0
        %v1551 = vadd.f32 %v1478, %v1550
        %1552 = vmatmul.f32.gmra.mxu0 %v1513
        %v1553 = vpop.f32.mrf.mxu0
        %v1554 = vadd.f32 %v1483, %v1553
        %1555 = vmatmul.f32.gmra.mxu0 %v1516
        %v1556 = vpop.f32.mrf.mxu0
        %v1557 = vadd.f32 %v1488, %v1556
        %1558 = vmatmul.f32.gmra.mxu0 %v1519
        %v1559 = vpop.f32.mrf.mxu0
        %v1560 = vadd.f32 %v1493, %v1559
        %1561 = vmatmul.f32.gmra.mxu0 %v1522
        %v1562 = vpop.f32.mrf.mxu0
        %v1563 = vadd.f32 %v1498, %v1562
        %1564 = vdwg.mxu0
        %v1565 = vmul.f32 %v1542, 0.5
        %v1566 = vmul.f32 %v1545, 0.5
        %v1567 = vmul.f32 %v1548, 0.5
        %v1568 = vmul.f32 %v1551, 0.5
        %v1569 = vmul.f32 %v1554, 0.5
        %v1570 = vmul.f32 %v1557, 0.5
        %v1571 = vmul.f32 %v1560, 0.5
        %v1572 = vmul.f32 %v1563, 0.5
        %v1573 = vmul.f32 %v1542, 0.70710677
        %v1574 = vmul.f32 %v1545, 0.70710677
        %v1575 = vmul.f32 %v1548, 0.70710677
        %v1576 = vmul.f32 %v1551, 0.70710677
        %v1577 = vmul.f32 %v1554, 0.70710677
        %v1578 = vmul.f32 %v1557, 0.70710677
        %v1579 = vmul.f32 %v1560, 0.70710677
        %v1580 = vmul.f32 %v1563, 0.70710677
        %v1581 = vmul.f32 %v1573, %v1573
        %v1582 = vmin.f32 16.0, %v1581
        %v1583 = vmul.f32 %v1582, 2.1237322e-06
        %v1584 = vadd.f32 %v1583, 0.00028619796
        %v1585 = vmul.f32 %v1582, %v1584
        %v1586 = vadd.f32 %v1585, 0.0036580483
        %v1587 = vmul.f32 %v1582, %v1586
        %v1588 = vadd.f32 %v1587, 0.05243302
        %v1589 = vmul.f32 %v1582, %v1588
        %v1590 = vadd.f32 %v1589, 0.18741608
        %v1591 = vmul.f32 %v1582, %v1590
        %v1592 = vadd.f32 %v1591, 1.1283791
        %v1593 = vmul.f32 %v1573, %v1592
        %v1594 = vmul.f32 %v1582, 3.8918573e-05
        %v1595 = vadd.f32 %v1594, 0.001143296
        %v1596 = vmul.f32 %v1582, %v1595
        %v1597 = vadd.f32 %v1596, 0.014752088
        %v1598 = vmul.f32 %v1582, %v1597
        %v1599 = vadd.f32 %v1598, 0.112945676
        %v1600 = vmul.f32 %v1582, %v1599
        %v1601 = vadd.f32 %v1600, 0.4994258
        %v1602 = vmul.f32 %v1582, %v1601
        %v1603 = vadd.f32 %v1602, 1.0
        %v1604 = vrcp.pop %v1603
        %v1605 = vmul.f32 %v1603, %v1604
        %v1606 = vsub.f32 1.0, %v1605
        %v1607 = vmul.f32 %v1604, %v1606
        %v1608 = vadd.f32 %v1604, %v1607
        %vm1609 = vweird.f32 %v1603
        %vm1610 = vweird.f32 %v1604
        %vm1611 = vmor %vm1609, %vm1610
        %v1612 = vsel %vm1611, %v1604, %v1608
        %v1613 = vand.u32 2147483647, %v1603
        %vm1614 = vcmp.eq.f32.partialorder %v1613, 8.507059e+37
        %v1615 = vand.u32 %v1603, 2147483648
        %v1616 = vor.u32 1.1754944e-38, %v1615
        %v1617 = vsel %vm1614, %v1616, %v1612
        %v1618 = vmul.f32 %v1593, %v1617
        %v1619 = vmin.f32 %v1618, 1.0
        %v1620 = vmax.f32 %v1619, -1.0
        %v1621 = vmul.f32 %v1574, %v1574
        %v1622 = vmin.f32 16.0, %v1621
        %v1623 = vmul.f32 %v1622, 2.1237322e-06
        %v1624 = vadd.f32 %v1623, 0.00028619796
        %v1625 = vmul.f32 %v1622, %v1624
        %v1626 = vadd.f32 %v1625, 0.0036580483
        %v1627 = vmul.f32 %v1622, %v1626
        %v1628 = vadd.f32 %v1627, 0.05243302
        %v1629 = vmul.f32 %v1622, %v1628
        %v1630 = vadd.f32 %v1629, 0.18741608
        %v1631 = vmul.f32 %v1622, %v1630
        %v1632 = vadd.f32 %v1631, 1.1283791
        %v1633 = vmul.f32 %v1574, %v1632
        %v1634 = vmul.f32 %v1622, 3.8918573e-05
        %v1635 = vadd.f32 %v1634, 0.001143296
        %v1636 = vmul.f32 %v1622, %v1635
        %v1637 = vadd.f32 %v1636, 0.014752088
        %v1638 = vmul.f32 %v1622, %v1637
        %v1639 = vadd.f32 %v1638, 0.112945676
        %v1640 = vmul.f32 %v1622, %v1639
        %v1641 = vadd.f32 %v1640, 0.4994258
        %v1642 = vmul.f32 %v1622, %v1641
        %v1643 = vadd.f32 %v1642, 1.0
        %v1644 = vrcp.pop %v1643
        %v1645 = vmul.f32 %v1643, %v1644
        %v1646 = vsub.f32 1.0, %v1645
        %v1647 = vmul.f32 %v1644, %v1646
        %v1648 = vadd.f32 %v1644, %v1647
        %vm1649 = vweird.f32 %v1643
        %vm1650 = vweird.f32 %v1644
        %vm1651 = vmor %vm1649, %vm1650
        %v1652 = vsel %vm1651, %v1644, %v1648
        %v1653 = vand.u32 2147483647, %v1643
        %vm1654 = vcmp.eq.f32.partialorder %v1653, 8.507059e+37
        %v1655 = vand.u32 %v1643, 2147483648
        %v1656 = vor.u32 1.1754944e-38, %v1655
        %v1657 = vsel %vm1654, %v1656, %v1652
        %v1658 = vmul.f32 %v1633, %v1657
        %v1659 = vmin.f32 %v1658, 1.0
        %v1660 = vmax.f32 %v1659, -1.0
        %v1661 = vmul.f32 %v1575, %v1575
        %v1662 = vmin.f32 16.0, %v1661
        %v1663 = vmul.f32 %v1662, 2.1237322e-06
        %v1664 = vadd.f32 %v1663, 0.00028619796
        %v1665 = vmul.f32 %v1662, %v1664
        %v1666 = vadd.f32 %v1665, 0.0036580483
        %v1667 = vmul.f32 %v1662, %v1666
        %v1668 = vadd.f32 %v1667, 0.05243302
        %v1669 = vmul.f32 %v1662, %v1668
        %v1670 = vadd.f32 %v1669, 0.18741608
        %v1671 = vmul.f32 %v1662, %v1670
        %v1672 = vadd.f32 %v1671, 1.1283791
        %v1673 = vmul.f32 %v1575, %v1672
        %v1674 = vmul.f32 %v1662, 3.8918573e-05
        %v1675 = vadd.f32 %v1674, 0.001143296
        %v1676 = vmul.f32 %v1662, %v1675
        %v1677 = vadd.f32 %v1676, 0.014752088
        %v1678 = vmul.f32 %v1662, %v1677
        %v1679 = vadd.f32 %v1678, 0.112945676
        %v1680 = vmul.f32 %v1662, %v1679
        %v1681 = vadd.f32 %v1680, 0.4994258
        %v1682 = vmul.f32 %v1662, %v1681
        %v1683 = vadd.f32 %v1682, 1.0
        %v1684 = vrcp.pop %v1683
        %v1685 = vmul.f32 %v1683, %v1684
        %v1686 = vsub.f32 1.0, %v1685
        %v1687 = vmul.f32 %v1684, %v1686
        %v1688 = vadd.f32 %v1684, %v1687
        %vm1689 = vweird.f32 %v1683
        %vm1690 = vweird.f32 %v1684
        %vm1691 = vmor %vm1689, %vm1690
        %v1692 = vsel %vm1691, %v1684, %v1688
        %v1693 = vand.u32 2147483647, %v1683
        %vm1694 = vcmp.eq.f32.partialorder %v1693, 8.507059e+37
        %v1695 = vand.u32 %v1683, 2147483648
        %v1696 = vor.u32 1.1754944e-38, %v1695
        %v1697 = vsel %vm1694, %v1696, %v1692
        %v1698 = vmul.f32 %v1673, %v1697
        %v1699 = vmin.f32 %v1698, 1.0
        %v1700 = vmax.f32 %v1699, -1.0
        %v1701 = vmul.f32 %v1576, %v1576
        %v1702 = vmin.f32 16.0, %v1701
        %v1703 = vmul.f32 %v1702, 2.1237322e-06
        %v1704 = vadd.f32 %v1703, 0.00028619796
        %v1705 = vmul.f32 %v1702, %v1704
        %v1706 = vadd.f32 %v1705, 0.0036580483
        %v1707 = vmul.f32 %v1702, %v1706
        %v1708 = vadd.f32 %v1707, 0.05243302
        %v1709 = vmul.f32 %v1702, %v1708
        %v1710 = vadd.f32 %v1709, 0.18741608
        %v1711 = vmul.f32 %v1702, %v1710
        %v1712 = vadd.f32 %v1711, 1.1283791
        %v1713 = vmul.f32 %v1576, %v1712
        %v1714 = vmul.f32 %v1702, 3.8918573e-05
        %v1715 = vadd.f32 %v1714, 0.001143296
        %v1716 = vmul.f32 %v1702, %v1715
        %v1717 = vadd.f32 %v1716, 0.014752088
        %v1718 = vmul.f32 %v1702, %v1717
        %v1719 = vadd.f32 %v1718, 0.112945676
        %v1720 = vmul.f32 %v1702, %v1719
        %v1721 = vadd.f32 %v1720, 0.4994258
        %v1722 = vmul.f32 %v1702, %v1721
        %v1723 = vadd.f32 %v1722, 1.0
        %v1724 = vrcp.pop %v1723
        %v1725 = vmul.f32 %v1723, %v1724
        %v1726 = vsub.f32 1.0, %v1725
        %v1727 = vmul.f32 %v1724, %v1726
        %v1728 = vadd.f32 %v1724, %v1727
        %vm1729 = vweird.f32 %v1723
        %vm1730 = vweird.f32 %v1724
        %vm1731 = vmor %vm1729, %vm1730
        %v1732 = vsel %vm1731, %v1724, %v1728
        %v1733 = vand.u32 2147483647, %v1723
        %vm1734 = vcmp.eq.f32.partialorder %v1733, 8.507059e+37
        %v1735 = vand.u32 %v1723, 2147483648
        %v1736 = vor.u32 1.1754944e-38, %v1735
        %v1737 = vsel %vm1734, %v1736, %v1732
        %v1738 = vmul.f32 %v1713, %v1737
        %v1739 = vmin.f32 %v1738, 1.0
        %v1740 = vmax.f32 %v1739, -1.0
        %v1741 = vmul.f32 %v1577, %v1577
        %v1742 = vmin.f32 16.0, %v1741
        %v1743 = vmul.f32 %v1742, 2.1237322e-06
        %v1744 = vadd.f32 %v1743, 0.00028619796
        %v1745 = vmul.f32 %v1742, %v1744
        %v1746 = vadd.f32 %v1745, 0.0036580483
        %v1747 = vmul.f32 %v1742, %v1746
        %v1748 = vadd.f32 %v1747, 0.05243302
        %v1749 = vmul.f32 %v1742, %v1748
        %v1750 = vadd.f32 %v1749, 0.18741608
        %v1751 = vmul.f32 %v1742, %v1750
        %v1752 = vadd.f32 %v1751, 1.1283791
        %v1753 = vmul.f32 %v1577, %v1752
        %v1754 = vmul.f32 %v1742, 3.8918573e-05
        %v1755 = vadd.f32 %v1754, 0.001143296
        %v1756 = vmul.f32 %v1742, %v1755
        %v1757 = vadd.f32 %v1756, 0.014752088
        %v1758 = vmul.f32 %v1742, %v1757
        %v1759 = vadd.f32 %v1758, 0.112945676
        %v1760 = vmul.f32 %v1742, %v1759
        %v1761 = vadd.f32 %v1760, 0.4994258
        %v1762 = vmul.f32 %v1742, %v1761
        %v1763 = vadd.f32 %v1762, 1.0
        %v1764 = vrcp.pop %v1763
        %v1765 = vmul.f32 %v1763, %v1764
        %v1766 = vsub.f32 1.0, %v1765
        %v1767 = vmul.f32 %v1764, %v1766
        %v1768 = vadd.f32 %v1764, %v1767
        %vm1769 = vweird.f32 %v1763
        %vm1770 = vweird.f32 %v1764
        %vm1771 = vmor %vm1769, %vm1770
        %v1772 = vsel %vm1771, %v1764, %v1768
        %v1773 = vand.u32 2147483647, %v1763
        %vm1774 = vcmp.eq.f32.partialorder %v1773, 8.507059e+37
        %v1775 = vand.u32 %v1763, 2147483648
        %v1776 = vor.u32 1.1754944e-38, %v1775
        %v1777 = vsel %vm1774, %v1776, %v1772
        %v1778 = vmul.f32 %v1753, %v1777
        %v1779 = vmin.f32 %v1778, 1.0
        %v1780 = vmax.f32 %v1779, -1.0
        %v1781 = vmul.f32 %v1578, %v1578
        %v1782 = vmin.f32 16.0, %v1781
        %v1783 = vmul.f32 %v1782, 2.1237322e-06
        %v1784 = vadd.f32 %v1783, 0.00028619796
        %v1785 = vmul.f32 %v1782, %v1784
        %v1786 = vadd.f32 %v1785, 0.0036580483
        %v1787 = vmul.f32 %v1782, %v1786
        %v1788 = vadd.f32 %v1787, 0.05243302
        %v1789 = vmul.f32 %v1782, %v1788
        %v1790 = vadd.f32 %v1789, 0.18741608
        %v1791 = vmul.f32 %v1782, %v1790
        %v1792 = vadd.f32 %v1791, 1.1283791
        %v1793 = vmul.f32 %v1578, %v1792
        %v1794 = vmul.f32 %v1782, 3.8918573e-05
        %v1795 = vadd.f32 %v1794, 0.001143296
        %v1796 = vmul.f32 %v1782, %v1795
        %v1797 = vadd.f32 %v1796, 0.014752088
        %v1798 = vmul.f32 %v1782, %v1797
        %v1799 = vadd.f32 %v1798, 0.112945676
        %v1800 = vmul.f32 %v1782, %v1799
        %v1801 = vadd.f32 %v1800, 0.4994258
        %v1802 = vmul.f32 %v1782, %v1801
        %v1803 = vadd.f32 %v1802, 1.0
        %v1804 = vrcp.pop %v1803
        %v1805 = vmul.f32 %v1803, %v1804
        %v1806 = vsub.f32 1.0, %v1805
        %v1807 = vmul.f32 %v1804, %v1806
        %v1808 = vadd.f32 %v1804, %v1807
        %vm1809 = vweird.f32 %v1803
        %vm1810 = vweird.f32 %v1804
        %vm1811 = vmor %vm1809, %vm1810
        %v1812 = vsel %vm1811, %v1804, %v1808
        %v1813 = vand.u32 2147483647, %v1803
        %vm1814 = vcmp.eq.f32.partialorder %v1813, 8.507059e+37
        %v1815 = vand.u32 %v1803, 2147483648
        %v1816 = vor.u32 1.1754944e-38, %v1815
        %v1817 = vsel %vm1814, %v1816, %v1812
        %v1818 = vmul.f32 %v1793, %v1817
        %v1819 = vmin.f32 %v1818, 1.0
        %v1820 = vmax.f32 %v1819, -1.0
        %v1821 = vmul.f32 %v1579, %v1579
        %v1822 = vmin.f32 16.0, %v1821
        %v1823 = vmul.f32 %v1822, 2.1237322e-06
        %v1824 = vadd.f32 %v1823, 0.00028619796
        %v1825 = vmul.f32 %v1822, %v1824
        %v1826 = vadd.f32 %v1825, 0.0036580483
        %v1827 = vmul.f32 %v1822, %v1826
        %v1828 = vadd.f32 %v1827, 0.05243302
        %v1829 = vmul.f32 %v1822, %v1828
        %v1830 = vadd.f32 %v1829, 0.18741608
        %v1831 = vmul.f32 %v1822, %v1830
        %v1832 = vadd.f32 %v1831, 1.1283791
        %v1833 = vmul.f32 %v1579, %v1832
        %v1834 = vmul.f32 %v1822, 3.8918573e-05
        %v1835 = vadd.f32 %v1834, 0.001143296
        %v1836 = vmul.f32 %v1822, %v1835
        %v1837 = vadd.f32 %v1836, 0.014752088
        %v1838 = vmul.f32 %v1822, %v1837
        %v1839 = vadd.f32 %v1838, 0.112945676
        %v1840 = vmul.f32 %v1822, %v1839
        %v1841 = vadd.f32 %v1840, 0.4994258
        %v1842 = vmul.f32 %v1822, %v1841
        %v1843 = vadd.f32 %v1842, 1.0
        %v1844 = vrcp.pop %v1843
        %v1845 = vmul.f32 %v1843, %v1844
        %v1846 = vsub.f32 1.0, %v1845
        %v1847 = vmul.f32 %v1844, %v1846
        %v1848 = vadd.f32 %v1844, %v1847
        %vm1849 = vweird.f32 %v1843
        %vm1850 = vweird.f32 %v1844
        %vm1851 = vmor %vm1849, %vm1850
        %v1852 = vsel %vm1851, %v1844, %v1848
        %v1853 = vand.u32 2147483647, %v1843
        %vm1854 = vcmp.eq.f32.partialorder %v1853, 8.507059e+37
        %v1855 = vand.u32 %v1843, 2147483648
        %v1856 = vor.u32 1.1754944e-38, %v1855
        %v1857 = vsel %vm1854, %v1856, %v1852
        %v1858 = vmul.f32 %v1833, %v1857
        %v1859 = vmin.f32 %v1858, 1.0
        %v1860 = vmax.f32 %v1859, -1.0
        %v1861 = vmul.f32 %v1580, %v1580
        %v1862 = vmin.f32 16.0, %v1861
        %v1863 = vmul.f32 %v1862, 2.1237322e-06
        %v1864 = vadd.f32 %v1863, 0.00028619796
        %v1865 = vmul.f32 %v1862, %v1864
        %v1866 = vadd.f32 %v1865, 0.0036580483
        %v1867 = vmul.f32 %v1862, %v1866
        %v1868 = vadd.f32 %v1867, 0.05243302
        %v1869 = vmul.f32 %v1862, %v1868
        %v1870 = vadd.f32 %v1869, 0.18741608
        %v1871 = vmul.f32 %v1862, %v1870
        %v1872 = vadd.f32 %v1871, 1.1283791
        %v1873 = vmul.f32 %v1580, %v1872
        %v1874 = vmul.f32 %v1862, 3.8918573e-05
        %v1875 = vadd.f32 %v1874, 0.001143296
        %v1876 = vmul.f32 %v1862, %v1875
        %v1877 = vadd.f32 %v1876, 0.014752088
        %v1878 = vmul.f32 %v1862, %v1877
        %v1879 = vadd.f32 %v1878, 0.112945676
        %v1880 = vmul.f32 %v1862, %v1879
        %v1881 = vadd.f32 %v1880, 0.4994258
        %v1882 = vmul.f32 %v1862, %v1881
        %v1883 = vadd.f32 %v1882, 1.0
        %v1884 = vrcp.pop %v1883
        %v1885 = vmul.f32 %v1883, %v1884
        %v1886 = vsub.f32 1.0, %v1885
        %v1887 = vmul.f32 %v1884, %v1886
        %v1888 = vadd.f32 %v1884, %v1887
        %vm1889 = vweird.f32 %v1883
        %vm1890 = vweird.f32 %v1884
        %vm1891 = vmor %vm1889, %vm1890
        %v1892 = vsel %vm1891, %v1884, %v1888
        %v1893 = vand.u32 2147483647, %v1883
        %vm1894 = vcmp.eq.f32.partialorder %v1893, 8.507059e+37
        %v1895 = vand.u32 %v1883, 2147483648
        %v1896 = vor.u32 1.1754944e-38, %v1895
        %v1897 = vsel %vm1894, %v1896, %v1892
        %v1898 = vmul.f32 %v1873, %v1897
        %v1899 = vmin.f32 %v1898, 1.0
        %v1900 = vmax.f32 %v1899, -1.0
        %v1901 = vadd.f32 %v1620, 1.0
        %v1902 = vadd.f32 %v1660, 1.0
        %v1903 = vadd.f32 %v1700, 1.0
        %v1904 = vadd.f32 %v1740, 1.0
        %v1905 = vadd.f32 %v1780, 1.0
        %v1906 = vadd.f32 %v1820, 1.0
        %v1907 = vadd.f32 %v1860, 1.0
        %v1908 = vadd.f32 %v1900, 1.0
        %v1909 = vmul.f32 %v1565, %v1901
        %v1910 = vmul.f32 %v1566, %v1902
        %v1911 = vmul.f32 %v1567, %v1903
        %v1912 = vmul.f32 %v1568, %v1904
        %v1913 = vmul.f32 %v1569, %v1905
        %v1914 = vmul.f32 %v1570, %v1906
        %v1915 = vmul.f32 %v1571, %v1907
        %v1916 = vmul.f32 %v1572, %v1908
        %v1917 = vld [vmem:[%s12] sm:$0xff]
        %v1918 = vld [vmem:[%s12 + $0x8] sm:$0xff]
        %v1919 = vld [vmem:[%s12 + $0x10] sm:$0xff]
        %v1920 = vld [vmem:[%s12 + $0x18] sm:$0xff]
        %v1921 = vld [vmem:[%s13] sm:$0xff]
        %v1922 = vld [vmem:[%s13 + $0x8] sm:$0xff]
        %v1923 = vld [vmem:[%s13 + $0x10] sm:$0xff]
        %v1924 = vld [vmem:[%s13 + $0x18] sm:$0xff]
        %1926 = vset.pattern.permute.xlu0 0
        %1927 = vperm.xlu0 %1926, %v1921
        %v1928 = vpop.permute.xlu0 %1927
        %1931 = vset.pattern.permute.xlu0 0
        %1932 = vperm.xlu0 %1931, %v1922
        %v1933 = vpop.permute.xlu0 %1932
        %1936 = vset.pattern.permute.xlu0 0
        %1937 = vperm.xlu0 %1936, %v1923
        %v1938 = vpop.permute.xlu0 %1937
        %1941 = vset.pattern.permute.xlu0 0
        %1942 = vperm.xlu0 %1941, %v1924
        %v1943 = vpop.permute.xlu0 %1942
        %vm1945 = vcmask 523264
        %v1947 = vsel %vm1945, %v1917, 0
        %v1950 = vsel %vm1945, %v1918, 0
        %v1953 = vsel %vm1945, %v1919, 0
        %v1956 = vsel %vm1945, %v1920, 0
        %1958 = vmatpush.msra.mxu0 0.0
        %1959 = vmatpush.msra.mxu0 0.0
        %1960 = vmatpush.msra.mxu0 0.0
        %1961 = vmatpush.msra.mxu0 0.0
        %1962 = vmatpush.msra.mxu0 0.0
        %1963 = vmatpush.msra.mxu0 0.0
        %1964 = vmatpush.msra.mxu0 0.0
        %1965 = vmatpush.msra.mxu0 0.0
        %1966 = vmatpush.msra.mxu0 %v1916
        %1967 = vmatpush.msra.mxu0 %v1915
        %1968 = vmatpush.msra.mxu0 %v1914
        %1969 = vmatpush.msra.mxu0 %v1913
        %1970 = vmatpush.msra.mxu0 %v1912
        %1971 = vmatpush.msra.mxu0 %v1911
        %1972 = vmatpush.msra.mxu0 %v1910
        %1973 = vmatpush.msra.mxu0 %v1909
        %1974 = vmatmul.f32.gmra.mxu0 %v1947
        %v1975 = vpop.f32.mrf.mxu0
        %v1976 = vadd.f32 %v1928, %v1975
        %1977 = vmatmul.f32.gmra.mxu0 %v1950
        %v1978 = vpop.f32.mrf.mxu0
        %v1979 = vadd.f32 %v1933, %v1978
        %1980 = vmatmul.f32.gmra.mxu0 %v1953
        %v1981 = vpop.f32.mrf.mxu0
        %v1982 = vadd.f32 %v1938, %v1981
        %1983 = vmatmul.f32.gmra.mxu0 %v1956
        %v1984 = vpop.f32.mrf.mxu0
        %v1985 = vadd.f32 %v1943, %v1984
        %1986 = vdwg.mxu0
        %v1987 = vadd.f32 %v1976, %v1440
        %v1988 = vadd.f32 %v1979, %v1441
        %v1989 = vadd.f32 %v1982, %v1442
        %v1990 = vadd.f32 %v1985, %v1443
        %v1991 = vld [vmem:[%s14] sm:$0xff]
        %v1992 = vld [vmem:[%s14 + $0x8] sm:$0xff]
        %v1993 = vld [vmem:[%s14 + $0x10] sm:$0xff]
        %v1994 = vld [vmem:[%s14 + $0x18] sm:$0xff]
        %v1995 = vld [vmem:[%s15] sm:$0xff]
        %v1996 = vld [vmem:[%s15 + $0x8] sm:$0xff]
        %v1997 = vld [vmem:[%s15 + $0x10] sm:$0xff]
        %v1998 = vld [vmem:[%s15 + $0x18] sm:$0xff]
        %v1999 = vsel %vm601, %v1987, 0.0
        %v2000 = vsel %vm601, %v1988, 0.0
        %v2001 = vadd.f32 %v1999, %v2000
        %v2002 = vsel %vm601, %v1989, 0.0
        %v2003 = vadd.f32 %v2001, %v2002
        %v2004 = vsel %vm601, %v1990, 0.0
        %v2005 = vadd.f32 %v2003, %v2004
        %v2006 = vrot.slane %v2005, 4
        %v2007 = vadd.f32 %v2005, %v2006
        %v2008 = vrot.slane %v2007, 2
        %v2009 = vadd.f32 %v2007, %v2008
        %v2010 = vrot.slane %v2009, 1
        %v2011 = vadd.f32 %v2009, %v2010
        %v2012 = vmul.f32 %v2011, %v621
        %v2013 = vsub.f32 %v1987, %v2012
        %v2014 = vsub.f32 %v1988, %v2012
        %v2015 = vsub.f32 %v1989, %v2012
        %v2016 = vsub.f32 %v1990, %v2012
        %v2017 = vmul.f32 %v2013, %v2013
        %v2018 = vmul.f32 %v2014, %v2014
        %v2019 = vmul.f32 %v2015, %v2015
        %v2020 = vmul.f32 %v2016, %v2016
        %v2021 = vsel %vm601, %v2017, 0.0
        %v2022 = vsel %vm601, %v2018, 0.0
        %v2023 = vadd.f32 %v2021, %v2022
        %v2024 = vsel %vm601, %v2019, 0.0
        %v2025 = vadd.f32 %v2023, %v2024
        %v2026 = vsel %vm601, %v2020, 0.0
        %v2027 = vadd.f32 %v2025, %v2026
        %v2028 = vrot.slane %v2027, 4
        %v2029 = vadd.f32 %v2027, %v2028
        %v2030 = vrot.slane %v2029, 2
        %v2031 = vadd.f32 %v2029, %v2030
        %v2032 = vrot.slane %v2031, 1
        %v2033 = vadd.f32 %v2031, %v2032
        %v2034 = vmul.f32 %v2033, %v621
        %v2035 = vadd.f32 %v2034, 1e-05
        %v2036 = vrsqrt.pop %v2035
        %v2037 = vmul.f32 %v2036, %v2035
        %v2038 = vmul.f32 %v2037, %v2036
        %v2039 = vmul.f32 0.5, %v2038
        %v2040 = vsub.f32 1.5, %v2039
        %v2041 = vmul.f32 %v2036, %v2040
        %vm2042 = vweird.f32 %v2035
        %vm2043 = vweird.f32 %v2036
        %vm2044 = vmor %vm2042, %vm2043
        %v2045 = vsel %vm2044, %v2036, %v2041
        %v2046 = vmul.f32 %v2013, %v2045
        %v2047 = vmul.f32 %v2014, %v2045
        %v2048 = vmul.f32 %v2015, %v2045
        %v2049 = vmul.f32 %v2016, %v2045
        %2051 = vset.pattern.permute.xlu0 0
        %2052 = vperm.xlu0 %2051, %v1991
        %v2053 = vpop.permute.xlu0 %2052
        %2056 = vset.pattern.permute.xlu0 0
        %2057 = vperm.xlu0 %2056, %v1992
        %v2058 = vpop.permute.xlu0 %2057
        %2061 = vset.pattern.permute.xlu0 0
        %2062 = vperm.xlu0 %2061, %v1993
        %v2063 = vpop.permute.xlu0 %2062
        %2066 = vset.pattern.permute.xlu0 0
        %2067 = vperm.xlu0 %2066, %v1994
        %v2068 = vpop.permute.xlu0 %2067
        %v2070 = vmul.f32 %v2046, %v2053
        %v2071 = vmul.f32 %v2047, %v2058
        %v2072 = vmul.f32 %v2048, %v2063
        %v2073 = vmul.f32 %v2049, %v2068
        %2075 = vset.pattern.permute.xlu0 0
        %2076 = vperm.xlu0 %2075, %v1995
        %v2077 = vpop.permute.xlu0 %2076
        %2080 = vset.pattern.permute.xlu0 0
        %2081 = vperm.xlu0 %2080, %v1996
        %v2082 = vpop.permute.xlu0 %2081
        %2085 = vset.pattern.permute.xlu0 0
        %2086 = vperm.xlu0 %2085, %v1997
        %v2087 = vpop.permute.xlu0 %2086
        %2090 = vset.pattern.permute.xlu0 0
        %2091 = vperm.xlu0 %2090, %v1998
        %v2092 = vpop.permute.xlu0 %2091
        %v2094 = vadd.f32 %v2070, %v2077
        %v2095 = vadd.f32 %v2071, %v2082
        %v2096 = vadd.f32 %v2072, %v2087
        %v2097 = vadd.f32 %v2073, %v2092
        %s2098 = scalar_lea.vmem %s4, 96
        %v2099 = vld [vmem:[%s2098] sm:$0xff]
        %v2100 = vld [vmem:[%s2098 + $0x8] sm:$0xff]
        %v2101 = vld [vmem:[%s2098 + $0x10] sm:$0xff]
        %v2102 = vld [vmem:[%s2098 + $0x18] sm:$0xff]
        %v2103 = vld [vmem:[%s2098 + $0x20] sm:$0xff]
        %v2104 = vld [vmem:[%s2098 + $0x28] sm:$0xff]
        %v2105 = vld [vmem:[%s2098 + $0x30] sm:$0xff]
        %v2106 = vld [vmem:[%s2098 + $0x38] sm:$0xff]
        %v2107 = vld [vmem:[%s2098 + $0x40] sm:$0xff]
        %v2108 = vld [vmem:[%s2098 + $0x48] sm:$0xff]
        %v2109 = vld [vmem:[%s2098 + $0x50] sm:$0xff]
        %v2110 = vld [vmem:[%s2098 + $0x58] sm:$0xff]
        %s2111 = scalar_lea.vmem %s5, 96
        %v2112 = vld [vmem:[%s2111] sm:$0xff]
        %v2113 = vld [vmem:[%s2111 + $0x8] sm:$0xff]
        %v2114 = vld [vmem:[%s2111 + $0x10] sm:$0xff]
        %v2115 = vld [vmem:[%s2111 + $0x18] sm:$0xff]
        %v2116 = vld [vmem:[%s2111 + $0x20] sm:$0xff]
        %v2117 = vld [vmem:[%s2111 + $0x28] sm:$0xff]
        %v2118 = vld [vmem:[%s2111 + $0x30] sm:$0xff]
        %v2119 = vld [vmem:[%s2111 + $0x38] sm:$0xff]
        %v2120 = vld [vmem:[%s2111 + $0x40] sm:$0xff]
        %v2121 = vld [vmem:[%s2111 + $0x48] sm:$0xff]
        %v2122 = vld [vmem:[%s2111 + $0x50] sm:$0xff]
        %v2123 = vld [vmem:[%s2111 + $0x58] sm:$0xff]
        %2125 = vset.pattern.permute.xlu0 0
        %2126 = vperm.xlu0 %2125, %v2112
        %v2127 = vpop.permute.xlu0 %2126
        %2130 = vset.pattern.permute.xlu0 0
        %2131 = vperm.xlu0 %2130, %v2113
        %v2132 = vpop.permute.xlu0 %2131
        %2135 = vset.pattern.permute.xlu0 0
        %2136 = vperm.xlu0 %2135, %v2114
        %v2137 = vpop.permute.xlu0 %2136
        %2140 = vset.pattern.permute.xlu0 0
        %2141 = vperm.xlu0 %2140, %v2115
        %v2142 = vpop.permute.xlu0 %2141
        %2145 = vset.pattern.permute.xlu0 0
        %2146 = vperm.xlu0 %2145, %v2116
        %v2147 = vpop.permute.xlu0 %2146
        %2150 = vset.pattern.permute.xlu0 0
        %2151 = vperm.xlu0 %2150, %v2117
        %v2152 = vpop.permute.xlu0 %2151
        %2155 = vset.pattern.permute.xlu0 0
        %2156 = vperm.xlu0 %2155, %v2118
        %v2157 = vpop.permute.xlu0 %2156
        %2160 = vset.pattern.permute.xlu0 0
        %2161 = vperm.xlu0 %2160, %v2119
        %v2162 = vpop.permute.xlu0 %2161
        %2165 = vset.pattern.permute.xlu0 0
        %2166 = vperm.xlu0 %2165, %v2120
        %v2167 = vpop.permute.xlu0 %2166
        %2170 = vset.pattern.permute.xlu0 0
        %2171 = vperm.xlu0 %2170, %v2121
        %v2172 = vpop.permute.xlu0 %2171
        %2175 = vset.pattern.permute.xlu0 0
        %2176 = vperm.xlu0 %2175, %v2122
        %v2177 = vpop.permute.xlu0 %2176
        %2180 = vset.pattern.permute.xlu0 0
        %2181 = vperm.xlu0 %2180, %v2123
        %v2182 = vpop.permute.xlu0 %2181
        %v2185 = vsel %vm795, %v2099, 0
        %v2188 = vsel %vm795, %v2100, 0
        %v2191 = vsel %vm795, %v2101, 0
        %v2194 = vsel %vm795, %v2102, 0
        %v2197 = vsel %vm795, %v2103, 0
        %v2200 = vsel %vm795, %v2104, 0
        %v2203 = vsel %vm795, %v2105, 0
        %v2206 = vsel %vm795, %v2106, 0
        %v2209 = vsel %vm795, %v2107, 0
        %v2212 = vsel %vm795, %v2108, 0
        %v2215 = vsel %vm795, %v2109, 0
        %v2218 = vsel %vm795, %v2110, 0
        %2220 = vmatpush.msra.mxu0 0.0
        %2221 = vmatpush.msra.mxu0 0.0
        %2222 = vmatpush.msra.mxu0 0.0
        %2223 = vmatpush.msra.mxu0 0.0
        %2224 = vmatpush.msra.mxu0 0.0
        %2225 = vmatpush.msra.mxu0 0.0
        %2226 = vmatpush.msra.mxu0 0.0
        %2227 = vmatpush.msra.mxu0 0.0
        %2228 = vmatpush.msra.mxu0 0.0
        %2229 = vmatpush.msra.mxu0 0.0
        %2230 = vmatpush.msra.mxu0 0.0
        %2231 = vmatpush.msra.mxu0 0.0
        %2232 = vmatpush.msra.mxu0 %v2097
        %2233 = vmatpush.msra.mxu0 %v2096
        %2234 = vmatpush.msra.mxu0 %v2095
        %2235 = vmatpush.msra.mxu0 %v2094
        %2236 = vmatmul.f32.gmra.mxu0 %v2185
        %v2237 = vpop.f32.mrf.mxu0
        %v2238 = vadd.f32 %v2127, %v2237
        %2239 = vmatmul.f32.gmra.mxu0 %v2188
        %v2240 = vpop.f32.mrf.mxu0
        %v2241 = vadd.f32 %v2132, %v2240
        %2242 = vmatmul.f32.gmra.mxu0 %v2191
        %v2243 = vpop.f32.mrf.mxu0
        %v2244 = vadd.f32 %v2137, %v2243
        %2245 = vmatmul.f32.gmra.mxu0 %v2194
        %v2246 = vpop.f32.mrf.mxu0
        %v2247 = vadd.f32 %v2142, %v2246
        %2248 = vmatmul.f32.gmra.mxu0 %v2197
        %v2249 = vpop.f32.mrf.mxu0
        %v2250 = vadd.f32 %v2147, %v2249
        %2251 = vmatmul.f32.gmra.mxu0 %v2200
        %v2252 = vpop.f32.mrf.mxu0
        %v2253 = vadd.f32 %v2152, %v2252
        %2254 = vmatmul.f32.gmra.mxu0 %v2203
        %v2255 = vpop.f32.mrf.mxu0
        %v2256 = vadd.f32 %v2157, %v2255
        %2257 = vmatmul.f32.gmra.mxu0 %v2206
        %v2258 = vpop.f32.mrf.mxu0
        %v2259 = vadd.f32 %v2162, %v2258
        %2260 = vmatmul.f32.gmra.mxu0 %v2209
        %v2261 = vpop.f32.mrf.mxu0
        %v2262 = vadd.f32 %v2167, %v2261
        %2263 = vmatmul.f32.gmra.mxu0 %v2212
        %v2264 = vpop.f32.mrf.mxu0
        %v2265 = vadd.f32 %v2172, %v2264
        %2266 = vmatmul.f32.gmra.mxu0 %v2215
        %v2267 = vpop.f32.mrf.mxu0
        %v2268 = vadd.f32 %v2177, %v2267
        %2269 = vmatmul.f32.gmra.mxu0 %v2218
        %v2270 = vpop.f32.mrf.mxu0
        %v2271 = vadd.f32 %v2182, %v2270
        %2272 = vdwg.mxu0
        %2273 = vxpose.xlu0.b32.start [1/16] %v2238, 128
        %2274 = vxpose.xlu0.b32.cont [2/16] 0.0, 128
        %2275 = vxpose.xlu0.b32.cont [3/16] 0.0, 128
        %2276 = vxpose.xlu0.b32.cont [4/16] 0.0, 128
        %2277 = vxpose.xlu0.b32.cont [5/16] 0.0, 128
        %2278 = vxpose.xlu0.b32.cont [6/16] 0.0, 128
        %2279 = vxpose.xlu0.b32.cont [7/16] 0.0, 128
        %2280 = vxpose.xlu0.b32.cont [8/16] 0.0, 128
        %2281 = vxpose.xlu0.b32.cont [9/16] 0.0, 128
        %2282 = vxpose.xlu0.b32.cont [10/16] 0.0, 128
        %2283 = vxpose.xlu0.b32.cont [11/16] 0.0, 128
        %2284 = vxpose.xlu0.b32.cont [12/16] 0.0, 128
        %2285 = vxpose.xlu0.b32.cont [13/16] 0.0, 128
        %2286 = vxpose.xlu0.b32.cont [14/16] 0.0, 128
        %2287 = vxpose.xlu0.b32.cont [15/16] 0.0, 128
        %2288 = vxpose.xlu0.b32.end [16/16] 0.0, 128
        %v2289 = vpop.trf.xlu0
        %v2290 = vpop.trf.xlu0
        %v2291 = vpop.trf.xlu0
        %v2292 = vpop.trf.xlu0
        %v2293 = vpop.trf.xlu0
        %v2294 = vpop.trf.xlu0
        %v2295 = vpop.trf.xlu0
        %v2296 = vpop.trf.xlu0
        %v2297 = vpop.trf.xlu0
        %v2298 = vpop.trf.xlu0
        %v2299 = vpop.trf.xlu0
        %v2300 = vpop.trf.xlu0
        %v2301 = vpop.trf.xlu0
        %v2302 = vpop.trf.xlu0
        %v2303 = vpop.trf.xlu0
        %v2304 = vpop.trf.xlu0
        %2305 = vxpose.xlu0.b32.start [1/16] %v2241, 128
        %2306 = vxpose.xlu0.b32.cont [2/16] 0.0, 128
        %2307 = vxpose.xlu0.b32.cont [3/16] 0.0, 128
        %2308 = vxpose.xlu0.b32.cont [4/16] 0.0, 128
        %2309 = vxpose.xlu0.b32.cont [5/16] 0.0, 128
        %2310 = vxpose.xlu0.b32.cont [6/16] 0.0, 128
        %2311 = vxpose.xlu0.b32.cont [7/16] 0.0, 128
        %2312 = vxpose.xlu0.b32.cont [8/16] 0.0, 128
        %2313 = vxpose.xlu0.b32.cont [9/16] 0.0, 128
        %2314 = vxpose.xlu0.b32.cont [10/16] 0.0, 128
        %2315 = vxpose.xlu0.b32.cont [11/16] 0.0, 128
        %2316 = vxpose.xlu0.b32.cont [12/16] 0.0, 128
        %2317 = vxpose.xlu0.b32.cont [13/16] 0.0, 128
        %2318 = vxpose.xlu0.b32.cont [14/16] 0.0, 128
        %2319 = vxpose.xlu0.b32.cont [15/16] 0.0, 128
        %2320 = vxpose.xlu0.b32.end [16/16] 0.0, 128
        %v2321 = vpop.trf.xlu0
        %v2322 = vpop.trf.xlu0
        %v2323 = vpop.trf.xlu0
        %v2324 = vpop.trf.xlu0
        %v2325 = vpop.trf.xlu0
        %v2326 = vpop.trf.xlu0
        %v2327 = vpop.trf.xlu0
        %v2328 = vpop.trf.xlu0
        %v2329 = vpop.trf.xlu0
        %v2330 = vpop.trf.xlu0
        %v2331 = vpop.trf.xlu0
        %v2332 = vpop.trf.xlu0
        %v2333 = vpop.trf.xlu0
        %v2334 = vpop.trf.xlu0
        %v2335 = vpop.trf.xlu0
        %v2336 = vpop.trf.xlu0
        %2337 = vxpose.xlu0.b32.start [1/16] %v2244, 128
        %2338 = vxpose.xlu0.b32.cont [2/16] 0.0, 128
        %2339 = vxpose.xlu0.b32.cont [3/16] 0.0, 128
        %2340 = vxpose.xlu0.b32.cont [4/16] 0.0, 128
        %2341 = vxpose.xlu0.b32.cont [5/16] 0.0, 128
        %2342 = vxpose.xlu0.b32.cont [6/16] 0.0, 128
        %2343 = vxpose.xlu0.b32.cont [7/16] 0.0, 128
        %2344 = vxpose.xlu0.b32.cont [8/16] 0.0, 128
        %2345 = vxpose.xlu0.b32.cont [9/16] 0.0, 128
        %2346 = vxpose.xlu0.b32.cont [10/16] 0.0, 128
        %2347 = vxpose.xlu0.b32.cont [11/16] 0.0, 128
        %2348 = vxpose.xlu0.b32.cont [12/16] 0.0, 128
        %2349 = vxpose.xlu0.b32.cont [13/16] 0.0, 128
        %2350 = vxpose.xlu0.b32.cont [14/16] 0.0, 128
        %2351 = vxpose.xlu0.b32.cont [15/16] 0.0, 128
        %2352 = vxpose.xlu0.b32.end [16/16] 0.0, 128
        %v2353 = vpop.trf.xlu0
        %v2354 = vpop.trf.xlu0
        %v2355 = vpop.trf.xlu0
        %v2356 = vpop.trf.xlu0
        %v2357 = vpop.trf.xlu0
        %v2358 = vpop.trf.xlu0
        %v2359 = vpop.trf.xlu0
        %v2360 = vpop.trf.xlu0
        %v2361 = vpop.trf.xlu0
        %v2362 = vpop.trf.xlu0
        %v2363 = vpop.trf.xlu0
        %v2364 = vpop.trf.xlu0
        %v2365 = vpop.trf.xlu0
        %v2366 = vpop.trf.xlu0
        %v2367 = vpop.trf.xlu0
        %v2368 = vpop.trf.xlu0
        %2369 = vxpose.xlu0.b32.start [1/16] %v2247, 128
        %2370 = vxpose.xlu0.b32.cont [2/16] 0.0, 128
        %2371 = vxpose.xlu0.b32.cont [3/16] 0.0, 128
        %2372 = vxpose.xlu0.b32.cont [4/16] 0.0, 128
        %2373 = vxpose.xlu0.b32.cont [5/16] 0.0, 128
        %2374 = vxpose.xlu0.b32.cont [6/16] 0.0, 128
        %2375 = vxpose.xlu0.b32.cont [7/16] 0.0, 128
        %2376 = vxpose.xlu0.b32.cont [8/16] 0.0, 128
        %2377 = vxpose.xlu0.b32.cont [9/16] 0.0, 128
        %2378 = vxpose.xlu0.b32.cont [10/16] 0.0, 128
        %2379 = vxpose.xlu0.b32.cont [11/16] 0.0, 128
        %2380 = vxpose.xlu0.b32.cont [12/16] 0.0, 128
        %2381 = vxpose.xlu0.b32.cont [13/16] 0.0, 128
        %2382 = vxpose.xlu0.b32.cont [14/16] 0.0, 128
        %2383 = vxpose.xlu0.b32.cont [15/16] 0.0, 128
        %2384 = vxpose.xlu0.b32.end [16/16] 0.0, 128
        %v2385 = vpop.trf.xlu0
        %v2386 = vpop.trf.xlu0
        %v2387 = vpop.trf.xlu0
        %v2388 = vpop.trf.xlu0
        %v2389 = vpop.trf.xlu0
        %v2390 = vpop.trf.xlu0
        %v2391 = vpop.trf.xlu0
        %v2392 = vpop.trf.xlu0
        %v2393 = vpop.trf.xlu0
        %v2394 = vpop.trf.xlu0
        %v2395 = vpop.trf.xlu0
        %v2396 = vpop.trf.xlu0
        %v2397 = vpop.trf.xlu0
        %v2398 = vpop.trf.xlu0
        %v2399 = vpop.trf.xlu0
        %v2400 = vpop.trf.xlu0
        %v2402 = vsel %vm601, %v2289, 0
        %2404 = vmatpush.msra.mxu0 0.0
        %2405 = vmatpush.msra.mxu0 0.0
        %2406 = vmatpush.msra.mxu0 0.0
        %2407 = vmatpush.msra.mxu0 0.0
        %2408 = vmatpush.msra.mxu0 0.0
        %2409 = vmatpush.msra.mxu0 0.0
        %2410 = vmatpush.msra.mxu0 0.0
        %2411 = vmatpush.msra.mxu0 0.0
        %2412 = vmatpush.msra.mxu0 0.0
        %2413 = vmatpush.msra.mxu0 0.0
        %2414 = vmatpush.msra.mxu0 0.0
        %2415 = vmatpush.msra.mxu0 0.0
        %2416 = vmatpush.msra.mxu0 0.0
        %2417 = vmatpush.msra.mxu0 0.0
        %2418 = vmatpush.msra.mxu0 0.0
        %2419 = vmatpush.msra.mxu0 %v2250
        %2420 = vmatmul.f32.gmra.mxu0 %v2402
        %v2421 = vpop.f32.mrf.mxu0
        %v2422 = vadd.f32 0.0, %v2421
        %2423 = vdwg.mxu0
        %v2425 = vsel %vm601, %v2321, 0
        %2427 = vmatpush.msra.mxu0 0.0
        %2428 = vmatpush.msra.mxu0 0.0
        %2429 = vmatpush.msra.mxu0 0.0
        %2430 = vmatpush.msra.mxu0 0.0
        %2431 = vmatpush.msra.mxu0 0.0
        %2432 = vmatpush.msra.mxu0 0.0
        %2433 = vmatpush.msra.mxu0 0.0
        %2434 = vmatpush.msra.mxu0 0.0
        %2435 = vmatpush.msra.mxu0 0.0
        %2436 = vmatpush.msra.mxu0 0.0
        %2437 = vmatpush.msra.mxu0 0.0
        %2438 = vmatpush.msra.mxu0 0.0
        %2439 = vmatpush.msra.mxu0 0.0
        %2440 = vmatpush.msra.mxu0 0.0
        %2441 = vmatpush.msra.mxu0 0.0
        %2442 = vmatpush.msra.mxu0 %v2253
        %2443 = vmatmul.f32.gmra.mxu0 %v2425
        %v2444 = vpop.f32.mrf.mxu0
        %v2445 = vadd.f32 0.0, %v2444
        %2446 = vdwg.mxu0
        %v2448 = vsel %vm601, %v2353, 0
        %2450 = vmatpush.msra.mxu0 0.0
        %2451 = vmatpush.msra.mxu0 0.0
        %2452 = vmatpush.msra.mxu0 0.0
        %2453 = vmatpush.msra.mxu0 0.0
        %2454 = vmatpush.msra.mxu0 0.0
        %2455 = vmatpush.msra.mxu0 0.0
        %2456 = vmatpush.msra.mxu0 0.0
        %2457 = vmatpush.msra.mxu0 0.0
        %2458 = vmatpush.msra.mxu0 0.0
        %2459 = vmatpush.msra.mxu0 0.0
        %2460 = vmatpush.msra.mxu0 0.0
        %2461 = vmatpush.msra.mxu0 0.0
        %2462 = vmatpush.msra.mxu0 0.0
        %2463 = vmatpush.msra.mxu0 0.0
        %2464 = vmatpush.msra.mxu0 0.0
        %2465 = vmatpush.msra.mxu0 %v2256
        %2466 = vmatmul.f32.gmra.mxu0 %v2448
        %v2467 = vpop.f32.mrf.mxu0
        %v2468 = vadd.f32 0.0, %v2467
        %2469 = vdwg.mxu0
        %v2471 = vsel %vm601, %v2385, 0
        %2473 = vmatpush.msra.mxu0 0.0
        %2474 = vmatpush.msra.mxu0 0.0
        %2475 = vmatpush.msra.mxu0 0.0
        %2476 = vmatpush.msra.mxu0 0.0
        %2477 = vmatpush.msra.mxu0 0.0
        %2478 = vmatpush.msra.mxu0 0.0
        %2479 = vmatpush.msra.mxu0 0.0
        %2480 = vmatpush.msra.mxu0 0.0
        %2481 = vmatpush.msra.mxu0 0.0
        %2482 = vmatpush.msra.mxu0 0.0
        %2483 = vmatpush.msra.mxu0 0.0
        %2484 = vmatpush.msra.mxu0 0.0
        %2485 = vmatpush.msra.mxu0 0.0
        %2486 = vmatpush.msra.mxu0 0.0
        %2487 = vmatpush.msra.mxu0 0.0
        %2488 = vmatpush.msra.mxu0 %v2259
        %2489 = vmatmul.f32.gmra.mxu0 %v2471
        %v2490 = vpop.f32.mrf.mxu0
        %v2491 = vadd.f32 0.0, %v2490
        %2492 = vdwg.mxu0
        %v2493 = vmul.f32 %v2422, 0.35355338
        %v2494 = vmul.f32 %v2445, 0.35355338
        %v2495 = vmul.f32 %v2468, 0.35355338
        %v2496 = vmul.f32 %v2491, 0.35355338
        %v2497 = vadd.f32 %v2493, %v1110
        %v2498 = vadd.f32 %v2494, %v1110
        %v2499 = vadd.f32 %v2495, %v1110
        %v2500 = vadd.f32 %v2496, %v1110
        %v2501 = vsel %vm601, %v2497, -inf
        %2502 = vmax.xlane.f32.xlu0 %v2501
        %v2503 = vpop.xlane.xlu0 %2502
        %v2504 = vsel %vm601, %v2498, -inf
        %2505 = vmax.xlane.f32.xlu0 %v2504
        %v2506 = vpop.xlane.xlu0 %2505
        %v2507 = vsel %vm601, %v2499, -inf
        %2508 = vmax.xlane.f32.xlu0 %v2507
        %v2509 = vpop.xlane.xlu0 %2508
        %v2510 = vsel %vm601, %v2500, -inf
        %2511 = vmax.xlane.f32.xlu0 %v2510
        %v2512 = vpop.xlane.xlu0 %2511
        %v2513 = vsub.f32 %v2497, %v2503
        %v2514 = vsub.f32 %v2498, %v2506
        %v2515 = vsub.f32 %v2499, %v2509
        %v2516 = vsub.f32 %v2500, %v2512
        %v2517 = vmul.f32 %v2513, 1.442695
        %v2518 = vpow.pop %v2517
        %v2519 = vmul.f32 %v2514, 1.442695
        %v2520 = vpow.pop %v2519
        %v2521 = vmul.f32 %v2515, 1.442695
        %v2522 = vpow.pop %v2521
        %v2523 = vmul.f32 %v2516, 1.442695
        %v2524 = vpow.pop %v2523
        %v2525 = vsel %vm601, %v2518, 0.0
        %2526 = vadd.xlane.f32.xlu0 %v2525
        %v2527 = vpop.xlane.xlu0 %2526
        %v2528 = vsel %vm601, %v2520, 0.0
        %2529 = vadd.xlane.f32.xlu0 %v2528
        %v2530 = vpop.xlane.xlu0 %2529
        %v2531 = vsel %vm601, %v2522, 0.0
        %2532 = vadd.xlane.f32.xlu0 %v2531
        %v2533 = vpop.xlane.xlu0 %2532
        %v2534 = vsel %vm601, %v2524, 0.0
        %2535 = vadd.xlane.f32.xlu0 %v2534
        %v2536 = vpop.xlane.xlu0 %2535
        %v2537 = vrcp.pop %v2527
        %v2538 = vrcp.pop %v2530
        %v2539 = vrcp.pop %v2533
        %v2540 = vrcp.pop %v2536
        %v2541 = vmul.f32 %v2518, %v2537
        %v2542 = vmul.f32 %v2520, %v2538
        %v2543 = vmul.f32 %v2522, %v2539
        %v2544 = vmul.f32 %v2524, %v2540
        %v2546 = vsel %vm601, %v2262, 0
        %v2549 = vsel %vm601, %v2541, 0
        %2551 = vmatpush.xpose.msra.mxu0 0.0
        %2552 = vmatpush.xpose.msra.mxu0 0.0
        %2553 = vmatpush.xpose.msra.mxu0 0.0
        %2554 = vmatpush.xpose.msra.mxu0 0.0
        %2555 = vmatpush.xpose.msra.mxu0 0.0
        %2556 = vmatpush.xpose.msra.mxu0 0.0
        %2557 = vmatpush.xpose.msra.mxu0 0.0
        %2558 = vmatpush.xpose.msra.mxu0 0.0
        %2559 = vmatpush.xpose.msra.mxu0 0.0
        %2560 = vmatpush.xpose.msra.mxu0 0.0
        %2561 = vmatpush.xpose.msra.mxu0 0.0
        %2562 = vmatpush.xpose.msra.mxu0 0.0
        %2563 = vmatpush.xpose.msra.mxu0 0.0
        %2564 = vmatpush.xpose.msra.mxu0 0.0
        %2565 = vmatpush.xpose.msra.mxu0 0.0
        %2566 = vmatpush.xpose.msra.mxu0 %v2549
        %2567 = vmatmul.f32.gmra.mxu0 %v2546
        %v2568 = vpop.f32.mrf.mxu0
        %v2569 = vadd.f32 0.0, %v2568
        %2570 = vdwg.mxu0
        %v2572 = vsel %vm601, %v2265, 0
        %v2575 = vsel %vm601, %v2542, 0
        %2577 = vmatpush.xpose.msra.mxu0 0.0
        %2578 = vmatpush.xpose.msra.mxu0 0.0
        %2579 = vmatpush.xpose.msra.mxu0 0.0
        %2580 = vmatpush.xpose.msra.mxu0 0.0
        %2581 = vmatpush.xpose.msra.mxu0 0.0
        %2582 = vmatpush.xpose.msra.mxu0 0.0
        %2583 = vmatpush.xpose.msra.mxu0 0.0
        %2584 = vmatpush.xpose.msra.mxu0 0.0
        %2585 = vmatpush.xpose.msra.mxu0 0.0
        %2586 = vmatpush.xpose.msra.mxu0 0.0
        %2587 = vmatpush.xpose.msra.mxu0 0.0
        %2588 = vmatpush.xpose.msra.mxu0 0.0
        %2589 = vmatpush.xpose.msra.mxu0 0.0
        %2590 = vmatpush.xpose.msra.mxu0 0.0
        %2591 = vmatpush.xpose.msra.mxu0 0.0
        %2592 = vmatpush.xpose.msra.mxu0 %v2575
        %2593 = vmatmul.f32.gmra.mxu0 %v2572
        %v2594 = vpop.f32.mrf.mxu0
        %v2595 = vadd.f32 0.0, %v2594
        %2596 = vdwg.mxu0
        %v2598 = vsel %vm601, %v2268, 0
        %v2601 = vsel %vm601, %v2543, 0
        %2603 = vmatpush.xpose.msra.mxu0 0.0
        %2604 = vmatpush.xpose.msra.mxu0 0.0
        %2605 = vmatpush.xpose.msra.mxu0 0.0
        %2606 = vmatpush.xpose.msra.mxu0 0.0
        %2607 = vmatpush.xpose.msra.mxu0 0.0
        %2608 = vmatpush.xpose.msra.mxu0 0.0
        %2609 = vmatpush.xpose.msra.mxu0 0.0
        %2610 = vmatpush.xpose.msra.mxu0 0.0
        %2611 = vmatpush.xpose.msra.mxu0 0.0
        %2612 = vmatpush.xpose.msra.mxu0 0.0
        %2613 = vmatpush.xpose.msra.mxu0 0.0
        %2614 = vmatpush.xpose.msra.mxu0 0.0
        %2615 = vmatpush.xpose.msra.mxu0 0.0
        %2616 = vmatpush.xpose.msra.mxu0 0.0
        %2617 = vmatpush.xpose.msra.mxu0 0.0
        %2618 = vmatpush.xpose.msra.mxu0 %v2601
        %2619 = vmatmul.f32.gmra.mxu0 %v2598
        %v2620 = vpop.f32.mrf.mxu0
        %v2621 = vadd.f32 0.0, %v2620
        %2622 = vdwg.mxu0
        %v2624 = vsel %vm601, %v2271, 0
        %v2627 = vsel %vm601, %v2544, 0
        %2629 = vmatpush.xpose.msra.mxu0 0.0
        %2630 = vmatpush.xpose.msra.mxu0 0.0
        %2631 = vmatpush.xpose.msra.mxu0 0.0
        %2632 = vmatpush.xpose.msra.mxu0 0.0
        %2633 = vmatpush.xpose.msra.mxu0 0.0
        %2634 = vmatpush.xpose.msra.mxu0 0.0
        %2635 = vmatpush.xpose.msra.mxu0 0.0
        %2636 = vmatpush.xpose.msra.mxu0 0.0
        %2637 = vmatpush.xpose.msra.mxu0 0.0
        %2638 = vmatpush.xpose.msra.mxu0 0.0
        %2639 = vmatpush.xpose.msra.mxu0 0.0
        %2640 = vmatpush.xpose.msra.mxu0 0.0
        %2641 = vmatpush.xpose.msra.mxu0 0.0
        %2642 = vmatpush.xpose.msra.mxu0 0.0
        %2643 = vmatpush.xpose.msra.mxu0 0.0
        %2644 = vmatpush.xpose.msra.mxu0 %v2627
        %2645 = vmatmul.f32.gmra.mxu0 %v2624
        %v2646 = vpop.f32.mrf.mxu0
        %v2647 = vadd.f32 0.0, %v2646
        %2648 = vdwg.mxu0
        %s2649 = scalar_lea.vmem %s6, 32
        %v2650 = vld [vmem:[%s2649] sm:$0xff]
        %v2651 = vld [vmem:[%s2649 + $0x8] sm:$0xff]
        %v2652 = vld [vmem:[%s2649 + $0x10] sm:$0xff]
        %v2653 = vld [vmem:[%s2649 + $0x18] sm:$0xff]
        %s2654 = scalar_lea.vmem %s7, 32
        %v2655 = vld [vmem:[%s2654] sm:$0xff]
        %v2656 = vld [vmem:[%s2654 + $0x8] sm:$0xff]
        %v2657 = vld [vmem:[%s2654 + $0x10] sm:$0xff]
        %v2658 = vld [vmem:[%s2654 + $0x18] sm:$0xff]
        %2660 = vset.pattern.permute.xlu0 0
        %2661 = vperm.xlu0 %2660, %v2655
        %v2662 = vpop.permute.xlu0 %2661
        %2665 = vset.pattern.permute.xlu0 0
        %2666 = vperm.xlu0 %2665, %v2656
        %v2667 = vpop.permute.xlu0 %2666
        %2670 = vset.pattern.permute.xlu0 0
        %2671 = vperm.xlu0 %2670, %v2657
        %v2672 = vpop.permute.xlu0 %2671
        %2675 = vset.pattern.permute.xlu0 0
        %2676 = vperm.xlu0 %2675, %v2658
        %v2677 = vpop.permute.xlu0 %2676
        %v2680 = vsel %vm795, %v2650, 0
        %v2683 = vsel %vm795, %v2651, 0
        %v2686 = vsel %vm795, %v2652, 0
        %v2689 = vsel %vm795, %v2653, 0
        %2691 = vmatpush.msra.mxu0 0.0
        %2692 = vmatpush.msra.mxu0 0.0
        %2693 = vmatpush.msra.mxu0 0.0
        %2694 = vmatpush.msra.mxu0 0.0
        %2695 = vmatpush.msra.mxu0 0.0
        %2696 = vmatpush.msra.mxu0 0.0
        %2697 = vmatpush.msra.mxu0 0.0
        %2698 = vmatpush.msra.mxu0 0.0
        %2699 = vmatpush.msra.mxu0 0.0
        %2700 = vmatpush.msra.mxu0 0.0
        %2701 = vmatpush.msra.mxu0 0.0
        %2702 = vmatpush.msra.mxu0 0.0
        %2703 = vmatpush.msra.mxu0 %v2647
        %2704 = vmatpush.msra.mxu0 %v2621
        %2705 = vmatpush.msra.mxu0 %v2595
        %2706 = vmatpush.msra.mxu0 %v2569
        %2707 = vmatmul.f32.gmra.mxu0 %v2680
        %v2708 = vpop.f32.mrf.mxu0
        %v2709 = vadd.f32 %v2662, %v2708
        %2710 = vmatmul.f32.gmra.mxu0 %v2683
        %v2711 = vpop.f32.mrf.mxu0
        %v2712 = vadd.f32 %v2667, %v2711
        %2713 = vmatmul.f32.gmra.mxu0 %v2686
        %v2714 = vpop.f32.mrf.mxu0
        %v2715 = vadd.f32 %v2672, %v2714
        %2716 = vmatmul.f32.gmra.mxu0 %v2689
        %v2717 = vpop.f32.mrf.mxu0
        %v2718 = vadd.f32 %v2677, %v2717
        %2719 = vdwg.mxu0
        %v2720 = vadd.f32 %v2709, %v2094
        %v2721 = vadd.f32 %v2712, %v2095
        %v2722 = vadd.f32 %v2715, %v2096
        %v2723 = vadd.f32 %v2718, %v2097
        %s2724 = scalar_lea.vmem %s8, 32
        %v2725 = vld [vmem:[%s2724] sm:$0xff]
        %v2726 = vld [vmem:[%s2724 + $0x8] sm:$0xff]
        %v2727 = vld [vmem:[%s2724 + $0x10] sm:$0xff]
        %v2728 = vld [vmem:[%s2724 + $0x18] sm:$0xff]
        %s2729 = scalar_lea.vmem %s9, 32
        %v2730 = vld [vmem:[%s2729] sm:$0xff]
        %v2731 = vld [vmem:[%s2729 + $0x8] sm:$0xff]
        %v2732 = vld [vmem:[%s2729 + $0x10] sm:$0xff]
        %v2733 = vld [vmem:[%s2729 + $0x18] sm:$0xff]
        %v2734 = vsel %vm601, %v2720, 0.0
        %v2735 = vsel %vm601, %v2721, 0.0
        %v2736 = vadd.f32 %v2734, %v2735
        %v2737 = vsel %vm601, %v2722, 0.0
        %v2738 = vadd.f32 %v2736, %v2737
        %v2739 = vsel %vm601, %v2723, 0.0
        %v2740 = vadd.f32 %v2738, %v2739
        %v2741 = vrot.slane %v2740, 4
        %v2742 = vadd.f32 %v2740, %v2741
        %v2743 = vrot.slane %v2742, 2
        %v2744 = vadd.f32 %v2742, %v2743
        %v2745 = vrot.slane %v2744, 1
        %v2746 = vadd.f32 %v2744, %v2745
        %v2747 = vmul.f32 %v2746, %v621
        %v2748 = vsub.f32 %v2720, %v2747
        %v2749 = vsub.f32 %v2721, %v2747
        %v2750 = vsub.f32 %v2722, %v2747
        %v2751 = vsub.f32 %v2723, %v2747
        %v2752 = vmul.f32 %v2748, %v2748
        %v2753 = vmul.f32 %v2749, %v2749
        %v2754 = vmul.f32 %v2750, %v2750
        %v2755 = vmul.f32 %v2751, %v2751
        %v2756 = vsel %vm601, %v2752, 0.0
        %v2757 = vsel %vm601, %v2753, 0.0
        %v2758 = vadd.f32 %v2756, %v2757
        %v2759 = vsel %vm601, %v2754, 0.0
        %v2760 = vadd.f32 %v2758, %v2759
        %v2761 = vsel %vm601, %v2755, 0.0
        %v2762 = vadd.f32 %v2760, %v2761
        %v2763 = vrot.slane %v2762, 4
        %v2764 = vadd.f32 %v2762, %v2763
        %v2765 = vrot.slane %v2764, 2
        %v2766 = vadd.f32 %v2764, %v2765
        %v2767 = vrot.slane %v2766, 1
        %v2768 = vadd.f32 %v2766, %v2767
        %v2769 = vmul.f32 %v2768, %v621
        %v2770 = vadd.f32 %v2769, 1e-05
        %v2771 = vrsqrt.pop %v2770
        %v2772 = vmul.f32 %v2771, %v2770
        %v2773 = vmul.f32 %v2772, %v2771
        %v2774 = vmul.f32 0.5, %v2773
        %v2775 = vsub.f32 1.5, %v2774
        %v2776 = vmul.f32 %v2771, %v2775
        %vm2777 = vweird.f32 %v2770
        %vm2778 = vweird.f32 %v2771
        %vm2779 = vmor %vm2777, %vm2778
        %v2780 = vsel %vm2779, %v2771, %v2776
        %v2781 = vmul.f32 %v2748, %v2780
        %v2782 = vmul.f32 %v2749, %v2780
        %v2783 = vmul.f32 %v2750, %v2780
        %v2784 = vmul.f32 %v2751, %v2780
        %2786 = vset.pattern.permute.xlu0 0
        %2787 = vperm.xlu0 %2786, %v2725
        %v2788 = vpop.permute.xlu0 %2787
        %2791 = vset.pattern.permute.xlu0 0
        %2792 = vperm.xlu0 %2791, %v2726
        %v2793 = vpop.permute.xlu0 %2792
        %2796 = vset.pattern.permute.xlu0 0
        %2797 = vperm.xlu0 %2796, %v2727
        %v2798 = vpop.permute.xlu0 %2797
        %2801 = vset.pattern.permute.xlu0 0
        %2802 = vperm.xlu0 %2801, %v2728
        %v2803 = vpop.permute.xlu0 %2802
        %v2805 = vmul.f32 %v2781, %v2788
        %v2806 = vmul.f32 %v2782, %v2793
        %v2807 = vmul.f32 %v2783, %v2798
        %v2808 = vmul.f32 %v2784, %v2803
        %2810 = vset.pattern.permute.xlu0 0
        %2811 = vperm.xlu0 %2810, %v2730
        %v2812 = vpop.permute.xlu0 %2811
        %2815 = vset.pattern.permute.xlu0 0
        %2816 = vperm.xlu0 %2815, %v2731
        %v2817 = vpop.permute.xlu0 %2816
        %2820 = vset.pattern.permute.xlu0 0
        %2821 = vperm.xlu0 %2820, %v2732
        %v2822 = vpop.permute.xlu0 %2821
        %2825 = vset.pattern.permute.xlu0 0
        %2826 = vperm.xlu0 %2825, %v2733
        %v2827 = vpop.permute.xlu0 %2826
        %v2829 = vadd.f32 %v2805, %v2812
        %v2830 = vadd.f32 %v2806, %v2817
        %v2831 = vadd.f32 %v2807, %v2822
        %v2832 = vadd.f32 %v2808, %v2827
        %s2833 = scalar_lea.vmem %s10, 64
        %v2834 = vld [vmem:[%s2833] sm:$0xff]
        %v2835 = vld [vmem:[%s2833 + $0x8] sm:$0xff]
        %v2836 = vld [vmem:[%s2833 + $0x10] sm:$0xff]
        %v2837 = vld [vmem:[%s2833 + $0x18] sm:$0xff]
        %v2838 = vld [vmem:[%s2833 + $0x20] sm:$0xff]
        %v2839 = vld [vmem:[%s2833 + $0x28] sm:$0xff]
        %v2840 = vld [vmem:[%s2833 + $0x30] sm:$0xff]
        %v2841 = vld [vmem:[%s2833 + $0x38] sm:$0xff]
        %s2842 = scalar_lea.vmem %s11, 64
        %v2843 = vld [vmem:[%s2842] sm:$0xff]
        %v2844 = vld [vmem:[%s2842 + $0x8] sm:$0xff]
        %v2845 = vld [vmem:[%s2842 + $0x10] sm:$0xff]
        %v2846 = vld [vmem:[%s2842 + $0x18] sm:$0xff]
        %v2847 = vld [vmem:[%s2842 + $0x20] sm:$0xff]
        %v2848 = vld [vmem:[%s2842 + $0x28] sm:$0xff]
        %v2849 = vld [vmem:[%s2842 + $0x30] sm:$0xff]
        %v2850 = vld [vmem:[%s2842 + $0x38] sm:$0xff]
        %2852 = vset.pattern.permute.xlu0 0
        %2853 = vperm.xlu0 %2852, %v2843
        %v2854 = vpop.permute.xlu0 %2853
        %2857 = vset.pattern.permute.xlu0 0
        %2858 = vperm.xlu0 %2857, %v2844
        %v2859 = vpop.permute.xlu0 %2858
        %2862 = vset.pattern.permute.xlu0 0
        %2863 = vperm.xlu0 %2862, %v2845
        %v2864 = vpop.permute.xlu0 %2863
        %2867 = vset.pattern.permute.xlu0 0
        %2868 = vperm.xlu0 %2867, %v2846
        %v2869 = vpop.permute.xlu0 %2868
        %2872 = vset.pattern.permute.xlu0 0
        %2873 = vperm.xlu0 %2872, %v2847
        %v2874 = vpop.permute.xlu0 %2873
        %2877 = vset.pattern.permute.xlu0 0
        %2878 = vperm.xlu0 %2877, %v2848
        %v2879 = vpop.permute.xlu0 %2878
        %2882 = vset.pattern.permute.xlu0 0
        %2883 = vperm.xlu0 %2882, %v2849
        %v2884 = vpop.permute.xlu0 %2883
        %2887 = vset.pattern.permute.xlu0 0
        %2888 = vperm.xlu0 %2887, %v2850
        %v2889 = vpop.permute.xlu0 %2888
        %v2892 = vsel %vm795, %v2834, 0
        %v2895 = vsel %vm795, %v2835, 0
        %v2898 = vsel %vm795, %v2836, 0
        %v2901 = vsel %vm795, %v2837, 0
        %v2904 = vsel %vm795, %v2838, 0
        %v2907 = vsel %vm795, %v2839, 0
        %v2910 = vsel %vm795, %v2840, 0
        %v2913 = vsel %vm795, %v2841, 0
        %2915 = vmatpush.msra.mxu0 0.0
        %2916 = vmatpush.msra.mxu0 0.0
        %2917 = vmatpush.msra.mxu0 0.0
        %2918 = vmatpush.msra.mxu0 0.0
        %2919 = vmatpush.msra.mxu0 0.0
        %2920 = vmatpush.msra.mxu0 0.0
        %2921 = vmatpush.msra.mxu0 0.0
        %2922 = vmatpush.msra.mxu0 0.0
        %2923 = vmatpush.msra.mxu0 0.0
        %2924 = vmatpush.msra.mxu0 0.0
        %2925 = vmatpush.msra.mxu0 0.0
        %2926 = vmatpush.msra.mxu0 0.0
        %2927 = vmatpush.msra.mxu0 %v2832
        %2928 = vmatpush.msra.mxu0 %v2831
        %2929 = vmatpush.msra.mxu0 %v2830
        %2930 = vmatpush.msra.mxu0 %v2829
        %2931 = vmatmul.f32.gmra.mxu0 %v2892
        %v2932 = vpop.f32.mrf.mxu0
        %v2933 = vadd.f32 %v2854, %v2932
        %2934 = vmatmul.f32.gmra.mxu0 %v2895
        %v2935 = vpop.f32.mrf.mxu0
        %v2936 = vadd.f32 %v2859, %v2935
        %2937 = vmatmul.f32.gmra.mxu0 %v2898
        %v2938 = vpop.f32.mrf.mxu0
        %v2939 = vadd.f32 %v2864, %v2938
        %2940 = vmatmul.f32.gmra.mxu0 %v2901
        %v2941 = vpop.f32.mrf.mxu0
        %v2942 = vadd.f32 %v2869, %v2941
        %2943 = vmatmul.f32.gmra.mxu0 %v2904
        %v2944 = vpop.f32.mrf.mxu0
        %v2945 = vadd.f32 %v2874, %v2944
        %2946 = vmatmul.f32.gmra.mxu0 %v2907
        %v2947 = vpop.f32.mrf.mxu0
        %v2948 = vadd.f32 %v2879, %v2947
        %2949 = vmatmul.f32.gmra.mxu0 %v2910
        %v2950 = vpop.f32.mrf.mxu0
        %v2951 = vadd.f32 %v2884, %v2950
        %2952 = vmatmul.f32.gmra.mxu0 %v2913
        %v2953 = vpop.f32.mrf.mxu0
        %v2954 = vadd.f32 %v2889, %v2953
        %2955 = vdwg.mxu0
        %v2956 = vmul.f32 %v2933, 0.5
        %v2957 = vmul.f32 %v2936, 0.5
        %v2958 = vmul.f32 %v2939, 0.5
        %v2959 = vmul.f32 %v2942, 0.5
        %v2960 = vmul.f32 %v2945, 0.5
        %v2961 = vmul.f32 %v2948, 0.5
        %v2962 = vmul.f32 %v2951, 0.5
        %v2963 = vmul.f32 %v2954, 0.5
        %v2964 = vmul.f32 %v2933, 0.70710677
        %v2965 = vmul.f32 %v2936, 0.70710677
        %v2966 = vmul.f32 %v2939, 0.70710677
        %v2967 = vmul.f32 %v2942, 0.70710677
        %v2968 = vmul.f32 %v2945, 0.70710677
        %v2969 = vmul.f32 %v2948, 0.70710677
        %v2970 = vmul.f32 %v2951, 0.70710677
        %v2971 = vmul.f32 %v2954, 0.70710677
        %v2972 = vmul.f32 %v2964, %v2964
        %v2973 = vmin.f32 16.0, %v2972
        %v2974 = vmul.f32 %v2973, 2.1237322e-06
        %v2975 = vadd.f32 %v2974, 0.00028619796
        %v2976 = vmul.f32 %v2973, %v2975
        %v2977 = vadd.f32 %v2976, 0.0036580483
        %v2978 = vmul.f32 %v2973, %v2977
        %v2979 = vadd.f32 %v2978, 0.05243302
        %v2980 = vmul.f32 %v2973, %v2979
        %v2981 = vadd.f32 %v2980, 0.18741608
        %v2982 = vmul.f32 %v2973, %v2981
        %v2983 = vadd.f32 %v2982, 1.1283791
        %v2984 = vmul.f32 %v2964, %v2983
        %v2985 = vmul.f32 %v2973, 3.8918573e-05
        %v2986 = vadd.f32 %v2985, 0.001143296
        %v2987 = vmul.f32 %v2973, %v2986
        %v2988 = vadd.f32 %v2987, 0.014752088
        %v2989 = vmul.f32 %v2973, %v2988
        %v2990 = vadd.f32 %v2989, 0.112945676
        %v2991 = vmul.f32 %v2973, %v2990
        %v2992 = vadd.f32 %v2991, 0.4994258
        %v2993 = vmul.f32 %v2973, %v2992
        %v2994 = vadd.f32 %v2993, 1.0
        %v2995 = vrcp.pop %v2994
        %v2996 = vmul.f32 %v2994, %v2995
        %v2997 = vsub.f32 1.0, %v2996
        %v2998 = vmul.f32 %v2995, %v2997
        %v2999 = vadd.f32 %v2995, %v2998
        %vm3000 = vweird.f32 %v2994
        %vm3001 = vweird.f32 %v2995
        %vm3002 = vmor %vm3000, %vm3001
        %v3003 = vsel %vm3002, %v2995, %v2999
        %v3004 = vand.u32 2147483647, %v2994
        %vm3005 = vcmp.eq.f32.partialorder %v3004, 8.507059e+37
        %v3006 = vand.u32 %v2994, 2147483648
        %v3007 = vor.u32 1.1754944e-38, %v3006
        %v3008 = vsel %vm3005, %v3007, %v3003
        %v3009 = vmul.f32 %v2984, %v3008
        %v3010 = vmin.f32 %v3009, 1.0
        %v3011 = vmax.f32 %v3010, -1.0
        %v3012 = vmul.f32 %v2965, %v2965
        %v3013 = vmin.f32 16.0, %v3012
        %v3014 = vmul.f32 %v3013, 2.1237322e-06
        %v3015 = vadd.f32 %v3014, 0.00028619796
        %v3016 = vmul.f32 %v3013, %v3015
        %v3017 = vadd.f32 %v3016, 0.0036580483
        %v3018 = vmul.f32 %v3013, %v3017
        %v3019 = vadd.f32 %v3018, 0.05243302
        %v3020 = vmul.f32 %v3013, %v3019
        %v3021 = vadd.f32 %v3020, 0.18741608
        %v3022 = vmul.f32 %v3013, %v3021
        %v3023 = vadd.f32 %v3022, 1.1283791
        %v3024 = vmul.f32 %v2965, %v3023
        %v3025 = vmul.f32 %v3013, 3.8918573e-05
        %v3026 = vadd.f32 %v3025, 0.001143296
        %v3027 = vmul.f32 %v3013, %v3026
        %v3028 = vadd.f32 %v3027, 0.014752088
        %v3029 = vmul.f32 %v3013, %v3028
        %v3030 = vadd.f32 %v3029, 0.112945676
        %v3031 = vmul.f32 %v3013, %v3030
        %v3032 = vadd.f32 %v3031, 0.4994258
        %v3033 = vmul.f32 %v3013, %v3032
        %v3034 = vadd.f32 %v3033, 1.0
        %v3035 = vrcp.pop %v3034
        %v3036 = vmul.f32 %v3034, %v3035
        %v3037 = vsub.f32 1.0, %v3036
        %v3038 = vmul.f32 %v3035, %v3037
        %v3039 = vadd.f32 %v3035, %v3038
        %vm3040 = vweird.f32 %v3034
        %vm3041 = vweird.f32 %v3035
        %vm3042 = vmor %vm3040, %vm3041
        %v3043 = vsel %vm3042, %v3035, %v3039
        %v3044 = vand.u32 2147483647, %v3034
        %vm3045 = vcmp.eq.f32.partialorder %v3044, 8.507059e+37
        %v3046 = vand.u32 %v3034, 2147483648
        %v3047 = vor.u32 1.1754944e-38, %v3046
        %v3048 = vsel %vm3045, %v3047, %v3043
        %v3049 = vmul.f32 %v3024, %v3048
        %v3050 = vmin.f32 %v3049, 1.0
        %v3051 = vmax.f32 %v3050, -1.0
        %v3052 = vmul.f32 %v2966, %v2966
        %v3053 = vmin.f32 16.0, %v3052
        %v3054 = vmul.f32 %v3053, 2.1237322e-06
        %v3055 = vadd.f32 %v3054, 0.00028619796
        %v3056 = vmul.f32 %v3053, %v3055
        %v3057 = vadd.f32 %v3056, 0.0036580483
        %v3058 = vmul.f32 %v3053, %v3057
        %v3059 = vadd.f32 %v3058, 0.05243302
        %v3060 = vmul.f32 %v3053, %v3059
        %v3061 = vadd.f32 %v3060, 0.18741608
        %v3062 = vmul.f32 %v3053, %v3061
        %v3063 = vadd.f32 %v3062, 1.1283791
        %v3064 = vmul.f32 %v2966, %v3063
        %v3065 = vmul.f32 %v3053, 3.8918573e-05
        %v3066 = vadd.f32 %v3065, 0.001143296
        %v3067 = vmul.f32 %v3053, %v3066
        %v3068 = vadd.f32 %v3067, 0.014752088
        %v3069 = vmul.f32 %v3053, %v3068
        %v3070 = vadd.f32 %v3069, 0.112945676
        %v3071 = vmul.f32 %v3053, %v3070
        %v3072 = vadd.f32 %v3071, 0.4994258
        %v3073 = vmul.f32 %v3053, %v3072
        %v3074 = vadd.f32 %v3073, 1.0
        %v3075 = vrcp.pop %v3074
        %v3076 = vmul.f32 %v3074, %v3075
        %v3077 = vsub.f32 1.0, %v3076
        %v3078 = vmul.f32 %v3075, %v3077
        %v3079 = vadd.f32 %v3075, %v3078
        %vm3080 = vweird.f32 %v3074
        %vm3081 = vweird.f32 %v3075
        %vm3082 = vmor %vm3080, %vm3081
        %v3083 = vsel %vm3082, %v3075, %v3079
        %v3084 = vand.u32 2147483647, %v3074
        %vm3085 = vcmp.eq.f32.partialorder %v3084, 8.507059e+37
        %v3086 = vand.u32 %v3074, 2147483648
        %v3087 = vor.u32 1.1754944e-38, %v3086
        %v3088 = vsel %vm3085, %v3087, %v3083
        %v3089 = vmul.f32 %v3064, %v3088
        %v3090 = vmin.f32 %v3089, 1.0
        %v3091 = vmax.f32 %v3090, -1.0
        %v3092 = vmul.f32 %v2967, %v2967
        %v3093 = vmin.f32 16.0, %v3092
        %v3094 = vmul.f32 %v3093, 2.1237322e-06
        %v3095 = vadd.f32 %v3094, 0.00028619796
        %v3096 = vmul.f32 %v3093, %v3095
        %v3097 = vadd.f32 %v3096, 0.0036580483
        %v3098 = vmul.f32 %v3093, %v3097
        %v3099 = vadd.f32 %v3098, 0.05243302
        %v3100 = vmul.f32 %v3093, %v3099
        %v3101 = vadd.f32 %v3100, 0.18741608
        %v3102 = vmul.f32 %v3093, %v3101
        %v3103 = vadd.f32 %v3102, 1.1283791
        %v3104 = vmul.f32 %v2967, %v3103
        %v3105 = vmul.f32 %v3093, 3.8918573e-05
        %v3106 = vadd.f32 %v3105, 0.001143296
        %v3107 = vmul.f32 %v3093, %v3106
        %v3108 = vadd.f32 %v3107, 0.014752088
        %v3109 = vmul.f32 %v3093, %v3108
        %v3110 = vadd.f32 %v3109, 0.112945676
        %v3111 = vmul.f32 %v3093, %v3110
        %v3112 = vadd.f32 %v3111, 0.4994258
        %v3113 = vmul.f32 %v3093, %v3112
        %v3114 = vadd.f32 %v3113, 1.0
        %v3115 = vrcp.pop %v3114
        %v3116 = vmul.f32 %v3114, %v3115
        %v3117 = vsub.f32 1.0, %v3116
        %v3118 = vmul.f32 %v3115, %v3117
        %v3119 = vadd.f32 %v3115, %v3118
        %vm3120 = vweird.f32 %v3114
        %vm3121 = vweird.f32 %v3115
        %vm3122 = vmor %vm3120, %vm3121
        %v3123 = vsel %vm3122, %v3115, %v3119
        %v3124 = vand.u32 2147483647, %v3114
        %vm3125 = vcmp.eq.f32.partialorder %v3124, 8.507059e+37
        %v3126 = vand.u32 %v3114, 2147483648
        %v3127 = vor.u32 1.1754944e-38, %v3126
        %v3128 = vsel %vm3125, %v3127, %v3123
        %v3129 = vmul.f32 %v3104, %v3128
        %v3130 = vmin.f32 %v3129, 1.0
        %v3131 = vmax.f32 %v3130, -1.0
        %v3132 = vmul.f32 %v2968, %v2968
        %v3133 = vmin.f32 16.0, %v3132
        %v3134 = vmul.f32 %v3133, 2.1237322e-06
        %v3135 = vadd.f32 %v3134, 0.00028619796
        %v3136 = vmul.f32 %v3133, %v3135
        %v3137 = vadd.f32 %v3136, 0.0036580483
        %v3138 = vmul.f32 %v3133, %v3137
        %v3139 = vadd.f32 %v3138, 0.05243302
        %v3140 = vmul.f32 %v3133, %v3139
        %v3141 = vadd.f32 %v3140, 0.18741608
        %v3142 = vmul.f32 %v3133, %v3141
        %v3143 = vadd.f32 %v3142, 1.1283791
        %v3144 = vmul.f32 %v2968, %v3143
        %v3145 = vmul.f32 %v3133, 3.8918573e-05
        %v3146 = vadd.f32 %v3145, 0.001143296
        %v3147 = vmul.f32 %v3133, %v3146
        %v3148 = vadd.f32 %v3147, 0.014752088
        %v3149 = vmul.f32 %v3133, %v3148
        %v3150 = vadd.f32 %v3149, 0.112945676
        %v3151 = vmul.f32 %v3133, %v3150
        %v3152 = vadd.f32 %v3151, 0.4994258
        %v3153 = vmul.f32 %v3133, %v3152
        %v3154 = vadd.f32 %v3153, 1.0
        %v3155 = vrcp.pop %v3154
        %v3156 = vmul.f32 %v3154, %v3155
        %v3157 = vsub.f32 1.0, %v3156
        %v3158 = vmul.f32 %v3155, %v3157
        %v3159 = vadd.f32 %v3155, %v3158
        %vm3160 = vweird.f32 %v3154
        %vm3161 = vweird.f32 %v3155
        %vm3162 = vmor %vm3160, %vm3161
        %v3163 = vsel %vm3162, %v3155, %v3159
        %v3164 = vand.u32 2147483647, %v3154
        %vm3165 = vcmp.eq.f32.partialorder %v3164, 8.507059e+37
        %v3166 = vand.u32 %v3154, 2147483648
        %v3167 = vor.u32 1.1754944e-38, %v3166
        %v3168 = vsel %vm3165, %v3167, %v3163
        %v3169 = vmul.f32 %v3144, %v3168
        %v3170 = vmin.f32 %v3169, 1.0
        %v3171 = vmax.f32 %v3170, -1.0
        %v3172 = vmul.f32 %v2969, %v2969
        %v3173 = vmin.f32 16.0, %v3172
        %v3174 = vmul.f32 %v3173, 2.1237322e-06
        %v3175 = vadd.f32 %v3174, 0.00028619796
        %v3176 = vmul.f32 %v3173, %v3175
        %v3177 = vadd.f32 %v3176, 0.0036580483
        %v3178 = vmul.f32 %v3173, %v3177
        %v3179 = vadd.f32 %v3178, 0.05243302
        %v3180 = vmul.f32 %v3173, %v3179
        %v3181 = vadd.f32 %v3180, 0.18741608
        %v3182 = vmul.f32 %v3173, %v3181
        %v3183 = vadd.f32 %v3182, 1.1283791
        %v3184 = vmul.f32 %v2969, %v3183
        %v3185 = vmul.f32 %v3173, 3.8918573e-05
        %v3186 = vadd.f32 %v3185, 0.001143296
        %v3187 = vmul.f32 %v3173, %v3186
        %v3188 = vadd.f32 %v3187, 0.014752088
        %v3189 = vmul.f32 %v3173, %v3188
        %v3190 = vadd.f32 %v3189, 0.112945676
        %v3191 = vmul.f32 %v3173, %v3190
        %v3192 = vadd.f32 %v3191, 0.4994258
        %v3193 = vmul.f32 %v3173, %v3192
        %v3194 = vadd.f32 %v3193, 1.0
        %v3195 = vrcp.pop %v3194
        %v3196 = vmul.f32 %v3194, %v3195
        %v3197 = vsub.f32 1.0, %v3196
        %v3198 = vmul.f32 %v3195, %v3197
        %v3199 = vadd.f32 %v3195, %v3198
        %vm3200 = vweird.f32 %v3194
        %vm3201 = vweird.f32 %v3195
        %vm3202 = vmor %vm3200, %vm3201
        %v3203 = vsel %vm3202, %v3195, %v3199
        %v3204 = vand.u32 2147483647, %v3194
        %vm3205 = vcmp.eq.f32.partialorder %v3204, 8.507059e+37
        %v3206 = vand.u32 %v3194, 2147483648
        %v3207 = vor.u32 1.1754944e-38, %v3206
        %v3208 = vsel %vm3205, %v3207, %v3203
        %v3209 = vmul.f32 %v3184, %v3208
        %v3210 = vmin.f32 %v3209, 1.0
        %v3211 = vmax.f32 %v3210, -1.0
        %v3212 = vmul.f32 %v2970, %v2970
        %v3213 = vmin.f32 16.0, %v3212
        %v3214 = vmul.f32 %v3213, 2.1237322e-06
        %v3215 = vadd.f32 %v3214, 0.00028619796
        %v3216 = vmul.f32 %v3213, %v3215
        %v3217 = vadd.f32 %v3216, 0.0036580483
        %v3218 = vmul.f32 %v3213, %v3217
        %v3219 = vadd.f32 %v3218, 0.05243302
        %v3220 = vmul.f32 %v3213, %v3219
        %v3221 = vadd.f32 %v3220, 0.18741608
        %v3222 = vmul.f32 %v3213, %v3221
        %v3223 = vadd.f32 %v3222, 1.1283791
        %v3224 = vmul.f32 %v2970, %v3223
        %v3225 = vmul.f32 %v3213, 3.8918573e-05
        %v3226 = vadd.f32 %v3225, 0.001143296
        %v3227 = vmul.f32 %v3213, %v3226
        %v3228 = vadd.f32 %v3227, 0.014752088
        %v3229 = vmul.f32 %v3213, %v3228
        %v3230 = vadd.f32 %v3229, 0.112945676
        %v3231 = vmul.f32 %v3213, %v3230
        %v3232 = vadd.f32 %v3231, 0.4994258
        %v3233 = vmul.f32 %v3213, %v3232
        %v3234 = vadd.f32 %v3233, 1.0
        %v3235 = vrcp.pop %v3234
        %v3236 = vmul.f32 %v3234, %v3235
        %v3237 = vsub.f32 1.0, %v3236
        %v3238 = vmul.f32 %v3235, %v3237
        %v3239 = vadd.f32 %v3235, %v3238
        %vm3240 = vweird.f32 %v3234
        %vm3241 = vweird.f32 %v3235
        %vm3242 = vmor %vm3240, %vm3241
        %v3243 = vsel %vm3242, %v3235, %v3239
        %v3244 = vand.u32 2147483647, %v3234
        %vm3245 = vcmp.eq.f32.partialorder %v3244, 8.507059e+37
        %v3246 = vand.u32 %v3234, 2147483648
        %v3247 = vor.u32 1.1754944e-38, %v3246
        %v3248 = vsel %vm3245, %v3247, %v3243
        %v3249 = vmul.f32 %v3224, %v3248
        %v3250 = vmin.f32 %v3249, 1.0
        %v3251 = vmax.f32 %v3250, -1.0
        %v3252 = vmul.f32 %v2971, %v2971
        %v3253 = vmin.f32 16.0, %v3252
        %v3254 = vmul.f32 %v3253, 2.1237322e-06
        %v3255 = vadd.f32 %v3254, 0.00028619796
        %v3256 = vmul.f32 %v3253, %v3255
        %v3257 = vadd.f32 %v3256, 0.0036580483
        %v3258 = vmul.f32 %v3253, %v3257
        %v3259 = vadd.f32 %v3258, 0.05243302
        %v3260 = vmul.f32 %v3253, %v3259
        %v3261 = vadd.f32 %v3260, 0.18741608
        %v3262 = vmul.f32 %v3253, %v3261
        %v3263 = vadd.f32 %v3262, 1.1283791
        %v3264 = vmul.f32 %v2971, %v3263
        %v3265 = vmul.f32 %v3253, 3.8918573e-05
        %v3266 = vadd.f32 %v3265, 0.001143296
        %v3267 = vmul.f32 %v3253, %v3266
        %v3268 = vadd.f32 %v3267, 0.014752088
        %v3269 = vmul.f32 %v3253, %v3268
        %v3270 = vadd.f32 %v3269, 0.112945676
        %v3271 = vmul.f32 %v3253, %v3270
        %v3272 = vadd.f32 %v3271, 0.4994258
        %v3273 = vmul.f32 %v3253, %v3272
        %v3274 = vadd.f32 %v3273, 1.0
        %v3275 = vrcp.pop %v3274
        %v3276 = vmul.f32 %v3274, %v3275
        %v3277 = vsub.f32 1.0, %v3276
        %v3278 = vmul.f32 %v3275, %v3277
        %v3279 = vadd.f32 %v3275, %v3278
        %vm3280 = vweird.f32 %v3274
        %vm3281 = vweird.f32 %v3275
        %vm3282 = vmor %vm3280, %vm3281
        %v3283 = vsel %vm3282, %v3275, %v3279
        %v3284 = vand.u32 2147483647, %v3274
        %vm3285 = vcmp.eq.f32.partialorder %v3284, 8.507059e+37
        %v3286 = vand.u32 %v3274, 2147483648
        %v3287 = vor.u32 1.1754944e-38, %v3286
        %v3288 = vsel %vm3285, %v3287, %v3283
        %v3289 = vmul.f32 %v3264, %v3288
        %v3290 = vmin.f32 %v3289, 1.0
        %v3291 = vmax.f32 %v3290, -1.0
        %v3292 = vadd.f32 %v3011, 1.0
        %v3293 = vadd.f32 %v3051, 1.0
        %v3294 = vadd.f32 %v3091, 1.0
        %v3295 = vadd.f32 %v3131, 1.0
        %v3296 = vadd.f32 %v3171, 1.0
        %v3297 = vadd.f32 %v3211, 1.0
        %v3298 = vadd.f32 %v3251, 1.0
        %v3299 = vadd.f32 %v3291, 1.0
        %v3300 = vmul.f32 %v2956, %v3292
        %v3301 = vmul.f32 %v2957, %v3293
        %v3302 = vmul.f32 %v2958, %v3294
        %v3303 = vmul.f32 %v2959, %v3295
        %v3304 = vmul.f32 %v2960, %v3296
        %v3305 = vmul.f32 %v2961, %v3297
        %v3306 = vmul.f32 %v2962, %v3298
        %v3307 = vmul.f32 %v2963, %v3299
        %s3308 = scalar_lea.vmem %s12, 32
        %v3309 = vld [vmem:[%s3308] sm:$0xff]
        %v3310 = vld [vmem:[%s3308 + $0x8] sm:$0xff]
        %v3311 = vld [vmem:[%s3308 + $0x10] sm:$0xff]
        %v3312 = vld [vmem:[%s3308 + $0x18] sm:$0xff]
        %s3313 = scalar_lea.vmem %s13, 32
        %v3314 = vld [vmem:[%s3313] sm:$0xff]
        %v3315 = vld [vmem:[%s3313 + $0x8] sm:$0xff]
        %v3316 = vld [vmem:[%s3313 + $0x10] sm:$0xff]
        %v3317 = vld [vmem:[%s3313 + $0x18] sm:$0xff]
        %3319 = vset.pattern.permute.xlu0 0
        %3320 = vperm.xlu0 %3319, %v3314
        %v3321 = vpop.permute.xlu0 %3320
        %3324 = vset.pattern.permute.xlu0 0
        %3325 = vperm.xlu0 %3324, %v3315
        %v3326 = vpop.permute.xlu0 %3325
        %3329 = vset.pattern.permute.xlu0 0
        %3330 = vperm.xlu0 %3329, %v3316
        %v3331 = vpop.permute.xlu0 %3330
        %3334 = vset.pattern.permute.xlu0 0
        %3335 = vperm.xlu0 %3334, %v3317
        %v3336 = vpop.permute.xlu0 %3335
        %v3339 = vsel %vm1945, %v3309, 0
        %v3342 = vsel %vm1945, %v3310, 0
        %v3345 = vsel %vm1945, %v3311, 0
        %v3348 = vsel %vm1945, %v3312, 0
        %3350 = vmatpush.msra.mxu0 0.0
        %3351 = vmatpush.msra.mxu0 0.0
        %3352 = vmatpush.msra.mxu0 0.0
        %3353 = vmatpush.msra.mxu0 0.0
        %3354 = vmatpush.msra.mxu0 0.0
        %3355 = vmatpush.msra.mxu0 0.0
        %3356 = vmatpush.msra.mxu0 0.0
        %3357 = vmatpush.msra.mxu0 0.0
        %3358 = vmatpush.msra.mxu0 %v3307
        %3359 = vmatpush.msra.mxu0 %v3306
        %3360 = vmatpush.msra.mxu0 %v3305
        %3361 = vmatpush.msra.mxu0 %v3304
        %3362 = vmatpush.msra.mxu0 %v3303
        %3363 = vmatpush.msra.mxu0 %v3302
        %3364 = vmatpush.msra.mxu0 %v3301
        %3365 = vmatpush.msra.mxu0 %v3300
        %3366 = vmatmul.f32.gmra.mxu0 %v3339
        %v3367 = vpop.f32.mrf.mxu0
        %v3368 = vadd.f32 %v3321, %v3367
        %3369 = vmatmul.f32.gmra.mxu0 %v3342
        %v3370 = vpop.f32.mrf.mxu0
        %v3371 = vadd.f32 %v3326, %v3370
        %3372 = vmatmul.f32.gmra.mxu0 %v3345
        %v3373 = vpop.f32.mrf.mxu0
        %v3374 = vadd.f32 %v3331, %v3373
        %3375 = vmatmul.f32.gmra.mxu0 %v3348
        %v3376 = vpop.f32.mrf.mxu0
        %v3377 = vadd.f32 %v3336, %v3376
        %3378 = vdwg.mxu0
        %v3379 = vadd.f32 %v3368, %v2829
        %v3380 = vadd.f32 %v3371, %v2830
        %v3381 = vadd.f32 %v3374, %v2831
        %v3382 = vadd.f32 %v3377, %v2832
        %s3383 = scalar_lea.vmem %s14, 32
        %v3384 = vld [vmem:[%s3383] sm:$0xff]
        %v3385 = vld [vmem:[%s3383 + $0x8] sm:$0xff]
        %v3386 = vld [vmem:[%s3383 + $0x10] sm:$0xff]
        %v3387 = vld [vmem:[%s3383 + $0x18] sm:$0xff]
        %s3388 = scalar_lea.vmem %s15, 32
        %v3389 = vld [vmem:[%s3388] sm:$0xff]
        %v3390 = vld [vmem:[%s3388 + $0x8] sm:$0xff]
        %v3391 = vld [vmem:[%s3388 + $0x10] sm:$0xff]
        %v3392 = vld [vmem:[%s3388 + $0x18] sm:$0xff]
        %v3393 = vsel %vm601, %v3379, 0.0
        %v3394 = vsel %vm601, %v3380, 0.0
        %v3395 = vadd.f32 %v3393, %v3394
        %v3396 = vsel %vm601, %v3381, 0.0
        %v3397 = vadd.f32 %v3395, %v3396
        %v3398 = vsel %vm601, %v3382, 0.0
        %v3399 = vadd.f32 %v3397, %v3398
        %v3400 = vrot.slane %v3399, 4
        %v3401 = vadd.f32 %v3399, %v3400
        %v3402 = vrot.slane %v3401, 2
        %v3403 = vadd.f32 %v3401, %v3402
        %v3404 = vrot.slane %v3403, 1
        %v3405 = vadd.f32 %v3403, %v3404
        %v3406 = vmul.f32 %v3405, %v621
        %v3407 = vsub.f32 %v3379, %v3406
        %v3408 = vsub.f32 %v3380, %v3406
        %v3409 = vsub.f32 %v3381, %v3406
        %v3410 = vsub.f32 %v3382, %v3406
        %v3411 = vmul.f32 %v3407, %v3407
        %v3412 = vmul.f32 %v3408, %v3408
        %v3413 = vmul.f32 %v3409, %v3409
        %v3414 = vmul.f32 %v3410, %v3410
        %v3415 = vsel %vm601, %v3411, 0.0
        %v3416 = vsel %vm601, %v3412, 0.0
        %v3417 = vadd.f32 %v3415, %v3416
        %v3418 = vsel %vm601, %v3413, 0.0
        %v3419 = vadd.f32 %v3417, %v3418
        %v3420 = vsel %vm601, %v3414, 0.0
        %v3421 = vadd.f32 %v3419, %v3420
        %v3422 = vrot.slane %v3421, 4
        %v3423 = vadd.f32 %v3421, %v3422
        %v3424 = vrot.slane %v3423, 2
        %v3425 = vadd.f32 %v3423, %v3424
        %v3426 = vrot.slane %v3425, 1
        %v3427 = vadd.f32 %v3425, %v3426
        %v3428 = vmul.f32 %v3427, %v621
        %v3429 = vadd.f32 %v3428, 1e-05
        %v3430 = vrsqrt.pop %v3429
        %v3431 = vmul.f32 %v3430, %v3429
        %v3432 = vmul.f32 %v3431, %v3430
        %v3433 = vmul.f32 0.5, %v3432
        %v3434 = vsub.f32 1.5, %v3433
        %v3435 = vmul.f32 %v3430, %v3434
        %vm3436 = vweird.f32 %v3429
        %vm3437 = vweird.f32 %v3430
        %vm3438 = vmor %vm3436, %vm3437
        %v3439 = vsel %vm3438, %v3430, %v3435
        %v3440 = vmul.f32 %v3407, %v3439
        %v3441 = vmul.f32 %v3408, %v3439
        %v3442 = vmul.f32 %v3409, %v3439
        %v3443 = vmul.f32 %v3410, %v3439
        %3445 = vset.pattern.permute.xlu0 0
        %3446 = vperm.xlu0 %3445, %v3384
        %v3447 = vpop.permute.xlu0 %3446
        %3450 = vset.pattern.permute.xlu0 0
        %3451 = vperm.xlu0 %3450, %v3385
        %v3452 = vpop.permute.xlu0 %3451
        %3455 = vset.pattern.permute.xlu0 0
        %3456 = vperm.xlu0 %3455, %v3386
        %v3457 = vpop.permute.xlu0 %3456
        %3460 = vset.pattern.permute.xlu0 0
        %3461 = vperm.xlu0 %3460, %v3387
        %v3462 = vpop.permute.xlu0 %3461
        %v3464 = vmul.f32 %v3440, %v3447
        %v3465 = vmul.f32 %v3441, %v3452
        %v3466 = vmul.f32 %v3442, %v3457
        %v3467 = vmul.f32 %v3443, %v3462
        %3469 = vset.pattern.permute.xlu0 0
        %3470 = vperm.xlu0 %3469, %v3389
        %v3471 = vpop.permute.xlu0 %3470
        %3474 = vset.pattern.permute.xlu0 0
        %3475 = vperm.xlu0 %3474, %v3390
        %v3476 = vpop.permute.xlu0 %3475
        %3479 = vset.pattern.permute.xlu0 0
        %3480 = vperm.xlu0 %3479, %v3391
        %v3481 = vpop.permute.xlu0 %3480
        %3484 = vset.pattern.permute.xlu0 0
        %3485 = vperm.xlu0 %3484, %v3392
        %v3486 = vpop.permute.xlu0 %3485
        %v3488 = vadd.f32 %v3464, %v3471
        %v3489 = vadd.f32 %v3465, %v3476
        %v3490 = vadd.f32 %v3466, %v3481
        %v3491 = vadd.f32 %v3467, %v3486
        %v3492 = vld [vmem:[%s16] sm:$0x1]
        %v3493 = vld [vmem:[#allocation2] sm:$0x1]
        %3495 = vset.pattern.permute.xlu0 0
        %3496 = vperm.xlu0 %3495, %v3493
        %v3497 = vpop.permute.xlu0 %3496
        %v3499 = vperm.slane %v3497, 0
        %v3501 = vsel %vm795, %v3492, 0
        %3503 = vmatpush.msra.mxu0 0.0
        %3504 = vmatpush.msra.mxu0 0.0
        %3505 = vmatpush.msra.mxu0 0.0
        %3506 = vmatpush.msra.mxu0 0.0
        %3507 = vmatpush.msra.mxu0 0.0
        %3508 = vmatpush.msra.mxu0 0.0
        %3509 = vmatpush.msra.mxu0 0.0
        %3510 = vmatpush.msra.mxu0 0.0
        %3511 = vmatpush.msra.mxu0 0.0
        %3512 = vmatpush.msra.mxu0 0.0
        %3513 = vmatpush.msra.mxu0 0.0
        %3514 = vmatpush.msra.mxu0 0.0
        %3515 = vmatpush.msra.mxu0 %v3491
        %3516 = vmatpush.msra.mxu0 %v3490
        %3517 = vmatpush.msra.mxu0 %v3489
        %3518 = vmatpush.msra.mxu0 %v3488
        %3519 = vmatmul.f32.gmra.mxu0 %v3501
        %v3520 = vpop.f32.mrf.mxu0
        %v3521 = vadd.f32 %v3499, %v3520
        %3522 = vdwg.mxu0
        %vm3523 = vcmask 57344
        %3524 = vst.msk [vmem:[%s580] sm:$0x1] %vm3523, %v3521
        %s3525 = sand.u32 %s430, 1
        %s3526 = scalar_lea.sflag [#allocation4], %s3525
        %s3527 = sand.u32 %s430, 1
        %s3528 = scalar_lea.vmem [#allocation3], %s3527
        // Predicated region
        $region93: #{ner_transformer_forward.1} parent=91 // pred_check
          %p3529 = pneg %p440
        $region94: #{ner_transformer_forward.1} parent=91 // pred_check_branch
          %3531 = sbr.rel (%p3529) target = $region96
        $region95: #{ner_transformer_forward.1} parent=91 // pred_region
          %3533 = vsyncadd %s3526, 0
          %s3534 = scalar_lea.hbm %s18, %s34
          %s3536 = sshll.u32 %s3528, 4
          %s3537 = int_to_ptr.vmem [resolvable:$true] %s3536
          %s3538 = sshll.u32 %s3534, 4
          %s3539 = int_to_ptr.hbm [resolvable:$true] %s3538
          %3541 = dma.vmem_to_hbm [thread:$0]  %s3537, 16, %s3539, %s3526
        $region96: #{ner_transformer_forward.1} parent=91 // pred_fallthru
          _
      $region92: #{ner_transformer_forward.1} parent=5 // pred_fallthru
        _
      %p3542 = scmp.le.s32.totalorder 2, %s29
      // Predicated region
      $region97: #{ner_transformer_forward.1} parent=5 // pred_check
        %p3543 = pneg %p3542
      $region98: #{ner_transformer_forward.1} parent=5 // pred_check_branch
        %3545 = sbr.rel (%p3543) target = $region100
      $region99: #{ner_transformer_forward.1} parent=5 // pred_region
        %s3546 = ssub.s32 %s29, 2
        // Predicated region
        $region101: #{ner_transformer_forward.1} parent=99 // pred_check
          %p3547 = pneg %p446
        $region102: #{ner_transformer_forward.1} parent=99 // pred_check_branch
          %3549 = sbr.rel (%p3547) target = $region104
        $region103: #{ner_transformer_forward.1} parent=99 // pred_region
          %s3550 = sand.u32 %s431, 1
          %s3551 = scalar_lea.sflag [#allocation4], %s3550
          %s3552 = sand.u32 %s431, 1
          %s3553 = scalar_lea.vmem [#allocation3], %s3552
          %3555 = dma.done %s3551, 16
        $region104: #{ner_transformer_forward.1} parent=99 // pred_fallthru
          _
      $region100: #{ner_transformer_forward.1} parent=5 // pred_fallthru
        _
    $region6: #{ner_transformer_forward.1} parent=1 // loop_footer
      %s33 = sadd.s32 1, %s29
    $region7: #{ner_transformer_forward.1} parent=1 // loop_footer_branch
      %28 = sbr.rel target = $region3
    $region8: #{ner_transformer_forward.1} parent=1 // loop_exit
      _
    %3556 = vsyncpa [#allocation4], 1
    %s3557 = scalar_lea.sflag [#allocation4], 1
    %3558 = vsyncpa %s3557, 1

</llo_original>
